<compile_context>
chip_gen: v7x
topology: tpu7x:2x2x1
jax: 0.10.0
libtpu: 0.0.40
codegen_flags: <defaults>
</compile_context>

<pallas_src>
import functools

import jax
import jax.numpy as jnp
from jax.experimental import pallas as pl
from jax.experimental.pallas import tpu as pltpu


def recurrent_block_kernel(x_ref, m_ref, wf_ref, wr_ref, out_ref, tap_ref,
                           *, t, C, W, NHW):
    def conv3x3(a, w_ref):
        # a: (C, NHW) f32 activation; w_ref: (Cout, 9*C) bf16 packed weights.
        # tap[(ky,kx)][ci, p] = a[ci, p + (ky-1)*W + (kx-1)], zero outside the
        # source image (conv zero-padding and cross-image wrap), realised as
        # an XLU lane roll + precomputed 0/1 boundary mask.  Each tap is cast
        # to bf16 and written straight into the persistent VMEM tap scratch
        # (row block k*C), then hit with a single f32-accumulate MXU matmul.
        k = 0
        for dy in (-1, 0, 1):
            for dx in (-1, 0, 1):
                s = dy * W + dx
                if s == 0:
                    tap = a
                else:
                    tap = pltpu.roll(a, (-s) % NHW, axis=1) * m_ref[k:k + 1, :]
                tap_ref[k * C:(k + 1) * C, :] = tap.astype(jnp.bfloat16)
                k += 1
        return jnp.dot(w_ref[...], tap_ref[...],
                       preferred_element_type=jnp.float32)

    a_in = x_ref[...]                       # (C, NHW) f32, channels pre-padded

    # Faithful transcription of the PyTorch loop (t is a static Python int, so
    # it fully unrolls: 7 fused convs for t=5).  The 1x1 conv is folded into
    # wf, so "x = conv3(conv1(input))" at i==0 is a single matmul.
    x = None
    x1 = None
    for i in range(t):
        if i == 0:
            x = conv3x3(a_in, wf_ref)
            x1 = jnp.maximum(x, 0.0)
        elif i == 4:
            x1 = conv3x3(x1, wr_ref) + x
        x1 = conv3x3(x1, wr_ref) + x
        x1 = jnp.maximum(x1, 0.0)

    out_ref[...] = x1.astype(out_ref.dtype)


def _boundary_masks(N, H, W):
    """(9, N*H*W) f32 0/1 masks, tap order (dy, dx) row-major (centre unused).

    Row k zeroes every lane whose rolled source pixel would be conv zero
    padding OR would wrap into a neighbouring image on the fused lane axis.
    Built with exact integer position math (valid for any H, W)."""
    HW = H * W
    p = jnp.arange(N * HW, dtype=jnp.int32)
    q = p % HW                              # position within the source image
    row = q // W
    col = q % W
    rows = []
    for dy in (-1, 0, 1):
        for dx in (-1, 0, 1):
            ok = jnp.ones((N * HW,), jnp.float32)
            if dy == -1:
                ok = ok * (row >= 1)
            elif dy == 1:
                ok = ok * (row <= H - 2)
            if dx == -1:
                ok = ok * (col >= 1)
            elif dx == 1:
                ok = ok * (col <= W - 2)
            rows.append(ok)
    return jnp.stack(rows, axis=0)          # (9, N*HW)


@functools.partial(jax.jit, static_argnames=("t",))
def recurrent_block(x_nchw, w1, w3, t=5):
    """Pallas implementation.

    x_nchw: (N, Cin, H, W) f32
    w1:     (Cin, Cout)        1x1 weight,  w1[ci, co] == K1[co, ci, 0, 0]
    w3:     (3, 3, Cout, Cout) HWIO 3x3 weight, w3[ky, kx, ci, co] == K3[co, ci, ky, kx]
    returns (N, Cout, H, W) f32
    """
    N, Cin, H, W = x_nchw.shape
    Cout = w3.shape[-1]
    if Cin > Cout:
        # TODO(synk): support ch_in > ch_out (would need the recurrent path
        # padded too); the module's intended usage has ch_in <= ch_out.
        raise NotImplementedError("recurrent_block kernel assumes ch_in <= ch_out")
    HW = H * W
    NHW = N * HW

    # Fold the 1x1 conv into the first 3x3 (exact, f32), then zero-pad its
    # input-channel axis to Cout so the kernel uses one uniform channel count
    # (keeps the bf16 tap-scratch writes 8-row aligned; zero rows are exact).
    wf = jnp.einsum("ic,yxco->yxio", w1, w3,
                    precision=jax.lax.Precision.HIGHEST)           # (3,3,Cin,Cout)
    wf = jnp.pad(wf, ((0, 0), (0, 0), (0, Cout - Cin), (0, 0)))    # (3,3,Cout,Cout)
    # Pack for the fused 9-tap matmul: row = co, col = (ky*3+kx)*C + ci, which
    # matches the tap scratch layout written by the kernel.
    wf_t = jnp.transpose(wf, (3, 0, 1, 2)).reshape(Cout, 9 * Cout).astype(jnp.bfloat16)
    wr_t = jnp.transpose(w3, (3, 0, 1, 2)).reshape(Cout, 9 * Cout).astype(jnp.bfloat16)

    # Lane-batched activation: (Cin, N*HW) with image n at lanes
    # [n*HW, (n+1)*HW); zero-pad channels to Cout (padded rows hit the zero
    # folded weights, so they contribute exactly nothing).
    x_cn = jnp.transpose(x_nchw.reshape(N, Cin, HW), (1, 0, 2)).reshape(Cin, NHW)
    x_cn = jnp.pad(x_cn, ((0, Cout - Cin), (0, 0)))

    masks = _boundary_masks(N, H, W)                               # (9, NHW) f32

    # Single grid step: at these sizes the block is fixed-overhead bound, so
    # fusing all images onto the lane axis beats a per-image grid (and beats
    # splitting ~1 us of work across v7x's two TensorCores).
    # TODO(synk): for production UNet sizes, tile the lane axis into image /
    # row groups (grid marked "parallel" to feed both v7x TCs), accumulate
    # per-tap instead of materialising (9*C, tile) taps, and set
    # vmem_limit_bytes explicitly (v7x only has 64 MiB VMEM).
    out_flat = pl.pallas_call(
        functools.partial(recurrent_block_kernel, t=t, C=Cout, W=W, NHW=NHW),
        out_shape=jax.ShapeDtypeStruct((Cout, NHW), x_nchw.dtype),
        grid=(1,),
        in_specs=[
            pl.BlockSpec((Cout, NHW), lambda g: (0, 0)),           # lane-dense input
            pl.BlockSpec((9, NHW), lambda g: (0, 0)),              # resident masks
            pl.BlockSpec((Cout, 9 * Cout), lambda g: (0, 0)),      # resident weights
            pl.BlockSpec((Cout, 9 * Cout), lambda g: (0, 0)),      # resident weights
        ],
        out_specs=pl.BlockSpec((Cout, NHW), lambda g: (0, 0)),     # lane-dense output
        scratch_shapes=[pltpu.VMEM((9 * Cout, NHW), jnp.bfloat16)],  # tap scratch, reused 7x
        compiler_params=pltpu.CompilerParams(
            dimension_semantics=("arbitrary",)),
    )(x_cn, masks, wf_t, wr_t)

    return jnp.transpose(out_flat.reshape(Cout, N, HW),
                         (1, 0, 2)).reshape(N, Cout, H, W)


def recurrent_block_reference(x_nchw, w1, w3, t=5):
    """Plain-JAX (XLA conv) reference mirroring the PyTorch forward, with the
    same bf16-operand / f32-accumulate matmul numerics as the kernel."""
    x = jnp.transpose(x_nchw, (0, 2, 3, 1)).astype(jnp.float32)    # NHWC
    Cin, Cout = w1.shape
    dn = ("NHWC", "HWIO", "NHWC")
    w1b = w1.reshape(1, 1, Cin, Cout).astype(jnp.bfloat16)
    w3b = w3.astype(jnp.bfloat16)
    conv1 = lambda a: jax.lax.conv_general_dilated(
        a.astype(jnp.bfloat16), w1b, (1, 1), [(0, 0), (0, 0)],
        dimension_numbers=dn, preferred_element_type=jnp.float32)
    conv3 = lambda a: jax.lax.conv_general_dilated(
        a.astype(jnp.bfloat16), w3b, (1, 1), [(1, 1), (1, 1)],
        dimension_numbers=dn, preferred_element_type=jnp.float32)
    x = conv1(x)
    x1 = x
    for i in range(t):
        if i == 0:
            x = conv3(x)
            x1 = jax.nn.relu(x)
        elif i == 4:
            x1 = conv3(x1) + x
        x1 = conv3(x1) + x
        x1 = jax.nn.relu(x1)
    return jnp.transpose(x1, (0, 3, 1, 2))


if __name__ == "__main__":
    N, Cin, Cout, H, W, t = 2, 4, 8, 16, 16, 5

    key = jax.random.PRNGKey(0)
    kx, k1, k3 = jax.random.split(key, 3)
    x = jax.random.normal(kx, (N, Cin, H, W), jnp.float32)
    # Deterministic synthetic parameters (shapes from the module __init__);
    # scaled so activations stay O(1) across the 7 shared 3x3 convs.
    w1 = jax.random.normal(k1, (Cin, Cout), jnp.float32) * 0.3
    w3 = jax.random.normal(k3, (3, 3, Cout, Cout), jnp.float32) * 0.12

    out = recurrent_block(x, w1, w3, t=t)
    out = jax.block_until_ready(out)
    assert out.shape == (N, Cout, H, W)

    ref = recurrent_block_reference(x, w1, w3, t=t)
    err = jnp.max(jnp.abs(out - ref))
    scale = jnp.max(jnp.abs(ref)) + 1e-6
    # bf16-operand / f32-accumulate matmuls on both sides; remaining diffs come
    # from the (exact-in-f32) 1x1-into-3x3 weight fold and summation order.
    assert err <= 2e-2 * scale + 1e-3, f"mismatch: max_err={err}, scale={scale}"

    print("KERNEL_OK")
</pallas_src>

<mosaic_0001>
module attributes {stable_mosaic.version = 11 : i64} {
  func.func @recurrent_block_kernel(%arg0: i32, %arg1: memref<8x512xf32, #tpu.memory_space<vmem>>, %arg2: memref<9x512xf32, #tpu.memory_space<vmem>>, %arg3: memref<8x72xbf16, #tpu.memory_space<vmem>>, %arg4: memref<8x72xbf16, #tpu.memory_space<vmem>>, %arg5: memref<8x512xf32, #tpu.memory_space<vmem>>, %arg6: memref<72x512xbf16, #tpu.memory_space<vmem>>) attributes {dimension_semantics = [#tpu.dimension_semantics<arbitrary>], iteration_bounds = array<i64: 1>, scalar_prefetch = 0 : i64, scratch_operands = 1 : i64, tpu.core_type = #tpu.core_type<tc>, window_params = [{pipeline_mode = #tpu.pipeline_mode<synchronous>, transform_indices = @transform_0, window_bounds = array<i64: 8, 512>}, {pipeline_mode = #tpu.pipeline_mode<synchronous>, transform_indices = @transform_1, window_bounds = array<i64: 9, 512>}, {pipeline_mode = #tpu.pipeline_mode<synchronous>, transform_indices = @transform_2, window_bounds = array<i64: 8, 72>}, {pipeline_mode = #tpu.pipeline_mode<synchronous>, transform_indices = @transform_3, window_bounds = array<i64: 8, 72>}, {pipeline_mode = #tpu.pipeline_mode<synchronous>, transform_indices = @transform_4, window_bounds = array<i64: 8, 512>}]} {
    %c0 = arith.constant 0 : index
    %c0_0 = arith.constant 0 : index
    %0 = vector.load %arg1[%c0, %c0_0] : memref<8x512xf32, #tpu.memory_space<vmem>>, vector<8x512xf32>
    %c17_i32 = arith.constant 17 : i32
    %1 = tpu.dynamic_rotate %0 by %c17_i32 dim 1 : vector<8x512xf32>, i32 -> vector<8x512xf32>
    %c0_1 = arith.constant 0 : index
    %c0_2 = arith.constant 0 : index
    %2 = vector.load %arg2[%c0_1, %c0_2] : memref<9x512xf32, #tpu.memory_space<vmem>>, vector<1x512xf32>
    %3 = vector.broadcast %2 : vector<1x512xf32> to vector<8x512xf32>
    %4 = arith.mulf %1, %3 : vector<8x512xf32>
    %5 = arith.truncf %4 : vector<8x512xf32> to vector<8x512xbf16>
    %c0_3 = arith.constant 0 : index
    %c0_4 = arith.constant 0 : index
    %6 = vector.load %arg6[%c0_3, %c0_4] : memref<72x512xbf16, #tpu.memory_space<vmem>>, vector<8x512xbf16>
    tpu.vector_store %arg6[%c0_3, %c0_4], %5 {strides = array<i32>} : memref<72x512xbf16, #tpu.memory_space<vmem>>, vector<8x512xbf16>,
    %c16_i32 = arith.constant 16 : i32
    %7 = tpu.dynamic_rotate %0 by %c16_i32 dim 1 : vector<8x512xf32>, i32 -> vector<8x512xf32>
    %c1 = arith.constant 1 : index
    %c0_5 = arith.constant 0 : index
    %8 = vector.load %arg2[%c1, %c0_5] : memref<9x512xf32, #tpu.memory_space<vmem>>, vector<1x512xf32>
    %9 = vector.broadcast %8 : vector<1x512xf32> to vector<8x512xf32>
    %10 = arith.mulf %7, %9 : vector<8x512xf32>
    %11 = arith.truncf %10 : vector<8x512xf32> to vector<8x512xbf16>
    %c8 = arith.constant 8 : index
    %c0_6 = arith.constant 0 : index
    %12 = vector.load %arg6[%c8, %c0_6] : memref<72x512xbf16, #tpu.memory_space<vmem>>, vector<8x512xbf16>
    tpu.vector_store %arg6[%c8, %c0_6], %11 {strides = array<i32>} : memref<72x512xbf16, #tpu.memory_space<vmem>>, vector<8x512xbf16>,
    %c15_i32 = arith.constant 15 : i32
    %13 = tpu.dynamic_rotate %0 by %c15_i32 dim 1 : vector<8x512xf32>, i32 -> vector<8x512xf32>
    %c2 = arith.constant 2 : index
    %c0_7 = arith.constant 0 : index
    %14 = vector.load %arg2[%c2, %c0_7] : memref<9x512xf32, #tpu.memory_space<vmem>>, vector<1x512xf32>
    %15 = vector.broadcast %14 : vector<1x512xf32> to vector<8x512xf32>
    %16 = arith.mulf %13, %15 : vector<8x512xf32>
    %17 = arith.truncf %16 : vector<8x512xf32> to vector<8x512xbf16>
    %c16 = arith.constant 16 : index
    %c0_8 = arith.constant 0 : index
    %18 = vector.load %arg6[%c16, %c0_8] : memref<72x512xbf16, #tpu.memory_space<vmem>>, vector<8x512xbf16>
    tpu.vector_store %arg6[%c16, %c0_8], %17 {strides = array<i32>} : memref<72x512xbf16, #tpu.memory_space<vmem>>, vector<8x512xbf16>,
    %c1_i32 = arith.constant 1 : i32
    %19 = tpu.dynamic_rotate %0 by %c1_i32 dim 1 : vector<8x512xf32>, i32 -> vector<8x512xf32>
    %c3 = arith.constant 3 : index
    %c0_9 = arith.constant 0 : index
    %20 = vector.load %arg2[%c3, %c0_9] : memref<9x512xf32, #tpu.memory_space<vmem>>, vector<1x512xf32>
    %21 = vector.broadcast %20 : vector<1x512xf32> to vector<8x512xf32>
    %22 = arith.mulf %19, %21 : vector<8x512xf32>
    %23 = arith.truncf %22 : vector<8x512xf32> to vector<8x512xbf16>
    %c24 = arith.constant 24 : index
    %c0_10 = arith.constant 0 : index
    %24 = vector.load %arg6[%c24, %c0_10] : memref<72x512xbf16, #tpu.memory_space<vmem>>, vector<8x512xbf16>
    tpu.vector_store %arg6[%c24, %c0_10], %23 {strides = array<i32>} : memref<72x512xbf16, #tpu.memory_space<vmem>>, vector<8x512xbf16>,
    %25 = arith.truncf %0 : vector<8x512xf32> to vector<8x512xbf16>
    %c32 = arith.constant 32 : index
    %c0_11 = arith.constant 0 : index
    %26 = vector.load %arg6[%c32, %c0_11] : memref<72x512xbf16, #tpu.memory_space<vmem>>, vector<8x512xbf16>
    tpu.vector_store %arg6[%c32, %c0_11], %25 {strides = array<i32>} : memref<72x512xbf16, #tpu.memory_space<vmem>>, vector<8x512xbf16>,
    %c511_i32 = arith.constant 511 : i32
    %27 = tpu.dynamic_rotate %0 by %c511_i32 dim 1 : vector<8x512xf32>, i32 -> vector<8x512xf32>
    %c5 = arith.constant 5 : index
    %c0_12 = arith.constant 0 : index
    %28 = vector.load %arg2[%c5, %c0_12] : memref<9x512xf32, #tpu.memory_space<vmem>>, vector<1x512xf32>
    %29 = vector.broadcast %28 : vector<1x512xf32> to vector<8x512xf32>
    %30 = arith.mulf %27, %29 : vector<8x512xf32>
    %31 = arith.truncf %30 : vector<8x512xf32> to vector<8x512xbf16>
    %c40 = arith.constant 40 : index
    %c0_13 = arith.constant 0 : index
    %32 = vector.load %arg6[%c40, %c0_13] : memref<72x512xbf16, #tpu.memory_space<vmem>>, vector<8x512xbf16>
    tpu.vector_store %arg6[%c40, %c0_13], %31 {strides = array<i32>} : memref<72x512xbf16, #tpu.memory_space<vmem>>, vector<8x512xbf16>,
    %c497_i32 = arith.constant 497 : i32
    %33 = tpu.dynamic_rotate %0 by %c497_i32 dim 1 : vector<8x512xf32>, i32 -> vector<8x512xf32>
    %c6 = arith.constant 6 : index
    %c0_14 = arith.constant 0 : index
    %34 = vector.load %arg2[%c6, %c0_14] : memref<9x512xf32, #tpu.memory_space<vmem>>, vector<1x512xf32>
    %35 = vector.broadcast %34 : vector<1x512xf32> to vector<8x512xf32>
    %36 = arith.mulf %33, %35 : vector<8x512xf32>
    %37 = arith.truncf %36 : vector<8x512xf32> to vector<8x512xbf16>
    %c48 = arith.constant 48 : index
    %c0_15 = arith.constant 0 : index
    %38 = vector.load %arg6[%c48, %c0_15] : memref<72x512xbf16, #tpu.memory_space<vmem>>, vector<8x512xbf16>
    tpu.vector_store %arg6[%c48, %c0_15], %37 {strides = array<i32>} : memref<72x512xbf16, #tpu.memory_space<vmem>>, vector<8x512xbf16>,
    %c496_i32 = arith.constant 496 : i32
    %39 = tpu.dynamic_rotate %0 by %c496_i32 dim 1 : vector<8x512xf32>, i32 -> vector<8x512xf32>
    %c7 = arith.constant 7 : index
    %c0_16 = arith.constant 0 : index
    %40 = vector.load %arg2[%c7, %c0_16] : memref<9x512xf32, #tpu.memory_space<vmem>>, vector<1x512xf32>
    %41 = vector.broadcast %40 : vector<1x512xf32> to vector<8x512xf32>
    %42 = arith.mulf %39, %41 : vector<8x512xf32>
    %43 = arith.truncf %42 : vector<8x512xf32> to vector<8x512xbf16>
    %c56 = arith.constant 56 : index
    %c0_17 = arith.constant 0 : index
    %44 = vector.load %arg6[%c56, %c0_17] : memref<72x512xbf16, #tpu.memory_space<vmem>>, vector<8x512xbf16>
    tpu.vector_store %arg6[%c56, %c0_17], %43 {strides = array<i32>} : memref<72x512xbf16, #tpu.memory_space<vmem>>, vector<8x512xbf16>,
    %c495_i32 = arith.constant 495 : i32
    %45 = tpu.dynamic_rotate %0 by %c495_i32 dim 1 : vector<8x512xf32>, i32 -> vector<8x512xf32>
    %c8_18 = arith.constant 8 : index
    %c0_19 = arith.constant 0 : index
    %46 = vector.load %arg2[%c8_18, %c0_19] : memref<9x512xf32, #tpu.memory_space<vmem>>, vector<1x512xf32>
    %47 = vector.broadcast %46 : vector<1x512xf32> to vector<8x512xf32>
    %48 = arith.mulf %45, %47 : vector<8x512xf32>
    %49 = arith.truncf %48 : vector<8x512xf32> to vector<8x512xbf16>
    %c64 = arith.constant 64 : index
    %c0_20 = arith.constant 0 : index
    %50 = vector.load %arg6[%c64, %c0_20] : memref<72x512xbf16, #tpu.memory_space<vmem>>, vector<8x512xbf16>
    tpu.vector_store %arg6[%c64, %c0_20], %49 {strides = array<i32>} : memref<72x512xbf16, #tpu.memory_space<vmem>>, vector<8x512xbf16>,
    %c0_21 = arith.constant 0 : index
    %c0_22 = arith.constant 0 : index
    %51 = vector.load %arg3[%c0_21, %c0_22] : memref<8x72xbf16, #tpu.memory_space<vmem>>, vector<8x72xbf16>
    %c0_23 = arith.constant 0 : index
    %c0_24 = arith.constant 0 : index
    %52 = vector.load %arg6[%c0_23, %c0_24] : memref<72x512xbf16, #tpu.memory_space<vmem>>, vector<72x512xbf16>
    %cst = arith.constant dense<0.000000e+00> : vector<8x512xf32>
    %53 = tpu.matmul %51, %52, %cst {dimension_numbers = #tpu.dot_dimension_numbers<[1], [0], [0], [1], [0, 0, 1, 1], [], []>} : vector<8x72xbf16>, vector<72x512xbf16>, vector<8x512xf32> -> vector<8x512xf32>
    %cst_25 = arith.constant 0.000000e+00 : f32
    %54 = vector.broadcast %cst_25 : f32 to vector<8x512xf32>
    %55 = arith.maximumf %53, %54 : vector<8x512xf32>
    %c17_i32_26 = arith.constant 17 : i32
    %56 = tpu.dynamic_rotate %55 by %c17_i32_26 dim 1 : vector<8x512xf32>, i32 -> vector<8x512xf32>
    %c0_27 = arith.constant 0 : index
    %c0_28 = arith.constant 0 : index
    %57 = vector.load %arg2[%c0_27, %c0_28] : memref<9x512xf32, #tpu.memory_space<vmem>>, vector<1x512xf32>
    %58 = vector.broadcast %57 : vector<1x512xf32> to vector<8x512xf32>
    %59 = arith.mulf %56, %58 : vector<8x512xf32>
    %60 = arith.truncf %59 : vector<8x512xf32> to vector<8x512xbf16>
    %c0_29 = arith.constant 0 : index
    %c0_30 = arith.constant 0 : index
    %61 = vector.load %arg6[%c0_29, %c0_30] : memref<72x512xbf16, #tpu.memory_space<vmem>>, vector<8x512xbf16>
    tpu.vector_store %arg6[%c0_29, %c0_30], %60 {strides = array<i32>} : memref<72x512xbf16, #tpu.memory_space<vmem>>, vector<8x512xbf16>,
    %c16_i32_31 = arith.constant 16 : i32
    %62 = tpu.dynamic_rotate %55 by %c16_i32_31 dim 1 : vector<8x512xf32>, i32 -> vector<8x512xf32>
    %c1_32 = arith.constant 1 : index
    %c0_33 = arith.constant 0 : index
    %63 = vector.load %arg2[%c1_32, %c0_33] : memref<9x512xf32, #tpu.memory_space<vmem>>, vector<1x512xf32>
    %64 = vector.broadcast %63 : vector<1x512xf32> to vector<8x512xf32>
    %65 = arith.mulf %62, %64 : vector<8x512xf32>
    %66 = arith.truncf %65 : vector<8x512xf32> to vector<8x512xbf16>
    %c8_34 = arith.constant 8 : index
    %c0_35 = arith.constant 0 : index
    %67 = vector.load %arg6[%c8_34, %c0_35] : memref<72x512xbf16, #tpu.memory_space<vmem>>, vector<8x512xbf16>
    tpu.vector_store %arg6[%c8_34, %c0_35], %66 {strides = array<i32>} : memref<72x512xbf16, #tpu.memory_space<vmem>>, vector<8x512xbf16>,
    %c15_i32_36 = arith.constant 15 : i32
    %68 = tpu.dynamic_rotate %55 by %c15_i32_36 dim 1 : vector<8x512xf32>, i32 -> vector<8x512xf32>
    %c2_37 = arith.constant 2 : index
    %c0_38 = arith.constant 0 : index
    %69 = vector.load %arg2[%c2_37, %c0_38] : memref<9x512xf32, #tpu.memory_space<vmem>>, vector<1x512xf32>
    %70 = vector.broadcast %69 : vector<1x512xf32> to vector<8x512xf32>
    %71 = arith.mulf %68, %70 : vector<8x512xf32>
    %72 = arith.truncf %71 : vector<8x512xf32> to vector<8x512xbf16>
    %c16_39 = arith.constant 16 : index
    %c0_40 = arith.constant 0 : index
    %73 = vector.load %arg6[%c16_39, %c0_40] : memref<72x512xbf16, #tpu.memory_space<vmem>>, vector<8x512xbf16>
    tpu.vector_store %arg6[%c16_39, %c0_40], %72 {strides = array<i32>} : memref<72x512xbf16, #tpu.memory_space<vmem>>, vector<8x512xbf16>,
    %c1_i32_41 = arith.constant 1 : i32
    %74 = tpu.dynamic_rotate %55 by %c1_i32_41 dim 1 : vector<8x512xf32>, i32 -> vector<8x512xf32>
    %c3_42 = arith.constant 3 : index
    %c0_43 = arith.constant 0 : index
    %75 = vector.load %arg2[%c3_42, %c0_43] : memref<9x512xf32, #tpu.memory_space<vmem>>, vector<1x512xf32>
    %76 = vector.broadcast %75 : vector<1x512xf32> to vector<8x512xf32>
    %77 = arith.mulf %74, %76 : vector<8x512xf32>
    %78 = arith.truncf %77 : vector<8x512xf32> to vector<8x512xbf16>
    %c24_44 = arith.constant 24 : index
    %c0_45 = arith.constant 0 : index
    %79 = vector.load %arg6[%c24_44, %c0_45] : memref<72x512xbf16, #tpu.memory_space<vmem>>, vector<8x512xbf16>
    tpu.vector_store %arg6[%c24_44, %c0_45], %78 {strides = array<i32>} : memref<72x512xbf16, #tpu.memory_space<vmem>>, vector<8x512xbf16>,
    %80 = arith.truncf %55 : vector<8x512xf32> to vector<8x512xbf16>
    %c32_46 = arith.constant 32 : index
    %c0_47 = arith.constant 0 : index
    %81 = vector.load %arg6[%c32_46, %c0_47] : memref<72x512xbf16, #tpu.memory_space<vmem>>, vector<8x512xbf16>
    tpu.vector_store %arg6[%c32_46, %c0_47], %80 {strides = array<i32>} : memref<72x512xbf16, #tpu.memory_space<vmem>>, vector<8x512xbf16>,
    %c511_i32_48 = arith.constant 511 : i32
    %82 = tpu.dynamic_rotate %55 by %c511_i32_48 dim 1 : vector<8x512xf32>, i32 -> vector<8x512xf32>
    %c5_49 = arith.constant 5 : index
    %c0_50 = arith.constant 0 : index
    %83 = vector.load %arg2[%c5_49, %c0_50] : memref<9x512xf32, #tpu.memory_space<vmem>>, vector<1x512xf32>
    %84 = vector.broadcast %83 : vector<1x512xf32> to vector<8x512xf32>
    %85 = arith.mulf %82, %84 : vector<8x512xf32>
    %86 = arith.truncf %85 : vector<8x512xf32> to vector<8x512xbf16>
    %c40_51 = arith.constant 40 : index
    %c0_52 = arith.constant 0 : index
    %87 = vector.load %arg6[%c40_51, %c0_52] : memref<72x512xbf16, #tpu.memory_space<vmem>>, vector<8x512xbf16>
    tpu.vector_store %arg6[%c40_51, %c0_52], %86 {strides = array<i32>} : memref<72x512xbf16, #tpu.memory_space<vmem>>, vector<8x512xbf16>,
    %c497_i32_53 = arith.constant 497 : i32
    %88 = tpu.dynamic_rotate %55 by %c497_i32_53 dim 1 : vector<8x512xf32>, i32 -> vector<8x512xf32>
    %c6_54 = arith.constant 6 : index
    %c0_55 = arith.constant 0 : index
    %89 = vector.load %arg2[%c6_54, %c0_55] : memref<9x512xf32, #tpu.memory_space<vmem>>, vector<1x512xf32>
    %90 = vector.broadcast %89 : vector<1x512xf32> to vector<8x512xf32>
    %91 = arith.mulf %88, %90 : vector<8x512xf32>
    %92 = arith.truncf %91 : vector<8x512xf32> to vector<8x512xbf16>
    %c48_56 = arith.constant 48 : index
    %c0_57 = arith.constant 0 : index
    %93 = vector.load %arg6[%c48_56, %c0_57] : memref<72x512xbf16, #tpu.memory_space<vmem>>, vector<8x512xbf16>
    tpu.vector_store %arg6[%c48_56, %c0_57], %92 {strides = array<i32>} : memref<72x512xbf16, #tpu.memory_space<vmem>>, vector<8x512xbf16>,
    %c496_i32_58 = arith.constant 496 : i32
    %94 = tpu.dynamic_rotate %55 by %c496_i32_58 dim 1 : vector<8x512xf32>, i32 -> vector<8x512xf32>
    %c7_59 = arith.constant 7 : index
    %c0_60 = arith.constant 0 : index
    %95 = vector.load %arg2[%c7_59, %c0_60] : memref<9x512xf32, #tpu.memory_space<vmem>>, vector<1x512xf32>
    %96 = vector.broadcast %95 : vector<1x512xf32> to vector<8x512xf32>
    %97 = arith.mulf %94, %96 : vector<8x512xf32>
    %98 = arith.truncf %97 : vector<8x512xf32> to vector<8x512xbf16>
    %c56_61 = arith.constant 56 : index
    %c0_62 = arith.constant 0 : index
    %99 = vector.load %arg6[%c56_61, %c0_62] : memref<72x512xbf16, #tpu.memory_space<vmem>>, vector<8x512xbf16>
    tpu.vector_store %arg6[%c56_61, %c0_62], %98 {strides = array<i32>} : memref<72x512xbf16, #tpu.memory_space<vmem>>, vector<8x512xbf16>,
    %c495_i32_63 = arith.constant 495 : i32
    %100 = tpu.dynamic_rotate %55 by %c495_i32_63 dim 1 : vector<8x512xf32>, i32 -> vector<8x512xf32>
    %c8_64 = arith.constant 8 : index
    %c0_65 = arith.constant 0 : index
    %101 = vector.load %arg2[%c8_64, %c0_65] : memref<9x512xf32, #tpu.memory_space<vmem>>, vector<1x512xf32>
    %102 = vector.broadcast %101 : vector<1x512xf32> to vector<8x512xf32>
    %103 = arith.mulf %100, %102 : vector<8x512xf32>
    %104 = arith.truncf %103 : vector<8x512xf32> to vector<8x512xbf16>
    %c64_66 = arith.constant 64 : index
    %c0_67 = arith.constant 0 : index
    %105 = vector.load %arg6[%c64_66, %c0_67] : memref<72x512xbf16, #tpu.memory_space<vmem>>, vector<8x512xbf16>
    tpu.vector_store %arg6[%c64_66, %c0_67], %104 {strides = array<i32>} : memref<72x512xbf16, #tpu.memory_space<vmem>>, vector<8x512xbf16>,
    %c0_68 = arith.constant 0 : index
    %c0_69 = arith.constant 0 : index
    %106 = vector.load %arg4[%c0_68, %c0_69] : memref<8x72xbf16, #tpu.memory_space<vmem>>, vector<8x72xbf16>
    %c0_70 = arith.constant 0 : index
    %c0_71 = arith.constant 0 : index
    %107 = vector.load %arg6[%c0_70, %c0_71] : memref<72x512xbf16, #tpu.memory_space<vmem>>, vector<72x512xbf16>
    %cst_72 = arith.constant dense<0.000000e+00> : vector<8x512xf32>
    %108 = tpu.matmul %106, %107, %cst_72 {dimension_numbers = #tpu.dot_dimension_numbers<[1], [0], [0], [1], [0, 0, 1, 1], [], []>} : vector<8x72xbf16>, vector<72x512xbf16>, vector<8x512xf32> -> vector<8x512xf32>
    %109 = arith.addf %108, %53 : vector<8x512xf32>
    %cst_73 = arith.constant 0.000000e+00 : f32
    %110 = vector.broadcast %cst_73 : f32 to vector<8x512xf32>
    %111 = arith.maximumf %109, %110 : vector<8x512xf32>
    %c17_i32_74 = arith.constant 17 : i32
    %112 = tpu.dynamic_rotate %111 by %c17_i32_74 dim 1 : vector<8x512xf32>, i32 -> vector<8x512xf32>
    %c0_75 = arith.constant 0 : index
    %c0_76 = arith.constant 0 : index
    %113 = vector.load %arg2[%c0_75, %c0_76] : memref<9x512xf32, #tpu.memory_space<vmem>>, vector<1x512xf32>
    %114 = vector.broadcast %113 : vector<1x512xf32> to vector<8x512xf32>
    %115 = arith.mulf %112, %114 : vector<8x512xf32>
    %116 = arith.truncf %115 : vector<8x512xf32> to vector<8x512xbf16>
    %c0_77 = arith.constant 0 : index
    %c0_78 = arith.constant 0 : index
    %117 = vector.load %arg6[%c0_77, %c0_78] : memref<72x512xbf16, #tpu.memory_space<vmem>>, vector<8x512xbf16>
    tpu.vector_store %arg6[%c0_77, %c0_78], %116 {strides = array<i32>} : memref<72x512xbf16, #tpu.memory_space<vmem>>, vector<8x512xbf16>,
    %c16_i32_79 = arith.constant 16 : i32
    %118 = tpu.dynamic_rotate %111 by %c16_i32_79 dim 1 : vector<8x512xf32>, i32 -> vector<8x512xf32>
    %c1_80 = arith.constant 1 : index
    %c0_81 = arith.constant 0 : index
    %119 = vector.load %arg2[%c1_80, %c0_81] : memref<9x512xf32, #tpu.memory_space<vmem>>, vector<1x512xf32>
    %120 = vector.broadcast %119 : vector<1x512xf32> to vector<8x512xf32>
    %121 = arith.mulf %118, %120 : vector<8x512xf32>
    %122 = arith.truncf %121 : vector<8x512xf32> to vector<8x512xbf16>
    %c8_82 = arith.constant 8 : index
    %c0_83 = arith.constant 0 : index
    %123 = vector.load %arg6[%c8_82, %c0_83] : memref<72x512xbf16, #tpu.memory_space<vmem>>, vector<8x512xbf16>
    tpu.vector_store %arg6[%c8_82, %c0_83], %122 {strides = array<i32>} : memref<72x512xbf16, #tpu.memory_space<vmem>>, vector<8x512xbf16>,
    %c15_i32_84 = arith.constant 15 : i32
    %124 = tpu.dynamic_rotate %111 by %c15_i32_84 dim 1 : vector<8x512xf32>, i32 -> vector<8x512xf32>
    %c2_85 = arith.constant 2 : index
    %c0_86 = arith.constant 0 : index
    %125 = vector.load %arg2[%c2_85, %c0_86] : memref<9x512xf32, #tpu.memory_space<vmem>>, vector<1x512xf32>
    %126 = vector.broadcast %125 : vector<1x512xf32> to vector<8x512xf32>
    %127 = arith.mulf %124, %126 : vector<8x512xf32>
    %128 = arith.truncf %127 : vector<8x512xf32> to vector<8x512xbf16>
    %c16_87 = arith.constant 16 : index
    %c0_88 = arith.constant 0 : index
    %129 = vector.load %arg6[%c16_87, %c0_88] : memref<72x512xbf16, #tpu.memory_space<vmem>>, vector<8x512xbf16>
    tpu.vector_store %arg6[%c16_87, %c0_88], %128 {strides = array<i32>} : memref<72x512xbf16, #tpu.memory_space<vmem>>, vector<8x512xbf16>,
    %c1_i32_89 = arith.constant 1 : i32
    %130 = tpu.dynamic_rotate %111 by %c1_i32_89 dim 1 : vector<8x512xf32>, i32 -> vector<8x512xf32>
    %c3_90 = arith.constant 3 : index
    %c0_91 = arith.constant 0 : index
    %131 = vector.load %arg2[%c3_90, %c0_91] : memref<9x512xf32, #tpu.memory_space<vmem>>, vector<1x512xf32>
    %132 = vector.broadcast %131 : vector<1x512xf32> to vector<8x512xf32>
    %133 = arith.mulf %130, %132 : vector<8x512xf32>
    %134 = arith.truncf %133 : vector<8x512xf32> to vector<8x512xbf16>
    %c24_92 = arith.constant 24 : index
    %c0_93 = arith.constant 0 : index
    %135 = vector.load %arg6[%c24_92, %c0_93] : memref<72x512xbf16, #tpu.memory_space<vmem>>, vector<8x512xbf16>
    tpu.vector_store %arg6[%c24_92, %c0_93], %134 {strides = array<i32>} : memref<72x512xbf16, #tpu.memory_space<vmem>>, vector<8x512xbf16>,
    %136 = arith.truncf %111 : vector<8x512xf32> to vector<8x512xbf16>
    %c32_94 = arith.constant 32 : index
    %c0_95 = arith.constant 0 : index
    %137 = vector.load %arg6[%c32_94, %c0_95] : memref<72x512xbf16, #tpu.memory_space<vmem>>, vector<8x512xbf16>
    tpu.vector_store %arg6[%c32_94, %c0_95], %136 {strides = array<i32>} : memref<72x512xbf16, #tpu.memory_space<vmem>>, vector<8x512xbf16>,
    %c511_i32_96 = arith.constant 511 : i32
    %138 = tpu.dynamic_rotate %111 by %c511_i32_96 dim 1 : vector<8x512xf32>, i32 -> vector<8x512xf32>
    %c5_97 = arith.constant 5 : index
    %c0_98 = arith.constant 0 : index
    %139 = vector.load %arg2[%c5_97, %c0_98] : memref<9x512xf32, #tpu.memory_space<vmem>>, vector<1x512xf32>
    %140 = vector.broadcast %139 : vector<1x512xf32> to vector<8x512xf32>
    %141 = arith.mulf %138, %140 : vector<8x512xf32>
    %142 = arith.truncf %141 : vector<8x512xf32> to vector<8x512xbf16>
    %c40_99 = arith.constant 40 : index
    %c0_100 = arith.constant 0 : index
    %143 = vector.load %arg6[%c40_99, %c0_100] : memref<72x512xbf16, #tpu.memory_space<vmem>>, vector<8x512xbf16>
    tpu.vector_store %arg6[%c40_99, %c0_100], %142 {strides = array<i32>} : memref<72x512xbf16, #tpu.memory_space<vmem>>, vector<8x512xbf16>,
    %c497_i32_101 = arith.constant 497 : i32
    %144 = tpu.dynamic_rotate %111 by %c497_i32_101 dim 1 : vector<8x512xf32>, i32 -> vector<8x512xf32>
    %c6_102 = arith.constant 6 : index
    %c0_103 = arith.constant 0 : index
    %145 = vector.load %arg2[%c6_102, %c0_103] : memref<9x512xf32, #tpu.memory_space<vmem>>, vector<1x512xf32>
    %146 = vector.broadcast %145 : vector<1x512xf32> to vector<8x512xf32>
    %147 = arith.mulf %144, %146 : vector<8x512xf32>
    %148 = arith.truncf %147 : vector<8x512xf32> to vector<8x512xbf16>
    %c48_104 = arith.constant 48 : index
    %c0_105 = arith.constant 0 : index
    %149 = vector.load %arg6[%c48_104, %c0_105] : memref<72x512xbf16, #tpu.memory_space<vmem>>, vector<8x512xbf16>
    tpu.vector_store %arg6[%c48_104, %c0_105], %148 {strides = array<i32>} : memref<72x512xbf16, #tpu.memory_space<vmem>>, vector<8x512xbf16>,
    %c496_i32_106 = arith.constant 496 : i32
    %150 = tpu.dynamic_rotate %111 by %c496_i32_106 dim 1 : vector<8x512xf32>, i32 -> vector<8x512xf32>
    %c7_107 = arith.constant 7 : index
    %c0_108 = arith.constant 0 : index
    %151 = vector.load %arg2[%c7_107, %c0_108] : memref<9x512xf32, #tpu.memory_space<vmem>>, vector<1x512xf32>
    %152 = vector.broadcast %151 : vector<1x512xf32> to vector<8x512xf32>
    %153 = arith.mulf %150, %152 : vector<8x512xf32>
    %154 = arith.truncf %153 : vector<8x512xf32> to vector<8x512xbf16>
    %c56_109 = arith.constant 56 : index
    %c0_110 = arith.constant 0 : index
    %155 = vector.load %arg6[%c56_109, %c0_110] : memref<72x512xbf16, #tpu.memory_space<vmem>>, vector<8x512xbf16>
    tpu.vector_store %arg6[%c56_109, %c0_110], %154 {strides = array<i32>} : memref<72x512xbf16, #tpu.memory_space<vmem>>, vector<8x512xbf16>,
    %c495_i32_111 = arith.constant 495 : i32
    %156 = tpu.dynamic_rotate %111 by %c495_i32_111 dim 1 : vector<8x512xf32>, i32 -> vector<8x512xf32>
    %c8_112 = arith.constant 8 : index
    %c0_113 = arith.constant 0 : index
    %157 = vector.load %arg2[%c8_112, %c0_113] : memref<9x512xf32, #tpu.memory_space<vmem>>, vector<1x512xf32>
    %158 = vector.broadcast %157 : vector<1x512xf32> to vector<8x512xf32>
    %159 = arith.mulf %156, %158 : vector<8x512xf32>
    %160 = arith.truncf %159 : vector<8x512xf32> to vector<8x512xbf16>
    %c64_114 = arith.constant 64 : index
    %c0_115 = arith.constant 0 : index
    %161 = vector.load %arg6[%c64_114, %c0_115] : memref<72x512xbf16, #tpu.memory_space<vmem>>, vector<8x512xbf16>
    tpu.vector_store %arg6[%c64_114, %c0_115], %160 {strides = array<i32>} : memref<72x512xbf16, #tpu.memory_space<vmem>>, vector<8x512xbf16>,
    %c0_116 = arith.constant 0 : index
    %c0_117 = arith.constant 0 : index
    %162 = vector.load %arg4[%c0_116, %c0_117] : memref<8x72xbf16, #tpu.memory_space<vmem>>, vector<8x72xbf16>
    %c0_118 = arith.constant 0 : index
    %c0_119 = arith.constant 0 : index
    %163 = vector.load %arg6[%c0_118, %c0_119] : memref<72x512xbf16, #tpu.memory_space<vmem>>, vector<72x512xbf16>
    %cst_120 = arith.constant dense<0.000000e+00> : vector<8x512xf32>
    %164 = tpu.matmul %162, %163, %cst_120 {dimension_numbers = #tpu.dot_dimension_numbers<[1], [0], [0], [1], [0, 0, 1, 1], [], []>} : vector<8x72xbf16>, vector<72x512xbf16>, vector<8x512xf32> -> vector<8x512xf32>
    %165 = arith.addf %164, %53 : vector<8x512xf32>
    %cst_121 = arith.constant 0.000000e+00 : f32
    %166 = vector.broadcast %cst_121 : f32 to vector<8x512xf32>
    %167 = arith.maximumf %165, %166 : vector<8x512xf32>
    %c17_i32_122 = arith.constant 17 : i32
    %168 = tpu.dynamic_rotate %167 by %c17_i32_122 dim 1 : vector<8x512xf32>, i32 -> vector<8x512xf32>
    %c0_123 = arith.constant 0 : index
    %c0_124 = arith.constant 0 : index
    %169 = vector.load %arg2[%c0_123, %c0_124] : memref<9x512xf32, #tpu.memory_space<vmem>>, vector<1x512xf32>
    %170 = vector.broadcast %169 : vector<1x512xf32> to vector<8x512xf32>
    %171 = arith.mulf %168, %170 : vector<8x512xf32>
    %172 = arith.truncf %171 : vector<8x512xf32> to vector<8x512xbf16>
    %c0_125 = arith.constant 0 : index
    %c0_126 = arith.constant 0 : index
    %173 = vector.load %arg6[%c0_125, %c0_126] : memref<72x512xbf16, #tpu.memory_space<vmem>>, vector<8x512xbf16>
    tpu.vector_store %arg6[%c0_125, %c0_126], %172 {strides = array<i32>} : memref<72x512xbf16, #tpu.memory_space<vmem>>, vector<8x512xbf16>,
    %c16_i32_127 = arith.constant 16 : i32
    %174 = tpu.dynamic_rotate %167 by %c16_i32_127 dim 1 : vector<8x512xf32>, i32 -> vector<8x512xf32>
    %c1_128 = arith.constant 1 : index
    %c0_129 = arith.constant 0 : index
    %175 = vector.load %arg2[%c1_128, %c0_129] : memref<9x512xf32, #tpu.memory_space<vmem>>, vector<1x512xf32>
    %176 = vector.broadcast %175 : vector<1x512xf32> to vector<8x512xf32>
    %177 = arith.mulf %174, %176 : vector<8x512xf32>
    %178 = arith.truncf %177 : vector<8x512xf32> to vector<8x512xbf16>
    %c8_130 = arith.constant 8 : index
    %c0_131 = arith.constant 0 : index
    %179 = vector.load %arg6[%c8_130, %c0_131] : memref<72x512xbf16, #tpu.memory_space<vmem>>, vector<8x512xbf16>
    tpu.vector_store %arg6[%c8_130, %c0_131], %178 {strides = array<i32>} : memref<72x512xbf16, #tpu.memory_space<vmem>>, vector<8x512xbf16>,
    %c15_i32_132 = arith.constant 15 : i32
    %180 = tpu.dynamic_rotate %167 by %c15_i32_132 dim 1 : vector<8x512xf32>, i32 -> vector<8x512xf32>
    %c2_133 = arith.constant 2 : index
    %c0_134 = arith.constant 0 : index
    %181 = vector.load %arg2[%c2_133, %c0_134] : memref<9x512xf32, #tpu.memory_space<vmem>>, vector<1x512xf32>
    %182 = vector.broadcast %181 : vector<1x512xf32> to vector<8x512xf32>
    %183 = arith.mulf %180, %182 : vector<8x512xf32>
    %184 = arith.truncf %183 : vector<8x512xf32> to vector<8x512xbf16>
    %c16_135 = arith.constant 16 : index
    %c0_136 = arith.constant 0 : index
    %185 = vector.load %arg6[%c16_135, %c0_136] : memref<72x512xbf16, #tpu.memory_space<vmem>>, vector<8x512xbf16>
    tpu.vector_store %arg6[%c16_135, %c0_136], %184 {strides = array<i32>} : memref<72x512xbf16, #tpu.memory_space<vmem>>, vector<8x512xbf16>,
    %c1_i32_137 = arith.constant 1 : i32
    %186 = tpu.dynamic_rotate %167 by %c1_i32_137 dim 1 : vector<8x512xf32>, i32 -> vector<8x512xf32>
    %c3_138 = arith.constant 3 : index
    %c0_139 = arith.constant 0 : index
    %187 = vector.load %arg2[%c3_138, %c0_139] : memref<9x512xf32, #tpu.memory_space<vmem>>, vector<1x512xf32>
    %188 = vector.broadcast %187 : vector<1x512xf32> to vector<8x512xf32>
    %189 = arith.mulf %186, %188 : vector<8x512xf32>
    %190 = arith.truncf %189 : vector<8x512xf32> to vector<8x512xbf16>
    %c24_140 = arith.constant 24 : index
    %c0_141 = arith.constant 0 : index
    %191 = vector.load %arg6[%c24_140, %c0_141] : memref<72x512xbf16, #tpu.memory_space<vmem>>, vector<8x512xbf16>
    tpu.vector_store %arg6[%c24_140, %c0_141], %190 {strides = array<i32>} : memref<72x512xbf16, #tpu.memory_space<vmem>>, vector<8x512xbf16>,
    %192 = arith.truncf %167 : vector<8x512xf32> to vector<8x512xbf16>
    %c32_142 = arith.constant 32 : index
    %c0_143 = arith.constant 0 : index
    %193 = vector.load %arg6[%c32_142, %c0_143] : memref<72x512xbf16, #tpu.memory_space<vmem>>, vector<8x512xbf16>
    tpu.vector_store %arg6[%c32_142, %c0_143], %192 {strides = array<i32>} : memref<72x512xbf16, #tpu.memory_space<vmem>>, vector<8x512xbf16>,
    %c511_i32_144 = arith.constant 511 : i32
    %194 = tpu.dynamic_rotate %167 by %c511_i32_144 dim 1 : vector<8x512xf32>, i32 -> vector<8x512xf32>
    %c5_145 = arith.constant 5 : index
    %c0_146 = arith.constant 0 : index
    %195 = vector.load %arg2[%c5_145, %c0_146] : memref<9x512xf32, #tpu.memory_space<vmem>>, vector<1x512xf32>
    %196 = vector.broadcast %195 : vector<1x512xf32> to vector<8x512xf32>
    %197 = arith.mulf %194, %196 : vector<8x512xf32>
    %198 = arith.truncf %197 : vector<8x512xf32> to vector<8x512xbf16>
    %c40_147 = arith.constant 40 : index
    %c0_148 = arith.constant 0 : index
    %199 = vector.load %arg6[%c40_147, %c0_148] : memref<72x512xbf16, #tpu.memory_space<vmem>>, vector<8x512xbf16>
    tpu.vector_store %arg6[%c40_147, %c0_148], %198 {strides = array<i32>} : memref<72x512xbf16, #tpu.memory_space<vmem>>, vector<8x512xbf16>,
    %c497_i32_149 = arith.constant 497 : i32
    %200 = tpu.dynamic_rotate %167 by %c497_i32_149 dim 1 : vector<8x512xf32>, i32 -> vector<8x512xf32>
    %c6_150 = arith.constant 6 : index
    %c0_151 = arith.constant 0 : index
    %201 = vector.load %arg2[%c6_150, %c0_151] : memref<9x512xf32, #tpu.memory_space<vmem>>, vector<1x512xf32>
    %202 = vector.broadcast %201 : vector<1x512xf32> to vector<8x512xf32>
    %203 = arith.mulf %200, %202 : vector<8x512xf32>
    %204 = arith.truncf %203 : vector<8x512xf32> to vector<8x512xbf16>
    %c48_152 = arith.constant 48 : index
    %c0_153 = arith.constant 0 : index
    %205 = vector.load %arg6[%c48_152, %c0_153] : memref<72x512xbf16, #tpu.memory_space<vmem>>, vector<8x512xbf16>
    tpu.vector_store %arg6[%c48_152, %c0_153], %204 {strides = array<i32>} : memref<72x512xbf16, #tpu.memory_space<vmem>>, vector<8x512xbf16>,
    %c496_i32_154 = arith.constant 496 : i32
    %206 = tpu.dynamic_rotate %167 by %c496_i32_154 dim 1 : vector<8x512xf32>, i32 -> vector<8x512xf32>
    %c7_155 = arith.constant 7 : index
    %c0_156 = arith.constant 0 : index
    %207 = vector.load %arg2[%c7_155, %c0_156] : memref<9x512xf32, #tpu.memory_space<vmem>>, vector<1x512xf32>
    %208 = vector.broadcast %207 : vector<1x512xf32> to vector<8x512xf32>
    %209 = arith.mulf %206, %208 : vector<8x512xf32>
    %210 = arith.truncf %209 : vector<8x512xf32> to vector<8x512xbf16>
    %c56_157 = arith.constant 56 : index
    %c0_158 = arith.constant 0 : index
    %211 = vector.load %arg6[%c56_157, %c0_158] : memref<72x512xbf16, #tpu.memory_space<vmem>>, vector<8x512xbf16>
    tpu.vector_store %arg6[%c56_157, %c0_158], %210 {strides = array<i32>} : memref<72x512xbf16, #tpu.memory_space<vmem>>, vector<8x512xbf16>,
    %c495_i32_159 = arith.constant 495 : i32
    %212 = tpu.dynamic_rotate %167 by %c495_i32_159 dim 1 : vector<8x512xf32>, i32 -> vector<8x512xf32>
    %c8_160 = arith.constant 8 : index
    %c0_161 = arith.constant 0 : index
    %213 = vector.load %arg2[%c8_160, %c0_161] : memref<9x512xf32, #tpu.memory_space<vmem>>, vector<1x512xf32>
    %214 = vector.broadcast %213 : vector<1x512xf32> to vector<8x512xf32>
    %215 = arith.mulf %212, %214 : vector<8x512xf32>
    %216 = arith.truncf %215 : vector<8x512xf32> to vector<8x512xbf16>
    %c64_162 = arith.constant 64 : index
    %c0_163 = arith.constant 0 : index
    %217 = vector.load %arg6[%c64_162, %c0_163] : memref<72x512xbf16, #tpu.memory_space<vmem>>, vector<8x512xbf16>
    tpu.vector_store %arg6[%c64_162, %c0_163], %216 {strides = array<i32>} : memref<72x512xbf16, #tpu.memory_space<vmem>>, vector<8x512xbf16>,
    %c0_164 = arith.constant 0 : index
    %c0_165 = arith.constant 0 : index
    %218 = vector.load %arg4[%c0_164, %c0_165] : memref<8x72xbf16, #tpu.memory_space<vmem>>, vector<8x72xbf16>
    %c0_166 = arith.constant 0 : index
    %c0_167 = arith.constant 0 : index
    %219 = vector.load %arg6[%c0_166, %c0_167] : memref<72x512xbf16, #tpu.memory_space<vmem>>, vector<72x512xbf16>
    %cst_168 = arith.constant dense<0.000000e+00> : vector<8x512xf32>
    %220 = tpu.matmul %218, %219, %cst_168 {dimension_numbers = #tpu.dot_dimension_numbers<[1], [0], [0], [1], [0, 0, 1, 1], [], []>} : vector<8x72xbf16>, vector<72x512xbf16>, vector<8x512xf32> -> vector<8x512xf32>
    %221 = arith.addf %220, %53 : vector<8x512xf32>
    %cst_169 = arith.constant 0.000000e+00 : f32
    %222 = vector.broadcast %cst_169 : f32 to vector<8x512xf32>
    %223 = arith.maximumf %221, %222 : vector<8x512xf32>
    %c17_i32_170 = arith.constant 17 : i32
    %224 = tpu.dynamic_rotate %223 by %c17_i32_170 dim 1 : vector<8x512xf32>, i32 -> vector<8x512xf32>
    %c0_171 = arith.constant 0 : index
    %c0_172 = arith.constant 0 : index
    %225 = vector.load %arg2[%c0_171, %c0_172] : memref<9x512xf32, #tpu.memory_space<vmem>>, vector<1x512xf32>
    %226 = vector.broadcast %225 : vector<1x512xf32> to vector<8x512xf32>
    %227 = arith.mulf %224, %226 : vector<8x512xf32>
    %228 = arith.truncf %227 : vector<8x512xf32> to vector<8x512xbf16>
    %c0_173 = arith.constant 0 : index
    %c0_174 = arith.constant 0 : index
    %229 = vector.load %arg6[%c0_173, %c0_174] : memref<72x512xbf16, #tpu.memory_space<vmem>>, vector<8x512xbf16>
    tpu.vector_store %arg6[%c0_173, %c0_174], %228 {strides = array<i32>} : memref<72x512xbf16, #tpu.memory_space<vmem>>, vector<8x512xbf16>,
    %c16_i32_175 = arith.constant 16 : i32
    %230 = tpu.dynamic_rotate %223 by %c16_i32_175 dim 1 : vector<8x512xf32>, i32 -> vector<8x512xf32>
    %c1_176 = arith.constant 1 : index
    %c0_177 = arith.constant 0 : index
    %231 = vector.load %arg2[%c1_176, %c0_177] : memref<9x512xf32, #tpu.memory_space<vmem>>, vector<1x512xf32>
    %232 = vector.broadcast %231 : vector<1x512xf32> to vector<8x512xf32>
    %233 = arith.mulf %230, %232 : vector<8x512xf32>
    %234 = arith.truncf %233 : vector<8x512xf32> to vector<8x512xbf16>
    %c8_178 = arith.constant 8 : index
    %c0_179 = arith.constant 0 : index
    %235 = vector.load %arg6[%c8_178, %c0_179] : memref<72x512xbf16, #tpu.memory_space<vmem>>, vector<8x512xbf16>
    tpu.vector_store %arg6[%c8_178, %c0_179], %234 {strides = array<i32>} : memref<72x512xbf16, #tpu.memory_space<vmem>>, vector<8x512xbf16>,
    %c15_i32_180 = arith.constant 15 : i32
    %236 = tpu.dynamic_rotate %223 by %c15_i32_180 dim 1 : vector<8x512xf32>, i32 -> vector<8x512xf32>
    %c2_181 = arith.constant 2 : index
    %c0_182 = arith.constant 0 : index
    %237 = vector.load %arg2[%c2_181, %c0_182] : memref<9x512xf32, #tpu.memory_space<vmem>>, vector<1x512xf32>
    %238 = vector.broadcast %237 : vector<1x512xf32> to vector<8x512xf32>
    %239 = arith.mulf %236, %238 : vector<8x512xf32>
    %240 = arith.truncf %239 : vector<8x512xf32> to vector<8x512xbf16>
    %c16_183 = arith.constant 16 : index
    %c0_184 = arith.constant 0 : index
    %241 = vector.load %arg6[%c16_183, %c0_184] : memref<72x512xbf16, #tpu.memory_space<vmem>>, vector<8x512xbf16>
    tpu.vector_store %arg6[%c16_183, %c0_184], %240 {strides = array<i32>} : memref<72x512xbf16, #tpu.memory_space<vmem>>, vector<8x512xbf16>,
    %c1_i32_185 = arith.constant 1 : i32
    %242 = tpu.dynamic_rotate %223 by %c1_i32_185 dim 1 : vector<8x512xf32>, i32 -> vector<8x512xf32>
    %c3_186 = arith.constant 3 : index
    %c0_187 = arith.constant 0 : index
    %243 = vector.load %arg2[%c3_186, %c0_187] : memref<9x512xf32, #tpu.memory_space<vmem>>, vector<1x512xf32>
    %244 = vector.broadcast %243 : vector<1x512xf32> to vector<8x512xf32>
    %245 = arith.mulf %242, %244 : vector<8x512xf32>
    %246 = arith.truncf %245 : vector<8x512xf32> to vector<8x512xbf16>
    %c24_188 = arith.constant 24 : index
    %c0_189 = arith.constant 0 : index
    %247 = vector.load %arg6[%c24_188, %c0_189] : memref<72x512xbf16, #tpu.memory_space<vmem>>, vector<8x512xbf16>
    tpu.vector_store %arg6[%c24_188, %c0_189], %246 {strides = array<i32>} : memref<72x512xbf16, #tpu.memory_space<vmem>>, vector<8x512xbf16>,
    %248 = arith.truncf %223 : vector<8x512xf32> to vector<8x512xbf16>
    %c32_190 = arith.constant 32 : index
    %c0_191 = arith.constant 0 : index
    %249 = vector.load %arg6[%c32_190, %c0_191] : memref<72x512xbf16, #tpu.memory_space<vmem>>, vector<8x512xbf16>
    tpu.vector_store %arg6[%c32_190, %c0_191], %248 {strides = array<i32>} : memref<72x512xbf16, #tpu.memory_space<vmem>>, vector<8x512xbf16>,
    %c511_i32_192 = arith.constant 511 : i32
    %250 = tpu.dynamic_rotate %223 by %c511_i32_192 dim 1 : vector<8x512xf32>, i32 -> vector<8x512xf32>
    %c5_193 = arith.constant 5 : index
    %c0_194 = arith.constant 0 : index
    %251 = vector.load %arg2[%c5_193, %c0_194] : memref<9x512xf32, #tpu.memory_space<vmem>>, vector<1x512xf32>
    %252 = vector.broadcast %251 : vector<1x512xf32> to vector<8x512xf32>
    %253 = arith.mulf %250, %252 : vector<8x512xf32>
    %254 = arith.truncf %253 : vector<8x512xf32> to vector<8x512xbf16>
    %c40_195 = arith.constant 40 : index
    %c0_196 = arith.constant 0 : index
    %255 = vector.load %arg6[%c40_195, %c0_196] : memref<72x512xbf16, #tpu.memory_space<vmem>>, vector<8x512xbf16>
    tpu.vector_store %arg6[%c40_195, %c0_196], %254 {strides = array<i32>} : memref<72x512xbf16, #tpu.memory_space<vmem>>, vector<8x512xbf16>,
    %c497_i32_197 = arith.constant 497 : i32
    %256 = tpu.dynamic_rotate %223 by %c497_i32_197 dim 1 : vector<8x512xf32>, i32 -> vector<8x512xf32>
    %c6_198 = arith.constant 6 : index
    %c0_199 = arith.constant 0 : index
    %257 = vector.load %arg2[%c6_198, %c0_199] : memref<9x512xf32, #tpu.memory_space<vmem>>, vector<1x512xf32>
    %258 = vector.broadcast %257 : vector<1x512xf32> to vector<8x512xf32>
    %259 = arith.mulf %256, %258 : vector<8x512xf32>
    %260 = arith.truncf %259 : vector<8x512xf32> to vector<8x512xbf16>
    %c48_200 = arith.constant 48 : index
    %c0_201 = arith.constant 0 : index
    %261 = vector.load %arg6[%c48_200, %c0_201] : memref<72x512xbf16, #tpu.memory_space<vmem>>, vector<8x512xbf16>
    tpu.vector_store %arg6[%c48_200, %c0_201], %260 {strides = array<i32>} : memref<72x512xbf16, #tpu.memory_space<vmem>>, vector<8x512xbf16>,
    %c496_i32_202 = arith.constant 496 : i32
    %262 = tpu.dynamic_rotate %223 by %c496_i32_202 dim 1 : vector<8x512xf32>, i32 -> vector<8x512xf32>
    %c7_203 = arith.constant 7 : index
    %c0_204 = arith.constant 0 : index
    %263 = vector.load %arg2[%c7_203, %c0_204] : memref<9x512xf32, #tpu.memory_space<vmem>>, vector<1x512xf32>
    %264 = vector.broadcast %263 : vector<1x512xf32> to vector<8x512xf32>
    %265 = arith.mulf %262, %264 : vector<8x512xf32>
    %266 = arith.truncf %265 : vector<8x512xf32> to vector<8x512xbf16>
    %c56_205 = arith.constant 56 : index
    %c0_206 = arith.constant 0 : index
    %267 = vector.load %arg6[%c56_205, %c0_206] : memref<72x512xbf16, #tpu.memory_space<vmem>>, vector<8x512xbf16>
    tpu.vector_store %arg6[%c56_205, %c0_206], %266 {strides = array<i32>} : memref<72x512xbf16, #tpu.memory_space<vmem>>, vector<8x512xbf16>,
    %c495_i32_207 = arith.constant 495 : i32
    %268 = tpu.dynamic_rotate %223 by %c495_i32_207 dim 1 : vector<8x512xf32>, i32 -> vector<8x512xf32>
    %c8_208 = arith.constant 8 : index
    %c0_209 = arith.constant 0 : index
    %269 = vector.load %arg2[%c8_208, %c0_209] : memref<9x512xf32, #tpu.memory_space<vmem>>, vector<1x512xf32>
    %270 = vector.broadcast %269 : vector<1x512xf32> to vector<8x512xf32>
    %271 = arith.mulf %268, %270 : vector<8x512xf32>
    %272 = arith.truncf %271 : vector<8x512xf32> to vector<8x512xbf16>
    %c64_210 = arith.constant 64 : index
    %c0_211 = arith.constant 0 : index
    %273 = vector.load %arg6[%c64_210, %c0_211] : memref<72x512xbf16, #tpu.memory_space<vmem>>, vector<8x512xbf16>
    tpu.vector_store %arg6[%c64_210, %c0_211], %272 {strides = array<i32>} : memref<72x512xbf16, #tpu.memory_space<vmem>>, vector<8x512xbf16>,
    %c0_212 = arith.constant 0 : index
    %c0_213 = arith.constant 0 : index
    %274 = vector.load %arg4[%c0_212, %c0_213] : memref<8x72xbf16, #tpu.memory_space<vmem>>, vector<8x72xbf16>
    %c0_214 = arith.constant 0 : index
    %c0_215 = arith.constant 0 : index
    %275 = vector.load %arg6[%c0_214, %c0_215] : memref<72x512xbf16, #tpu.memory_space<vmem>>, vector<72x512xbf16>
    %cst_216 = arith.constant dense<0.000000e+00> : vector<8x512xf32>
    %276 = tpu.matmul %274, %275, %cst_216 {dimension_numbers = #tpu.dot_dimension_numbers<[1], [0], [0], [1], [0, 0, 1, 1], [], []>} : vector<8x72xbf16>, vector<72x512xbf16>, vector<8x512xf32> -> vector<8x512xf32>
    %277 = arith.addf %276, %53 : vector<8x512xf32>
    %cst_217 = arith.constant 0.000000e+00 : f32
    %278 = vector.broadcast %cst_217 : f32 to vector<8x512xf32>
    %279 = arith.maximumf %277, %278 : vector<8x512xf32>
    %c17_i32_218 = arith.constant 17 : i32
    %280 = tpu.dynamic_rotate %279 by %c17_i32_218 dim 1 : vector<8x512xf32>, i32 -> vector<8x512xf32>
    %c0_219 = arith.constant 0 : index
    %c0_220 = arith.constant 0 : index
    %281 = vector.load %arg2[%c0_219, %c0_220] : memref<9x512xf32, #tpu.memory_space<vmem>>, vector<1x512xf32>
    %282 = vector.broadcast %281 : vector<1x512xf32> to vector<8x512xf32>
    %283 = arith.mulf %280, %282 : vector<8x512xf32>
    %284 = arith.truncf %283 : vector<8x512xf32> to vector<8x512xbf16>
    %c0_221 = arith.constant 0 : index
    %c0_222 = arith.constant 0 : index
    %285 = vector.load %arg6[%c0_221, %c0_222] : memref<72x512xbf16, #tpu.memory_space<vmem>>, vector<8x512xbf16>
    tpu.vector_store %arg6[%c0_221, %c0_222], %284 {strides = array<i32>} : memref<72x512xbf16, #tpu.memory_space<vmem>>, vector<8x512xbf16>,
    %c16_i32_223 = arith.constant 16 : i32
    %286 = tpu.dynamic_rotate %279 by %c16_i32_223 dim 1 : vector<8x512xf32>, i32 -> vector<8x512xf32>
    %c1_224 = arith.constant 1 : index
    %c0_225 = arith.constant 0 : index
    %287 = vector.load %arg2[%c1_224, %c0_225] : memref<9x512xf32, #tpu.memory_space<vmem>>, vector<1x512xf32>
    %288 = vector.broadcast %287 : vector<1x512xf32> to vector<8x512xf32>
    %289 = arith.mulf %286, %288 : vector<8x512xf32>
    %290 = arith.truncf %289 : vector<8x512xf32> to vector<8x512xbf16>
    %c8_226 = arith.constant 8 : index
    %c0_227 = arith.constant 0 : index
    %291 = vector.load %arg6[%c8_226, %c0_227] : memref<72x512xbf16, #tpu.memory_space<vmem>>, vector<8x512xbf16>
    tpu.vector_store %arg6[%c8_226, %c0_227], %290 {strides = array<i32>} : memref<72x512xbf16, #tpu.memory_space<vmem>>, vector<8x512xbf16>,
    %c15_i32_228 = arith.constant 15 : i32
    %292 = tpu.dynamic_rotate %279 by %c15_i32_228 dim 1 : vector<8x512xf32>, i32 -> vector<8x512xf32>
    %c2_229 = arith.constant 2 : index
    %c0_230 = arith.constant 0 : index
    %293 = vector.load %arg2[%c2_229, %c0_230] : memref<9x512xf32, #tpu.memory_space<vmem>>, vector<1x512xf32>
    %294 = vector.broadcast %293 : vector<1x512xf32> to vector<8x512xf32>
    %295 = arith.mulf %292, %294 : vector<8x512xf32>
    %296 = arith.truncf %295 : vector<8x512xf32> to vector<8x512xbf16>
    %c16_231 = arith.constant 16 : index
    %c0_232 = arith.constant 0 : index
    %297 = vector.load %arg6[%c16_231, %c0_232] : memref<72x512xbf16, #tpu.memory_space<vmem>>, vector<8x512xbf16>
    tpu.vector_store %arg6[%c16_231, %c0_232], %296 {strides = array<i32>} : memref<72x512xbf16, #tpu.memory_space<vmem>>, vector<8x512xbf16>,
    %c1_i32_233 = arith.constant 1 : i32
    %298 = tpu.dynamic_rotate %279 by %c1_i32_233 dim 1 : vector<8x512xf32>, i32 -> vector<8x512xf32>
    %c3_234 = arith.constant 3 : index
    %c0_235 = arith.constant 0 : index
    %299 = vector.load %arg2[%c3_234, %c0_235] : memref<9x512xf32, #tpu.memory_space<vmem>>, vector<1x512xf32>
    %300 = vector.broadcast %299 : vector<1x512xf32> to vector<8x512xf32>
    %301 = arith.mulf %298, %300 : vector<8x512xf32>
    %302 = arith.truncf %301 : vector<8x512xf32> to vector<8x512xbf16>
    %c24_236 = arith.constant 24 : index
    %c0_237 = arith.constant 0 : index
    %303 = vector.load %arg6[%c24_236, %c0_237] : memref<72x512xbf16, #tpu.memory_space<vmem>>, vector<8x512xbf16>
    tpu.vector_store %arg6[%c24_236, %c0_237], %302 {strides = array<i32>} : memref<72x512xbf16, #tpu.memory_space<vmem>>, vector<8x512xbf16>,
    %304 = arith.truncf %279 : vector<8x512xf32> to vector<8x512xbf16>
    %c32_238 = arith.constant 32 : index
    %c0_239 = arith.constant 0 : index
    %305 = vector.load %arg6[%c32_238, %c0_239] : memref<72x512xbf16, #tpu.memory_space<vmem>>, vector<8x512xbf16>
    tpu.vector_store %arg6[%c32_238, %c0_239], %304 {strides = array<i32>} : memref<72x512xbf16, #tpu.memory_space<vmem>>, vector<8x512xbf16>,
    %c511_i32_240 = arith.constant 511 : i32
    %306 = tpu.dynamic_rotate %279 by %c511_i32_240 dim 1 : vector<8x512xf32>, i32 -> vector<8x512xf32>
    %c5_241 = arith.constant 5 : index
    %c0_242 = arith.constant 0 : index
    %307 = vector.load %arg2[%c5_241, %c0_242] : memref<9x512xf32, #tpu.memory_space<vmem>>, vector<1x512xf32>
    %308 = vector.broadcast %307 : vector<1x512xf32> to vector<8x512xf32>
    %309 = arith.mulf %306, %308 : vector<8x512xf32>
    %310 = arith.truncf %309 : vector<8x512xf32> to vector<8x512xbf16>
    %c40_243 = arith.constant 40 : index
    %c0_244 = arith.constant 0 : index
    %311 = vector.load %arg6[%c40_243, %c0_244] : memref<72x512xbf16, #tpu.memory_space<vmem>>, vector<8x512xbf16>
    tpu.vector_store %arg6[%c40_243, %c0_244], %310 {strides = array<i32>} : memref<72x512xbf16, #tpu.memory_space<vmem>>, vector<8x512xbf16>,
    %c497_i32_245 = arith.constant 497 : i32
    %312 = tpu.dynamic_rotate %279 by %c497_i32_245 dim 1 : vector<8x512xf32>, i32 -> vector<8x512xf32>
    %c6_246 = arith.constant 6 : index
    %c0_247 = arith.constant 0 : index
    %313 = vector.load %arg2[%c6_246, %c0_247] : memref<9x512xf32, #tpu.memory_space<vmem>>, vector<1x512xf32>
    %314 = vector.broadcast %313 : vector<1x512xf32> to vector<8x512xf32>
    %315 = arith.mulf %312, %314 : vector<8x512xf32>
    %316 = arith.truncf %315 : vector<8x512xf32> to vector<8x512xbf16>
    %c48_248 = arith.constant 48 : index
    %c0_249 = arith.constant 0 : index
    %317 = vector.load %arg6[%c48_248, %c0_249] : memref<72x512xbf16, #tpu.memory_space<vmem>>, vector<8x512xbf16>
    tpu.vector_store %arg6[%c48_248, %c0_249], %316 {strides = array<i32>} : memref<72x512xbf16, #tpu.memory_space<vmem>>, vector<8x512xbf16>,
    %c496_i32_250 = arith.constant 496 : i32
    %318 = tpu.dynamic_rotate %279 by %c496_i32_250 dim 1 : vector<8x512xf32>, i32 -> vector<8x512xf32>
    %c7_251 = arith.constant 7 : index
    %c0_252 = arith.constant 0 : index
    %319 = vector.load %arg2[%c7_251, %c0_252] : memref<9x512xf32, #tpu.memory_space<vmem>>, vector<1x512xf32>
    %320 = vector.broadcast %319 : vector<1x512xf32> to vector<8x512xf32>
    %321 = arith.mulf %318, %320 : vector<8x512xf32>
    %322 = arith.truncf %321 : vector<8x512xf32> to vector<8x512xbf16>
    %c56_253 = arith.constant 56 : index
    %c0_254 = arith.constant 0 : index
    %323 = vector.load %arg6[%c56_253, %c0_254] : memref<72x512xbf16, #tpu.memory_space<vmem>>, vector<8x512xbf16>
    tpu.vector_store %arg6[%c56_253, %c0_254], %322 {strides = array<i32>} : memref<72x512xbf16, #tpu.memory_space<vmem>>, vector<8x512xbf16>,
    %c495_i32_255 = arith.constant 495 : i32
    %324 = tpu.dynamic_rotate %279 by %c495_i32_255 dim 1 : vector<8x512xf32>, i32 -> vector<8x512xf32>
    %c8_256 = arith.constant 8 : index
    %c0_257 = arith.constant 0 : index
    %325 = vector.load %arg2[%c8_256, %c0_257] : memref<9x512xf32, #tpu.memory_space<vmem>>, vector<1x512xf32>
    %326 = vector.broadcast %325 : vector<1x512xf32> to vector<8x512xf32>
    %327 = arith.mulf %324, %326 : vector<8x512xf32>
    %328 = arith.truncf %327 : vector<8x512xf32> to vector<8x512xbf16>
    %c64_258 = arith.constant 64 : index
    %c0_259 = arith.constant 0 : index
    %329 = vector.load %arg6[%c64_258, %c0_259] : memref<72x512xbf16, #tpu.memory_space<vmem>>, vector<8x512xbf16>
    tpu.vector_store %arg6[%c64_258, %c0_259], %328 {strides = array<i32>} : memref<72x512xbf16, #tpu.memory_space<vmem>>, vector<8x512xbf16>,
    %c0_260 = arith.constant 0 : index
    %c0_261 = arith.constant 0 : index
    %330 = vector.load %arg4[%c0_260, %c0_261] : memref<8x72xbf16, #tpu.memory_space<vmem>>, vector<8x72xbf16>
    %c0_262 = arith.constant 0 : index
    %c0_263 = arith.constant 0 : index
    %331 = vector.load %arg6[%c0_262, %c0_263] : memref<72x512xbf16, #tpu.memory_space<vmem>>, vector<72x512xbf16>
    %cst_264 = arith.constant dense<0.000000e+00> : vector<8x512xf32>
    %332 = tpu.matmul %330, %331, %cst_264 {dimension_numbers = #tpu.dot_dimension_numbers<[1], [0], [0], [1], [0, 0, 1, 1], [], []>} : vector<8x72xbf16>, vector<72x512xbf16>, vector<8x512xf32> -> vector<8x512xf32>
    %333 = arith.addf %332, %53 : vector<8x512xf32>
    %c17_i32_265 = arith.constant 17 : i32
    %334 = tpu.dynamic_rotate %333 by %c17_i32_265 dim 1 : vector<8x512xf32>, i32 -> vector<8x512xf32>
    %c0_266 = arith.constant 0 : index
    %c0_267 = arith.constant 0 : index
    %335 = vector.load %arg2[%c0_266, %c0_267] : memref<9x512xf32, #tpu.memory_space<vmem>>, vector<1x512xf32>
    %336 = vector.broadcast %335 : vector<1x512xf32> to vector<8x512xf32>
    %337 = arith.mulf %334, %336 : vector<8x512xf32>
    %338 = arith.truncf %337 : vector<8x512xf32> to vector<8x512xbf16>
    %c0_268 = arith.constant 0 : index
    %c0_269 = arith.constant 0 : index
    %339 = vector.load %arg6[%c0_268, %c0_269] : memref<72x512xbf16, #tpu.memory_space<vmem>>, vector<8x512xbf16>
    tpu.vector_store %arg6[%c0_268, %c0_269], %338 {strides = array<i32>} : memref<72x512xbf16, #tpu.memory_space<vmem>>, vector<8x512xbf16>,
    %c16_i32_270 = arith.constant 16 : i32
    %340 = tpu.dynamic_rotate %333 by %c16_i32_270 dim 1 : vector<8x512xf32>, i32 -> vector<8x512xf32>
    %c1_271 = arith.constant 1 : index
    %c0_272 = arith.constant 0 : index
    %341 = vector.load %arg2[%c1_271, %c0_272] : memref<9x512xf32, #tpu.memory_space<vmem>>, vector<1x512xf32>
    %342 = vector.broadcast %341 : vector<1x512xf32> to vector<8x512xf32>
    %343 = arith.mulf %340, %342 : vector<8x512xf32>
    %344 = arith.truncf %343 : vector<8x512xf32> to vector<8x512xbf16>
    %c8_273 = arith.constant 8 : index
    %c0_274 = arith.constant 0 : index
    %345 = vector.load %arg6[%c8_273, %c0_274] : memref<72x512xbf16, #tpu.memory_space<vmem>>, vector<8x512xbf16>
    tpu.vector_store %arg6[%c8_273, %c0_274], %344 {strides = array<i32>} : memref<72x512xbf16, #tpu.memory_space<vmem>>, vector<8x512xbf16>,
    %c15_i32_275 = arith.constant 15 : i32
    %346 = tpu.dynamic_rotate %333 by %c15_i32_275 dim 1 : vector<8x512xf32>, i32 -> vector<8x512xf32>
    %c2_276 = arith.constant 2 : index
    %c0_277 = arith.constant 0 : index
    %347 = vector.load %arg2[%c2_276, %c0_277] : memref<9x512xf32, #tpu.memory_space<vmem>>, vector<1x512xf32>
    %348 = vector.broadcast %347 : vector<1x512xf32> to vector<8x512xf32>
    %349 = arith.mulf %346, %348 : vector<8x512xf32>
    %350 = arith.truncf %349 : vector<8x512xf32> to vector<8x512xbf16>
    %c16_278 = arith.constant 16 : index
    %c0_279 = arith.constant 0 : index
    %351 = vector.load %arg6[%c16_278, %c0_279] : memref<72x512xbf16, #tpu.memory_space<vmem>>, vector<8x512xbf16>
    tpu.vector_store %arg6[%c16_278, %c0_279], %350 {strides = array<i32>} : memref<72x512xbf16, #tpu.memory_space<vmem>>, vector<8x512xbf16>,
    %c1_i32_280 = arith.constant 1 : i32
    %352 = tpu.dynamic_rotate %333 by %c1_i32_280 dim 1 : vector<8x512xf32>, i32 -> vector<8x512xf32>
    %c3_281 = arith.constant 3 : index
    %c0_282 = arith.constant 0 : index
    %353 = vector.load %arg2[%c3_281, %c0_282] : memref<9x512xf32, #tpu.memory_space<vmem>>, vector<1x512xf32>
    %354 = vector.broadcast %353 : vector<1x512xf32> to vector<8x512xf32>
    %355 = arith.mulf %352, %354 : vector<8x512xf32>
    %356 = arith.truncf %355 : vector<8x512xf32> to vector<8x512xbf16>
    %c24_283 = arith.constant 24 : index
    %c0_284 = arith.constant 0 : index
    %357 = vector.load %arg6[%c24_283, %c0_284] : memref<72x512xbf16, #tpu.memory_space<vmem>>, vector<8x512xbf16>
    tpu.vector_store %arg6[%c24_283, %c0_284], %356 {strides = array<i32>} : memref<72x512xbf16, #tpu.memory_space<vmem>>, vector<8x512xbf16>,
    %358 = arith.truncf %333 : vector<8x512xf32> to vector<8x512xbf16>
    %c32_285 = arith.constant 32 : index
    %c0_286 = arith.constant 0 : index
    %359 = vector.load %arg6[%c32_285, %c0_286] : memref<72x512xbf16, #tpu.memory_space<vmem>>, vector<8x512xbf16>
    tpu.vector_store %arg6[%c32_285, %c0_286], %358 {strides = array<i32>} : memref<72x512xbf16, #tpu.memory_space<vmem>>, vector<8x512xbf16>,
    %c511_i32_287 = arith.constant 511 : i32
    %360 = tpu.dynamic_rotate %333 by %c511_i32_287 dim 1 : vector<8x512xf32>, i32 -> vector<8x512xf32>
    %c5_288 = arith.constant 5 : index
    %c0_289 = arith.constant 0 : index
    %361 = vector.load %arg2[%c5_288, %c0_289] : memref<9x512xf32, #tpu.memory_space<vmem>>, vector<1x512xf32>
    %362 = vector.broadcast %361 : vector<1x512xf32> to vector<8x512xf32>
    %363 = arith.mulf %360, %362 : vector<8x512xf32>
    %364 = arith.truncf %363 : vector<8x512xf32> to vector<8x512xbf16>
    %c40_290 = arith.constant 40 : index
    %c0_291 = arith.constant 0 : index
    %365 = vector.load %arg6[%c40_290, %c0_291] : memref<72x512xbf16, #tpu.memory_space<vmem>>, vector<8x512xbf16>
    tpu.vector_store %arg6[%c40_290, %c0_291], %364 {strides = array<i32>} : memref<72x512xbf16, #tpu.memory_space<vmem>>, vector<8x512xbf16>,
    %c497_i32_292 = arith.constant 497 : i32
    %366 = tpu.dynamic_rotate %333 by %c497_i32_292 dim 1 : vector<8x512xf32>, i32 -> vector<8x512xf32>
    %c6_293 = arith.constant 6 : index
    %c0_294 = arith.constant 0 : index
    %367 = vector.load %arg2[%c6_293, %c0_294] : memref<9x512xf32, #tpu.memory_space<vmem>>, vector<1x512xf32>
    %368 = vector.broadcast %367 : vector<1x512xf32> to vector<8x512xf32>
    %369 = arith.mulf %366, %368 : vector<8x512xf32>
    %370 = arith.truncf %369 : vector<8x512xf32> to vector<8x512xbf16>
    %c48_295 = arith.constant 48 : index
    %c0_296 = arith.constant 0 : index
    %371 = vector.load %arg6[%c48_295, %c0_296] : memref<72x512xbf16, #tpu.memory_space<vmem>>, vector<8x512xbf16>
    tpu.vector_store %arg6[%c48_295, %c0_296], %370 {strides = array<i32>} : memref<72x512xbf16, #tpu.memory_space<vmem>>, vector<8x512xbf16>,
    %c496_i32_297 = arith.constant 496 : i32
    %372 = tpu.dynamic_rotate %333 by %c496_i32_297 dim 1 : vector<8x512xf32>, i32 -> vector<8x512xf32>
    %c7_298 = arith.constant 7 : index
    %c0_299 = arith.constant 0 : index
    %373 = vector.load %arg2[%c7_298, %c0_299] : memref<9x512xf32, #tpu.memory_space<vmem>>, vector<1x512xf32>
    %374 = vector.broadcast %373 : vector<1x512xf32> to vector<8x512xf32>
    %375 = arith.mulf %372, %374 : vector<8x512xf32>
    %376 = arith.truncf %375 : vector<8x512xf32> to vector<8x512xbf16>
    %c56_300 = arith.constant 56 : index
    %c0_301 = arith.constant 0 : index
    %377 = vector.load %arg6[%c56_300, %c0_301] : memref<72x512xbf16, #tpu.memory_space<vmem>>, vector<8x512xbf16>
    tpu.vector_store %arg6[%c56_300, %c0_301], %376 {strides = array<i32>} : memref<72x512xbf16, #tpu.memory_space<vmem>>, vector<8x512xbf16>,
    %c495_i32_302 = arith.constant 495 : i32
    %378 = tpu.dynamic_rotate %333 by %c495_i32_302 dim 1 : vector<8x512xf32>, i32 -> vector<8x512xf32>
    %c8_303 = arith.constant 8 : index
    %c0_304 = arith.constant 0 : index
    %379 = vector.load %arg2[%c8_303, %c0_304] : memref<9x512xf32, #tpu.memory_space<vmem>>, vector<1x512xf32>
    %380 = vector.broadcast %379 : vector<1x512xf32> to vector<8x512xf32>
    %381 = arith.mulf %378, %380 : vector<8x512xf32>
    %382 = arith.truncf %381 : vector<8x512xf32> to vector<8x512xbf16>
    %c64_305 = arith.constant 64 : index
    %c0_306 = arith.constant 0 : index
    %383 = vector.load %arg6[%c64_305, %c0_306] : memref<72x512xbf16, #tpu.memory_space<vmem>>, vector<8x512xbf16>
    tpu.vector_store %arg6[%c64_305, %c0_306], %382 {strides = array<i32>} : memref<72x512xbf16, #tpu.memory_space<vmem>>, vector<8x512xbf16>,
    %c0_307 = arith.constant 0 : index
    %c0_308 = arith.constant 0 : index
    %384 = vector.load %arg4[%c0_307, %c0_308] : memref<8x72xbf16, #tpu.memory_space<vmem>>, vector<8x72xbf16>
    %c0_309 = arith.constant 0 : index
    %c0_310 = arith.constant 0 : index
    %385 = vector.load %arg6[%c0_309, %c0_310] : memref<72x512xbf16, #tpu.memory_space<vmem>>, vector<72x512xbf16>
    %cst_311 = arith.constant dense<0.000000e+00> : vector<8x512xf32>
    %386 = tpu.matmul %384, %385, %cst_311 {dimension_numbers = #tpu.dot_dimension_numbers<[1], [0], [0], [1], [0, 0, 1, 1], [], []>} : vector<8x72xbf16>, vector<72x512xbf16>, vector<8x512xf32> -> vector<8x512xf32>
    %387 = arith.addf %386, %53 : vector<8x512xf32>
    %cst_312 = arith.constant 0.000000e+00 : f32
    %388 = vector.broadcast %cst_312 : f32 to vector<8x512xf32>
    %389 = arith.maximumf %387, %388 : vector<8x512xf32>
    %c0_313 = arith.constant 0 : index
    %c0_314 = arith.constant 0 : index
    %390 = vector.load %arg5[%c0_313, %c0_314] : memref<8x512xf32, #tpu.memory_space<vmem>>, vector<8x512xf32>
    tpu.vector_store %arg5[%c0_313, %c0_314], %389 {strides = array<i32>} : memref<8x512xf32, #tpu.memory_space<vmem>>, vector<8x512xf32>,
    return
  }
  func.func @transform_0(%arg0: i32) -> (i32, i32) {
    %c0_i32 = arith.constant 0 : i32
    %c0_i32_0 = arith.constant 0 : i32
    %c0_i32_1 = arith.constant 0 : i32
    return %c0_i32, %c0_i32_0 : i32, i32
  }
  func.func @transform_1(%arg0: i32) -> (i32, i32) {
    %c0_i32 = arith.constant 0 : i32
    %c0_i32_0 = arith.constant 0 : i32
    %c0_i32_1 = arith.constant 0 : i32
    return %c0_i32, %c0_i32_0 : i32, i32
  }
  func.func @transform_2(%arg0: i32) -> (i32, i32) {
    %c0_i32 = arith.constant 0 : i32
    %c0_i32_0 = arith.constant 0 : i32
    %c0_i32_1 = arith.constant 0 : i32
    return %c0_i32, %c0_i32_0 : i32, i32
  }
  func.func @transform_3(%arg0: i32) -> (i32, i32) {
    %c0_i32 = arith.constant 0 : i32
    %c0_i32_0 = arith.constant 0 : i32
    %c0_i32_1 = arith.constant 0 : i32
    return %c0_i32, %c0_i32_0 : i32, i32
  }
  func.func @transform_4(%arg0: i32) -> (i32, i32) {
    %c0_i32 = arith.constant 0 : i32
    %c0_i32_0 = arith.constant 0 : i32
    %c0_i32_1 = arith.constant 0 : i32
    return %c0_i32, %c0_i32_0 : i32, i32
  }
}

</mosaic_0001>

<llo_original>
// kernel: recurrent_block.1
$region0: #{recurrent_block.1}
  #allocation0 [shape = 'u32[]', space=smem, size = 0x4, offset = 0x4, fixed_abs, tag = 'smem constant byte address 0x4 - core index']
  #allocation1 [shape = 'u32[144,128]{1,0:T(1,128)}', space=vmem, size = 0x12000, scoped, tag = 'internal scratch']
  #allocation2 [shape = 'bf16[72,512]{1,0:T(8,128)(2,1)}', space=vmem, size = 0x12000, scoped, tag = 'scratch operand']
  %s0 = inlined_call_operand.vmem [shape: f32[8,512], index: 0, kind: input, shape index: {}]
  %s1 = inlined_call_operand.vmem [shape: f32[9,512], index: 1, kind: input, shape index: {}]
  %s2 = inlined_call_operand.vmem [shape: bf16[8,72], index: 2, kind: input, shape index: {}]
  %s3 = inlined_call_operand.vmem [shape: bf16[8,72], index: 3, kind: input, shape index: {}]
  %s4 = inlined_call_operand.vmem [shape: f32[8,512], index: 4, kind: output, shape index: {}]
  %s5 = sld [smem:[#allocation0]]
  $region26: #{recurrent_block.1} parent=0
    _
  %s7 = ssub.s32 1, %s5
  %s8 = scalar_select 0, %s7, %s5
  // Predicated region
  $region2: #{recurrent_block.1} parent=0 // pred_check
    _
  $region3: #{recurrent_block.1} parent=0 // pred_check_branch
    %10 = sbr.rel (0) target = $region5
  $region4: #{recurrent_block.1} parent=0 // pred_region
    _
  $region5: #{recurrent_block.1} parent=0 // pred_fallthru
    _
  // Predicated region
  $region6: #{recurrent_block.1} parent=0 // pred_check
    _
  $region7: #{recurrent_block.1} parent=0 // pred_check_branch
    %12 = sbr.rel (0) target = $region9
  $region8: #{recurrent_block.1} parent=0 // pred_region
    _
  $region9: #{recurrent_block.1} parent=0 // pred_fallthru
    _
  // Predicated region
  $region10: #{recurrent_block.1} parent=0 // pred_check
    _
  $region11: #{recurrent_block.1} parent=0 // pred_check_branch
    %14 = sbr.rel (0) target = $region13
  $region12: #{recurrent_block.1} parent=0 // pred_region
    _
  $region13: #{recurrent_block.1} parent=0 // pred_fallthru
    _
  // Predicated region
  $region14: #{recurrent_block.1} parent=0 // pred_check
    _
  $region15: #{recurrent_block.1} parent=0 // pred_check_branch
    %16 = sbr.rel (0) target = $region17
  $region16: #{recurrent_block.1} parent=0 // pred_region
    _
  $region17: #{recurrent_block.1} parent=0 // pred_fallthru
    _
  %v18 = vld [vmem:[%s0] sm:$0xff]
  %v19 = vld [vmem:[%s0 + $0x8] sm:$0xff]
  %v20 = vld [vmem:[%s0 + $0x10] sm:$0xff]
  %v21 = vld [vmem:[%s0 + $0x18] sm:$0xff]
  %22 = vrot.lane.b32.xlu0 %v18, 17
  %v23 = vpop.permute.xlu0 %22
  %24 = vrot.lane.b32.xlu0 %v19, 17
  %v25 = vpop.permute.xlu0 %24
  %26 = vrot.lane.b32.xlu0 %v20, 17
  %v27 = vpop.permute.xlu0 %26
  %28 = vrot.lane.b32.xlu0 %v21, 17
  %v29 = vpop.permute.xlu0 %28
  %v30 = vlaneseq
  %v31 = vand.u32 %v30, 127
  %vm32 = vcmp.lt.s32.totalorder %v31, 17
  %v33 = vsel %vm32, %v27, %v29
  %v34 = vsel %vm32, %v25, %v27
  %v35 = vsel %vm32, %v23, %v25
  %v36 = vsel %vm32, %v29, %v23
  %v37 = vld [vmem:[%s1] ss:$8 sm:$0xf]
  %v39 = vlaneseq
  %v40 = vshrl.u32 %v39, 7
  %v41 = vsub.s32 0, %v40
  %v42 = vrot.slane %v37, %v41
  %v43 = vlaneseq
  %v44 = vshrl.u32 %v43, 7
  %v45 = vsub.s32 1, %v44
  %v46 = vrot.slane %v37, %v45
  %v47 = vlaneseq
  %v48 = vshrl.u32 %v47, 7
  %v49 = vsub.s32 2, %v48
  %v50 = vrot.slane %v37, %v49
  %v51 = vlaneseq
  %v52 = vshrl.u32 %v51, 7
  %v53 = vsub.s32 3, %v52
  %v54 = vrot.slane %v37, %v53
  %v59 = vmul.f32 %v36, %v42
  %v60 = vmul.f32 %v35, %v46
  %v61 = vmul.f32 %v34, %v50
  %v62 = vmul.f32 %v33, %v54
  %v63 = vpack.c.bf16 %v59, %v59
  %v64 = vpack.c.bf16 %v60, %v60
  %v65 = vpack.c.bf16 %v61, %v61
  %v66 = vpack.c.bf16 %v62, %v62
  %v71 = vunpack.c.l.b16 %v63
  %v72 = vunpack.c.l.b16 %v64
  %v73 = vunpack.c.l.b16 %v65
  %v74 = vunpack.c.l.b16 %v66
  %v75 = vpack.c.b16 %v72, %v71
  %v76 = vpack.c.b16 %v74, %v73
  %79 = vst [vmem:[#allocation2] sm:$0xff] %v75
  %80 = vst [vmem:[#allocation2 + $0x8] sm:$0xff] %v76
  %81 = vrot.lane.b32.xlu0 %v18, 16
  %v82 = vpop.permute.xlu0 %81
  %83 = vrot.lane.b32.xlu0 %v19, 16
  %v84 = vpop.permute.xlu0 %83
  %85 = vrot.lane.b32.xlu0 %v20, 16
  %v86 = vpop.permute.xlu0 %85
  %87 = vrot.lane.b32.xlu0 %v21, 16
  %v88 = vpop.permute.xlu0 %87
  %vm89 = vcmp.lt.s32.totalorder %v31, 16
  %v90 = vsel %vm89, %v86, %v88
  %v91 = vsel %vm89, %v84, %v86
  %v92 = vsel %vm89, %v82, %v84
  %v93 = vsel %vm89, %v88, %v82
  %s94 = scalar_lea.vmem %s1, 1
  %v95 = vld [vmem:[%s94] ss:$8 sm:$0xf]
  %v97 = vlaneseq
  %v98 = vshrl.u32 %v97, 7
  %v99 = vsub.s32 0, %v98
  %v100 = vrot.slane %v95, %v99
  %v101 = vlaneseq
  %v102 = vshrl.u32 %v101, 7
  %v103 = vsub.s32 1, %v102
  %v104 = vrot.slane %v95, %v103
  %v105 = vlaneseq
  %v106 = vshrl.u32 %v105, 7
  %v107 = vsub.s32 2, %v106
  %v108 = vrot.slane %v95, %v107
  %v109 = vlaneseq
  %v110 = vshrl.u32 %v109, 7
  %v111 = vsub.s32 3, %v110
  %v112 = vrot.slane %v95, %v111
  %v117 = vmul.f32 %v93, %v100
  %v118 = vmul.f32 %v92, %v104
  %v119 = vmul.f32 %v91, %v108
  %v120 = vmul.f32 %v90, %v112
  %v121 = vpack.c.bf16 %v117, %v117
  %v122 = vpack.c.bf16 %v118, %v118
  %v123 = vpack.c.bf16 %v119, %v119
  %v124 = vpack.c.bf16 %v120, %v120
  %v129 = vunpack.c.l.b16 %v121
  %v130 = vunpack.c.l.b16 %v122
  %v131 = vunpack.c.l.b16 %v123
  %v132 = vunpack.c.l.b16 %v124
  %v133 = vpack.c.b16 %v130, %v129
  %v134 = vpack.c.b16 %v132, %v131
  %137 = vst [vmem:[#allocation2 + $0x10] sm:$0xff] %v133
  %138 = vst [vmem:[#allocation2 + $0x18] sm:$0xff] %v134
  %139 = vrot.lane.b32.xlu0 %v18, 15
  %v140 = vpop.permute.xlu0 %139
  %141 = vrot.lane.b32.xlu0 %v19, 15
  %v142 = vpop.permute.xlu0 %141
  %143 = vrot.lane.b32.xlu0 %v20, 15
  %v144 = vpop.permute.xlu0 %143
  %145 = vrot.lane.b32.xlu0 %v21, 15
  %v146 = vpop.permute.xlu0 %145
  %vm147 = vcmp.lt.s32.totalorder %v31, 15
  %v148 = vsel %vm147, %v144, %v146
  %v149 = vsel %vm147, %v142, %v144
  %v150 = vsel %vm147, %v140, %v142
  %v151 = vsel %vm147, %v146, %v140
  %s152 = scalar_lea.vmem %s1, 2
  %v153 = vld [vmem:[%s152] ss:$8 sm:$0xf]
  %v155 = vlaneseq
  %v156 = vshrl.u32 %v155, 7
  %v157 = vsub.s32 0, %v156
  %v158 = vrot.slane %v153, %v157
  %v159 = vlaneseq
  %v160 = vshrl.u32 %v159, 7
  %v161 = vsub.s32 1, %v160
  %v162 = vrot.slane %v153, %v161
  %v163 = vlaneseq
  %v164 = vshrl.u32 %v163, 7
  %v165 = vsub.s32 2, %v164
  %v166 = vrot.slane %v153, %v165
  %v167 = vlaneseq
  %v168 = vshrl.u32 %v167, 7
  %v169 = vsub.s32 3, %v168
  %v170 = vrot.slane %v153, %v169
  %v175 = vmul.f32 %v151, %v158
  %v176 = vmul.f32 %v150, %v162
  %v177 = vmul.f32 %v149, %v166
  %v178 = vmul.f32 %v148, %v170
  %v179 = vpack.c.bf16 %v175, %v175
  %v180 = vpack.c.bf16 %v176, %v176
  %v181 = vpack.c.bf16 %v177, %v177
  %v182 = vpack.c.bf16 %v178, %v178
  %v187 = vunpack.c.l.b16 %v179
  %v188 = vunpack.c.l.b16 %v180
  %v189 = vunpack.c.l.b16 %v181
  %v190 = vunpack.c.l.b16 %v182
  %v191 = vpack.c.b16 %v188, %v187
  %v192 = vpack.c.b16 %v190, %v189
  %195 = vst [vmem:[#allocation2 + $0x20] sm:$0xff] %v191
  %196 = vst [vmem:[#allocation2 + $0x28] sm:$0xff] %v192
  %197 = vrot.lane.b32.xlu0 %v18, 1
  %v198 = vpop.permute.xlu0 %197
  %199 = vrot.lane.b32.xlu0 %v19, 1
  %v200 = vpop.permute.xlu0 %199
  %201 = vrot.lane.b32.xlu0 %v20, 1
  %v202 = vpop.permute.xlu0 %201
  %203 = vrot.lane.b32.xlu0 %v21, 1
  %v204 = vpop.permute.xlu0 %203
  %vm205 = vcmp.lt.s32.totalorder %v31, 1
  %v206 = vsel %vm205, %v202, %v204
  %v207 = vsel %vm205, %v200, %v202
  %v208 = vsel %vm205, %v198, %v200
  %v209 = vsel %vm205, %v204, %v198
  %s210 = scalar_lea.vmem %s1, 3
  %v211 = vld [vmem:[%s210] ss:$8 sm:$0xf]
  %v213 = vlaneseq
  %v214 = vshrl.u32 %v213, 7
  %v215 = vsub.s32 0, %v214
  %v216 = vrot.slane %v211, %v215
  %v217 = vlaneseq
  %v218 = vshrl.u32 %v217, 7
  %v219 = vsub.s32 1, %v218
  %v220 = vrot.slane %v211, %v219
  %v221 = vlaneseq
  %v222 = vshrl.u32 %v221, 7
  %v223 = vsub.s32 2, %v222
  %v224 = vrot.slane %v211, %v223
  %v225 = vlaneseq
  %v226 = vshrl.u32 %v225, 7
  %v227 = vsub.s32 3, %v226
  %v228 = vrot.slane %v211, %v227
  %v233 = vmul.f32 %v209, %v216
  %v234 = vmul.f32 %v208, %v220
  %v235 = vmul.f32 %v207, %v224
  %v236 = vmul.f32 %v206, %v228
  %v237 = vpack.c.bf16 %v233, %v233
  %v238 = vpack.c.bf16 %v234, %v234
  %v239 = vpack.c.bf16 %v235, %v235
  %v240 = vpack.c.bf16 %v236, %v236
  %v245 = vunpack.c.l.b16 %v237
  %v246 = vunpack.c.l.b16 %v238
  %v247 = vunpack.c.l.b16 %v239
  %v248 = vunpack.c.l.b16 %v240
  %v249 = vpack.c.b16 %v246, %v245
  %v250 = vpack.c.b16 %v248, %v247
  %253 = vst [vmem:[#allocation2 + $0x30] sm:$0xff] %v249
  %254 = vst [vmem:[#allocation2 + $0x38] sm:$0xff] %v250
  %v255 = vpack.c.bf16 %v18, %v18
  %v256 = vpack.c.bf16 %v19, %v19
  %v257 = vpack.c.bf16 %v20, %v20
  %v258 = vpack.c.bf16 %v21, %v21
  %v263 = vunpack.c.l.b16 %v255
  %v264 = vunpack.c.l.b16 %v256
  %v265 = vunpack.c.l.b16 %v257
  %v266 = vunpack.c.l.b16 %v258
  %v267 = vpack.c.b16 %v264, %v263
  %v268 = vpack.c.b16 %v266, %v265
  %271 = vst [vmem:[#allocation2 + $0x40] sm:$0xff] %v267
  %272 = vst [vmem:[#allocation2 + $0x48] sm:$0xff] %v268
  %273 = vrot.lane.b32.xlu0 %v18, 127
  %v274 = vpop.permute.xlu0 %273
  %275 = vrot.lane.b32.xlu0 %v19, 127
  %v276 = vpop.permute.xlu0 %275
  %277 = vrot.lane.b32.xlu0 %v20, 127
  %v278 = vpop.permute.xlu0 %277
  %279 = vrot.lane.b32.xlu0 %v21, 127
  %v280 = vpop.permute.xlu0 %279
  %vm281 = vcmp.lt.s32.totalorder %v31, 127
  %v282 = vsel %vm281, %v278, %v280
  %v283 = vsel %vm281, %v276, %v278
  %v284 = vsel %vm281, %v274, %v276
  %v285 = vsel %vm281, %v280, %v274
  %s286 = scalar_lea.vmem %s1, 5
  %v287 = vld [vmem:[%s286] ss:$8 sm:$0xf]
  %v289 = vlaneseq
  %v290 = vshrl.u32 %v289, 7
  %v291 = vsub.s32 0, %v290
  %v292 = vrot.slane %v287, %v291
  %v293 = vlaneseq
  %v294 = vshrl.u32 %v293, 7
  %v295 = vsub.s32 1, %v294
  %v296 = vrot.slane %v287, %v295
  %v297 = vlaneseq
  %v298 = vshrl.u32 %v297, 7
  %v299 = vsub.s32 2, %v298
  %v300 = vrot.slane %v287, %v299
  %v301 = vlaneseq
  %v302 = vshrl.u32 %v301, 7
  %v303 = vsub.s32 3, %v302
  %v304 = vrot.slane %v287, %v303
  %v309 = vmul.f32 %v284, %v292
  %v310 = vmul.f32 %v283, %v296
  %v311 = vmul.f32 %v282, %v300
  %v312 = vmul.f32 %v285, %v304
  %v313 = vpack.c.bf16 %v309, %v309
  %v314 = vpack.c.bf16 %v310, %v310
  %v315 = vpack.c.bf16 %v311, %v311
  %v316 = vpack.c.bf16 %v312, %v312
  %v321 = vunpack.c.l.b16 %v313
  %v322 = vunpack.c.l.b16 %v314
  %v323 = vunpack.c.l.b16 %v315
  %v324 = vunpack.c.l.b16 %v316
  %v325 = vpack.c.b16 %v322, %v321
  %v326 = vpack.c.b16 %v324, %v323
  %329 = vst [vmem:[#allocation2 + $0x50] sm:$0xff] %v325
  %330 = vst [vmem:[#allocation2 + $0x58] sm:$0xff] %v326
  %331 = vrot.lane.b32.xlu0 %v18, 113
  %v332 = vpop.permute.xlu0 %331
  %333 = vrot.lane.b32.xlu0 %v19, 113
  %v334 = vpop.permute.xlu0 %333
  %335 = vrot.lane.b32.xlu0 %v20, 113
  %v336 = vpop.permute.xlu0 %335
  %337 = vrot.lane.b32.xlu0 %v21, 113
  %v338 = vpop.permute.xlu0 %337
  %vm339 = vcmp.lt.s32.totalorder %v31, 113
  %v340 = vsel %vm339, %v336, %v338
  %v341 = vsel %vm339, %v334, %v336
  %v342 = vsel %vm339, %v332, %v334
  %v343 = vsel %vm339, %v338, %v332
  %s344 = scalar_lea.vmem %s1, 6
  %v345 = vld [vmem:[%s344] ss:$8 sm:$0xf]
  %v347 = vlaneseq
  %v348 = vshrl.u32 %v347, 7
  %v349 = vsub.s32 0, %v348
  %v350 = vrot.slane %v345, %v349
  %v351 = vlaneseq
  %v352 = vshrl.u32 %v351, 7
  %v353 = vsub.s32 1, %v352
  %v354 = vrot.slane %v345, %v353
  %v355 = vlaneseq
  %v356 = vshrl.u32 %v355, 7
  %v357 = vsub.s32 2, %v356
  %v358 = vrot.slane %v345, %v357
  %v359 = vlaneseq
  %v360 = vshrl.u32 %v359, 7
  %v361 = vsub.s32 3, %v360
  %v362 = vrot.slane %v345, %v361
  %v367 = vmul.f32 %v342, %v350
  %v368 = vmul.f32 %v341, %v354
  %v369 = vmul.f32 %v340, %v358
  %v370 = vmul.f32 %v343, %v362
  %v371 = vpack.c.bf16 %v367, %v367
  %v372 = vpack.c.bf16 %v368, %v368
  %v373 = vpack.c.bf16 %v369, %v369
  %v374 = vpack.c.bf16 %v370, %v370
  %v379 = vunpack.c.l.b16 %v371
  %v380 = vunpack.c.l.b16 %v372
  %v381 = vunpack.c.l.b16 %v373
  %v382 = vunpack.c.l.b16 %v374
  %v383 = vpack.c.b16 %v380, %v379
  %v384 = vpack.c.b16 %v382, %v381
  %387 = vst [vmem:[#allocation2 + $0x60] sm:$0xff] %v383
  %388 = vst [vmem:[#allocation2 + $0x68] sm:$0xff] %v384
  %389 = vrot.lane.b32.xlu0 %v18, 112
  %v390 = vpop.permute.xlu0 %389
  %391 = vrot.lane.b32.xlu0 %v19, 112
  %v392 = vpop.permute.xlu0 %391
  %393 = vrot.lane.b32.xlu0 %v20, 112
  %v394 = vpop.permute.xlu0 %393
  %395 = vrot.lane.b32.xlu0 %v21, 112
  %v396 = vpop.permute.xlu0 %395
  %vm397 = vcmp.lt.s32.totalorder %v31, 112
  %v398 = vsel %vm397, %v394, %v396
  %v399 = vsel %vm397, %v392, %v394
  %v400 = vsel %vm397, %v390, %v392
  %v401 = vsel %vm397, %v396, %v390
  %s402 = scalar_lea.vmem %s1, 7
  %v403 = vld [vmem:[%s402] ss:$8 sm:$0xf]
  %v405 = vlaneseq
  %v406 = vshrl.u32 %v405, 7
  %v407 = vsub.s32 0, %v406
  %v408 = vrot.slane %v403, %v407
  %v409 = vlaneseq
  %v410 = vshrl.u32 %v409, 7
  %v411 = vsub.s32 1, %v410
  %v412 = vrot.slane %v403, %v411
  %v413 = vlaneseq
  %v414 = vshrl.u32 %v413, 7
  %v415 = vsub.s32 2, %v414
  %v416 = vrot.slane %v403, %v415
  %v417 = vlaneseq
  %v418 = vshrl.u32 %v417, 7
  %v419 = vsub.s32 3, %v418
  %v420 = vrot.slane %v403, %v419
  %v425 = vmul.f32 %v400, %v408
  %v426 = vmul.f32 %v399, %v412
  %v427 = vmul.f32 %v398, %v416
  %v428 = vmul.f32 %v401, %v420
  %v429 = vpack.c.bf16 %v425, %v425
  %v430 = vpack.c.bf16 %v426, %v426
  %v431 = vpack.c.bf16 %v427, %v427
  %v432 = vpack.c.bf16 %v428, %v428
  %v437 = vunpack.c.l.b16 %v429
  %v438 = vunpack.c.l.b16 %v430
  %v439 = vunpack.c.l.b16 %v431
  %v440 = vunpack.c.l.b16 %v432
  %v441 = vpack.c.b16 %v438, %v437
  %v442 = vpack.c.b16 %v440, %v439
  %445 = vst [vmem:[#allocation2 + $0x70] sm:$0xff] %v441
  %446 = vst [vmem:[#allocation2 + $0x78] sm:$0xff] %v442
  %447 = vrot.lane.b32.xlu0 %v18, 111
  %v448 = vpop.permute.xlu0 %447
  %449 = vrot.lane.b32.xlu0 %v19, 111
  %v450 = vpop.permute.xlu0 %449
  %451 = vrot.lane.b32.xlu0 %v20, 111
  %v452 = vpop.permute.xlu0 %451
  %453 = vrot.lane.b32.xlu0 %v21, 111
  %v454 = vpop.permute.xlu0 %453
  %vm455 = vcmp.lt.s32.totalorder %v31, 111
  %v456 = vsel %vm455, %v452, %v454
  %v457 = vsel %vm455, %v450, %v452
  %v458 = vsel %vm455, %v448, %v450
  %v459 = vsel %vm455, %v454, %v448
  %s460 = scalar_lea.vmem %s1, 32
  %v461 = vld [vmem:[%s460] ss:$8 sm:$0xf]
  %v463 = vlaneseq
  %v464 = vshrl.u32 %v463, 7
  %v465 = vsub.s32 0, %v464
  %v466 = vrot.slane %v461, %v465
  %v467 = vlaneseq
  %v468 = vshrl.u32 %v467, 7
  %v469 = vsub.s32 1, %v468
  %v470 = vrot.slane %v461, %v469
  %v471 = vlaneseq
  %v472 = vshrl.u32 %v471, 7
  %v473 = vsub.s32 2, %v472
  %v474 = vrot.slane %v461, %v473
  %v475 = vlaneseq
  %v476 = vshrl.u32 %v475, 7
  %v477 = vsub.s32 3, %v476
  %v478 = vrot.slane %v461, %v477
  %v483 = vmul.f32 %v458, %v466
  %v484 = vmul.f32 %v457, %v470
  %v485 = vmul.f32 %v456, %v474
  %v486 = vmul.f32 %v459, %v478
  %v487 = vpack.c.bf16 %v483, %v483
  %v488 = vpack.c.bf16 %v484, %v484
  %v489 = vpack.c.bf16 %v485, %v485
  %v490 = vpack.c.bf16 %v486, %v486
  %v495 = vunpack.c.l.b16 %v487
  %v496 = vunpack.c.l.b16 %v488
  %v497 = vunpack.c.l.b16 %v489
  %v498 = vunpack.c.l.b16 %v490
  %v499 = vpack.c.b16 %v496, %v495
  %v500 = vpack.c.b16 %v498, %v497
  %503 = vst [vmem:[#allocation2 + $0x80] sm:$0xff] %v499
  %504 = vst [vmem:[#allocation2 + $0x88] sm:$0xff] %v500
  %v505 = vld [vmem:[%s2] sm:$0xf]
  %v506 = vld [vmem:[#allocation2] sm:$0xff]
  %v507 = vld [vmem:[#allocation2 + $0x8] sm:$0xff]
  %v508 = vld [vmem:[#allocation2 + $0x10] sm:$0xff]
  %v509 = vld [vmem:[#allocation2 + $0x18] sm:$0xff]
  %v510 = vld [vmem:[#allocation2 + $0x20] sm:$0xff]
  %v511 = vld [vmem:[#allocation2 + $0x28] sm:$0xff]
  %v512 = vld [vmem:[#allocation2 + $0x30] sm:$0xff]
  %v513 = vld [vmem:[#allocation2 + $0x38] sm:$0xff]
  %v514 = vld [vmem:[#allocation2 + $0x40] sm:$0xff]
  %v515 = vld [vmem:[#allocation2 + $0x48] sm:$0xff]
  %v516 = vld [vmem:[#allocation2 + $0x50] sm:$0xff]
  %v517 = vld [vmem:[#allocation2 + $0x58] sm:$0xff]
  %v518 = vld [vmem:[#allocation2 + $0x60] sm:$0xff]
  %v519 = vld [vmem:[#allocation2 + $0x68] sm:$0xff]
  %v520 = vld [vmem:[#allocation2 + $0x70] sm:$0xff]
  %v521 = vld [vmem:[#allocation2 + $0x78] sm:$0xff]
  %v522 = vld [vmem:[#allocation2 + $0x80] sm:$0xff]
  %v523 = vld [vmem:[#allocation2 + $0x88] sm:$0xff]
  %v542 = vunpack.c.l.b16 %v506
  %v543 = vunpack.c.h.b16 %v506
  %v544 = vunpack.c.l.b16 %v507
  %v545 = vunpack.c.h.b16 %v507
  %v546 = vunpack.c.l.b16 %v508
  %v547 = vunpack.c.h.b16 %v508
  %v548 = vunpack.c.l.b16 %v509
  %v549 = vunpack.c.h.b16 %v509
  %v550 = vunpack.c.l.b16 %v510
  %v551 = vunpack.c.h.b16 %v510
  %v552 = vunpack.c.l.b16 %v511
  %v553 = vunpack.c.h.b16 %v511
  %v554 = vunpack.c.l.b16 %v512
  %v555 = vunpack.c.h.b16 %v512
  %v556 = vunpack.c.l.b16 %v513
  %v557 = vunpack.c.h.b16 %v513
  %v558 = vunpack.c.l.b16 %v514
  %v559 = vunpack.c.h.b16 %v514
  %v560 = vunpack.c.l.b16 %v515
  %v561 = vunpack.c.h.b16 %v515
  %v562 = vunpack.c.l.b16 %v516
  %v563 = vunpack.c.h.b16 %v516
  %v564 = vunpack.c.l.b16 %v517
  %v565 = vunpack.c.h.b16 %v517
  %v566 = vunpack.c.l.b16 %v518
  %v567 = vunpack.c.h.b16 %v518
  %v568 = vunpack.c.l.b16 %v519
  %v569 = vunpack.c.h.b16 %v519
  %v570 = vunpack.c.l.b16 %v520
  %v571 = vunpack.c.h.b16 %v520
  %v572 = vunpack.c.l.b16 %v521
  %v573 = vunpack.c.h.b16 %v521
  %v574 = vunpack.c.l.b16 %v522
  %v575 = vunpack.c.h.b16 %v522
  %v576 = vunpack.c.l.b16 %v523
  %v577 = vunpack.c.h.b16 %v523
  %v578 = vpack.c.b16 %v546, %v542
  %v579 = vpack.c.b16 %v547, %v543
  %v580 = vpack.c.b16 %v548, %v544
  %v581 = vpack.c.b16 %v549, %v545
  %v582 = vpack.c.b16 %v554, %v550
  %v583 = vpack.c.b16 %v555, %v551
  %v584 = vpack.c.b16 %v556, %v552
  %v585 = vpack.c.b16 %v557, %v553
  %v586 = vpack.c.b16 %v562, %v558
  %v587 = vpack.c.b16 %v563, %v559
  %v588 = vpack.c.b16 %v564, %v560
  %v589 = vpack.c.b16 %v565, %v561
  %v590 = vpack.c.b16 %v570, %v566
  %v591 = vpack.c.b16 %v571, %v567
  %v592 = vpack.c.b16 %v572, %v568
  %v593 = vpack.c.b16 %v573, %v569
  %v594 = vpack.c.b16 %v574, %v574
  %v595 = vpack.c.b16 %v575, %v575
  %v596 = vpack.c.b16 %v576, %v576
  %v597 = vpack.c.b16 %v577, %v577
  %vm614 = vcmask 588800
  %v616 = vsel %vm614, %v505, 0
  %vm618 = vcmask 1043456
  %v620 = vsel %vm618, %v594, 0
  %v623 = vsel %vm618, %v595, 0
  %v626 = vsel %vm618, %v596, 0
  %v629 = vsel %vm618, %v597, 0
  %631 = vmatprep.subr.bf16.mxu0 %v579
  %632 = vmatpush1.bf16.msra.mxu0 %v578
  %633 = vmatprep.subr.bf16.mxu0 %v583
  %634 = vmatpush1.bf16.msra.mxu0 %v582
  %635 = vmatprep.subr.bf16.mxu0 %v587
  %636 = vmatpush1.bf16.msra.mxu0 %v586
  %637 = vmatprep.subr.bf16.mxu0 %v591
  %638 = vmatpush1.bf16.msra.mxu0 %v590
  %639 = vmatprep.subr.bf16.mxu0 %v623
  %640 = vmatpush1.bf16.msra.mxu0 %v620
  %641 = vmatprep.subr.bf16.mxu0 0
  %642 = vmatpush1.bf16.msra.mxu0 0
  %643 = vmatprep.subr.bf16.mxu0 0
  %644 = vmatpush1.bf16.msra.mxu0 0
  %645 = vmatprep.subr.bf16.mxu0 0
  %646 = vmatpush1.bf16.msra.mxu0 0
  %647 = vmatprep.subr.bf16.mxu0 0
  %648 = vmatpush1.bf16.msra.mxu0 0
  %649 = vmatprep.subr.bf16.mxu0 0
  %650 = vmatpush1.bf16.msra.mxu0 0
  %651 = vmatprep.subr.bf16.mxu0 0
  %652 = vmatpush1.bf16.msra.mxu0 0
  %653 = vmatprep.subr.bf16.mxu0 0
  %654 = vmatpush1.bf16.msra.mxu0 0
  %655 = vmatprep.subr.bf16.mxu0 0
  %656 = vmatpush1.bf16.msra.mxu0 0
  %657 = vmatprep.subr.bf16.mxu0 0
  %658 = vmatpush1.bf16.msra.mxu0 0
  %659 = vmatprep.subr.bf16.mxu0 0
  %660 = vmatpush1.bf16.msra.mxu0 0
  %661 = vmatprep.subr.bf16.mxu0 0
  %662 = vmatpush1.bf16.msra.mxu0 0
  %663 = vmatprep.mubr.bf16.mxu0 0
  %664 = vmatmul.mubr.bf16.gmra.mrb[0].mxu0 %v616
  %v665 = vpop.f32.mrb[0].mxu0
  %v666 = vadd.f32 0.0, %v665
  %v667 = vpop.f32.mrb[0].mxu0
  %v668 = vadd.f32 0.0, %v667
  %v669 = vpop.f32.mrb[0].mxu0
  %v670 = vpop.f32.mrb[0].mxu0
  %671 = vdwg.mxu0
  %672 = vmatprep.subr.bf16.mxu0 %v581
  %673 = vmatpush1.bf16.msra.mxu0 %v580
  %674 = vmatprep.subr.bf16.mxu0 %v585
  %675 = vmatpush1.bf16.msra.mxu0 %v584
  %676 = vmatprep.subr.bf16.mxu0 %v589
  %677 = vmatpush1.bf16.msra.mxu0 %v588
  %678 = vmatprep.subr.bf16.mxu0 %v593
  %679 = vmatpush1.bf16.msra.mxu0 %v592
  %680 = vmatprep.subr.bf16.mxu0 %v629
  %681 = vmatpush1.bf16.msra.mxu0 %v626
  %682 = vmatprep.subr.bf16.mxu0 0
  %683 = vmatpush1.bf16.msra.mxu0 0
  %684 = vmatprep.subr.bf16.mxu0 0
  %685 = vmatpush1.bf16.msra.mxu0 0
  %686 = vmatprep.subr.bf16.mxu0 0
  %687 = vmatpush1.bf16.msra.mxu0 0
  %688 = vmatprep.subr.bf16.mxu0 0
  %689 = vmatpush1.bf16.msra.mxu0 0
  %690 = vmatprep.subr.bf16.mxu0 0
  %691 = vmatpush1.bf16.msra.mxu0 0
  %692 = vmatprep.subr.bf16.mxu0 0
  %693 = vmatpush1.bf16.msra.mxu0 0
  %694 = vmatprep.subr.bf16.mxu0 0
  %695 = vmatpush1.bf16.msra.mxu0 0
  %696 = vmatprep.subr.bf16.mxu0 0
  %697 = vmatpush1.bf16.msra.mxu0 0
  %698 = vmatprep.subr.bf16.mxu0 0
  %699 = vmatpush1.bf16.msra.mxu0 0
  %700 = vmatprep.subr.bf16.mxu0 0
  %701 = vmatpush1.bf16.msra.mxu0 0
  %702 = vmatprep.subr.bf16.mxu0 0
  %703 = vmatpush1.bf16.msra.mxu0 0
  %704 = vmatprep.mubr.bf16.mxu0 0
  %705 = vmatmul.mubr.bf16.gmra.mrb[0].mxu0 %v616
  %v706 = vpop.f32.mrb[0].mxu0
  %v707 = vadd.f32 0.0, %v706
  %v708 = vpop.f32.mrb[0].mxu0
  %v709 = vadd.f32 0.0, %v708
  %v710 = vpop.f32.mrb[0].mxu0
  %v711 = vpop.f32.mrb[0].mxu0
  %712 = vdwg.mxu0
  %v713 = vmax.f32 %v666, 0.0
  %v714 = vmax.f32 %v668, 0.0
  %v715 = vmax.f32 %v707, 0.0
  %v716 = vmax.f32 %v709, 0.0
  %717 = vrot.lane.b32.xlu0 %v713, 17
  %v718 = vpop.permute.xlu0 %717
  %719 = vrot.lane.b32.xlu0 %v714, 17
  %v720 = vpop.permute.xlu0 %719
  %721 = vrot.lane.b32.xlu0 %v715, 17
  %v722 = vpop.permute.xlu0 %721
  %723 = vrot.lane.b32.xlu0 %v716, 17
  %v724 = vpop.permute.xlu0 %723
  %v725 = vsel %vm32, %v722, %v724
  %v726 = vsel %vm32, %v720, %v722
  %v727 = vsel %vm32, %v718, %v720
  %v728 = vsel %vm32, %v724, %v718
  %v729 = vld [vmem:[%s1] ss:$8 sm:$0xf]
  %v731 = vlaneseq
  %v732 = vshrl.u32 %v731, 7
  %v733 = vsub.s32 0, %v732
  %v734 = vrot.slane %v729, %v733
  %v735 = vlaneseq
  %v736 = vshrl.u32 %v735, 7
  %v737 = vsub.s32 1, %v736
  %v738 = vrot.slane %v729, %v737
  %v739 = vlaneseq
  %v740 = vshrl.u32 %v739, 7
  %v741 = vsub.s32 2, %v740
  %v742 = vrot.slane %v729, %v741
  %v743 = vlaneseq
  %v744 = vshrl.u32 %v743, 7
  %v745 = vsub.s32 3, %v744
  %v746 = vrot.slane %v729, %v745
  %v751 = vmul.f32 %v728, %v734
  %v752 = vmul.f32 %v727, %v738
  %v753 = vmul.f32 %v726, %v742
  %v754 = vmul.f32 %v725, %v746
  %v755 = vpack.c.bf16 %v751, %v751
  %v756 = vpack.c.bf16 %v752, %v752
  %v757 = vpack.c.bf16 %v753, %v753
  %v758 = vpack.c.bf16 %v754, %v754
  %v763 = vunpack.c.l.b16 %v755
  %v764 = vunpack.c.l.b16 %v756
  %v765 = vunpack.c.l.b16 %v757
  %v766 = vunpack.c.l.b16 %v758
  %v767 = vpack.c.b16 %v764, %v763
  %v768 = vpack.c.b16 %v766, %v765
  %771 = vst [vmem:[#allocation2] sm:$0xff] %v767
  %772 = vst [vmem:[#allocation2 + $0x8] sm:$0xff] %v768
  %773 = vrot.lane.b32.xlu0 %v713, 16
  %v774 = vpop.permute.xlu0 %773
  %775 = vrot.lane.b32.xlu0 %v714, 16
  %v776 = vpop.permute.xlu0 %775
  %777 = vrot.lane.b32.xlu0 %v715, 16
  %v778 = vpop.permute.xlu0 %777
  %779 = vrot.lane.b32.xlu0 %v716, 16
  %v780 = vpop.permute.xlu0 %779
  %v781 = vsel %vm89, %v778, %v780
  %v782 = vsel %vm89, %v776, %v778
  %v783 = vsel %vm89, %v774, %v776
  %v784 = vsel %vm89, %v780, %v774
  %v785 = vld [vmem:[%s94] ss:$8 sm:$0xf]
  %v787 = vlaneseq
  %v788 = vshrl.u32 %v787, 7
  %v789 = vsub.s32 0, %v788
  %v790 = vrot.slane %v785, %v789
  %v791 = vlaneseq
  %v792 = vshrl.u32 %v791, 7
  %v793 = vsub.s32 1, %v792
  %v794 = vrot.slane %v785, %v793
  %v795 = vlaneseq
  %v796 = vshrl.u32 %v795, 7
  %v797 = vsub.s32 2, %v796
  %v798 = vrot.slane %v785, %v797
  %v799 = vlaneseq
  %v800 = vshrl.u32 %v799, 7
  %v801 = vsub.s32 3, %v800
  %v802 = vrot.slane %v785, %v801
  %v807 = vmul.f32 %v784, %v790
  %v808 = vmul.f32 %v783, %v794
  %v809 = vmul.f32 %v782, %v798
  %v810 = vmul.f32 %v781, %v802
  %v811 = vpack.c.bf16 %v807, %v807
  %v812 = vpack.c.bf16 %v808, %v808
  %v813 = vpack.c.bf16 %v809, %v809
  %v814 = vpack.c.bf16 %v810, %v810
  %v819 = vunpack.c.l.b16 %v811
  %v820 = vunpack.c.l.b16 %v812
  %v821 = vunpack.c.l.b16 %v813
  %v822 = vunpack.c.l.b16 %v814
  %v823 = vpack.c.b16 %v820, %v819
  %v824 = vpack.c.b16 %v822, %v821
  %827 = vst [vmem:[#allocation2 + $0x10] sm:$0xff] %v823
  %828 = vst [vmem:[#allocation2 + $0x18] sm:$0xff] %v824
  %829 = vrot.lane.b32.xlu0 %v713, 15
  %v830 = vpop.permute.xlu0 %829
  %831 = vrot.lane.b32.xlu0 %v714, 15
  %v832 = vpop.permute.xlu0 %831
  %833 = vrot.lane.b32.xlu0 %v715, 15
  %v834 = vpop.permute.xlu0 %833
  %835 = vrot.lane.b32.xlu0 %v716, 15
  %v836 = vpop.permute.xlu0 %835
  %v837 = vsel %vm147, %v834, %v836
  %v838 = vsel %vm147, %v832, %v834
  %v839 = vsel %vm147, %v830, %v832
  %v840 = vsel %vm147, %v836, %v830
  %v841 = vld [vmem:[%s152] ss:$8 sm:$0xf]
  %v843 = vlaneseq
  %v844 = vshrl.u32 %v843, 7
  %v845 = vsub.s32 0, %v844
  %v846 = vrot.slane %v841, %v845
  %v847 = vlaneseq
  %v848 = vshrl.u32 %v847, 7
  %v849 = vsub.s32 1, %v848
  %v850 = vrot.slane %v841, %v849
  %v851 = vlaneseq
  %v852 = vshrl.u32 %v851, 7
  %v853 = vsub.s32 2, %v852
  %v854 = vrot.slane %v841, %v853
  %v855 = vlaneseq
  %v856 = vshrl.u32 %v855, 7
  %v857 = vsub.s32 3, %v856
  %v858 = vrot.slane %v841, %v857
  %v863 = vmul.f32 %v840, %v846
  %v864 = vmul.f32 %v839, %v850
  %v865 = vmul.f32 %v838, %v854
  %v866 = vmul.f32 %v837, %v858
  %v867 = vpack.c.bf16 %v863, %v863
  %v868 = vpack.c.bf16 %v864, %v864
  %v869 = vpack.c.bf16 %v865, %v865
  %v870 = vpack.c.bf16 %v866, %v866
  %v875 = vunpack.c.l.b16 %v867
  %v876 = vunpack.c.l.b16 %v868
  %v877 = vunpack.c.l.b16 %v869
  %v878 = vunpack.c.l.b16 %v870
  %v879 = vpack.c.b16 %v876, %v875
  %v880 = vpack.c.b16 %v878, %v877
  %883 = vst [vmem:[#allocation2 + $0x20] sm:$0xff] %v879
  %884 = vst [vmem:[#allocation2 + $0x28] sm:$0xff] %v880
  %885 = vrot.lane.b32.xlu0 %v713, 1
  %v886 = vpop.permute.xlu0 %885
  %887 = vrot.lane.b32.xlu0 %v714, 1
  %v888 = vpop.permute.xlu0 %887
  %889 = vrot.lane.b32.xlu0 %v715, 1
  %v890 = vpop.permute.xlu0 %889
  %891 = vrot.lane.b32.xlu0 %v716, 1
  %v892 = vpop.permute.xlu0 %891
  %v893 = vsel %vm205, %v890, %v892
  %v894 = vsel %vm205, %v888, %v890
  %v895 = vsel %vm205, %v886, %v888
  %v896 = vsel %vm205, %v892, %v886
  %v897 = vld [vmem:[%s210] ss:$8 sm:$0xf]
  %v899 = vlaneseq
  %v900 = vshrl.u32 %v899, 7
  %v901 = vsub.s32 0, %v900
  %v902 = vrot.slane %v897, %v901
  %v903 = vlaneseq
  %v904 = vshrl.u32 %v903, 7
  %v905 = vsub.s32 1, %v904
  %v906 = vrot.slane %v897, %v905
  %v907 = vlaneseq
  %v908 = vshrl.u32 %v907, 7
  %v909 = vsub.s32 2, %v908
  %v910 = vrot.slane %v897, %v909
  %v911 = vlaneseq
  %v912 = vshrl.u32 %v911, 7
  %v913 = vsub.s32 3, %v912
  %v914 = vrot.slane %v897, %v913
  %v919 = vmul.f32 %v896, %v902
  %v920 = vmul.f32 %v895, %v906
  %v921 = vmul.f32 %v894, %v910
  %v922 = vmul.f32 %v893, %v914
  %v923 = vpack.c.bf16 %v919, %v919
  %v924 = vpack.c.bf16 %v920, %v920
  %v925 = vpack.c.bf16 %v921, %v921
  %v926 = vpack.c.bf16 %v922, %v922
  %v931 = vunpack.c.l.b16 %v923
  %v932 = vunpack.c.l.b16 %v924
  %v933 = vunpack.c.l.b16 %v925
  %v934 = vunpack.c.l.b16 %v926
  %v935 = vpack.c.b16 %v932, %v931
  %v936 = vpack.c.b16 %v934, %v933
  %939 = vst [vmem:[#allocation2 + $0x30] sm:$0xff] %v935
  %940 = vst [vmem:[#allocation2 + $0x38] sm:$0xff] %v936
  %v941 = vpack.c.bf16 %v713, %v713
  %v942 = vpack.c.bf16 %v714, %v714
  %v943 = vpack.c.bf16 %v715, %v715
  %v944 = vpack.c.bf16 %v716, %v716
  %v949 = vunpack.c.l.b16 %v941
  %v950 = vunpack.c.l.b16 %v942
  %v951 = vunpack.c.l.b16 %v943
  %v952 = vunpack.c.l.b16 %v944
  %v953 = vpack.c.b16 %v950, %v949
  %v954 = vpack.c.b16 %v952, %v951
  %957 = vst [vmem:[#allocation2 + $0x40] sm:$0xff] %v953
  %958 = vst [vmem:[#allocation2 + $0x48] sm:$0xff] %v954
  %959 = vrot.lane.b32.xlu0 %v713, 127
  %v960 = vpop.permute.xlu0 %959
  %961 = vrot.lane.b32.xlu0 %v714, 127
  %v962 = vpop.permute.xlu0 %961
  %963 = vrot.lane.b32.xlu0 %v715, 127
  %v964 = vpop.permute.xlu0 %963
  %965 = vrot.lane.b32.xlu0 %v716, 127
  %v966 = vpop.permute.xlu0 %965
  %v967 = vsel %vm281, %v964, %v966
  %v968 = vsel %vm281, %v962, %v964
  %v969 = vsel %vm281, %v960, %v962
  %v970 = vsel %vm281, %v966, %v960
  %v971 = vld [vmem:[%s286] ss:$8 sm:$0xf]
  %v973 = vlaneseq
  %v974 = vshrl.u32 %v973, 7
  %v975 = vsub.s32 0, %v974
  %v976 = vrot.slane %v971, %v975
  %v977 = vlaneseq
  %v978 = vshrl.u32 %v977, 7
  %v979 = vsub.s32 1, %v978
  %v980 = vrot.slane %v971, %v979
  %v981 = vlaneseq
  %v982 = vshrl.u32 %v981, 7
  %v983 = vsub.s32 2, %v982
  %v984 = vrot.slane %v971, %v983
  %v985 = vlaneseq
  %v986 = vshrl.u32 %v985, 7
  %v987 = vsub.s32 3, %v986
  %v988 = vrot.slane %v971, %v987
  %v993 = vmul.f32 %v969, %v976
  %v994 = vmul.f32 %v968, %v980
  %v995 = vmul.f32 %v967, %v984
  %v996 = vmul.f32 %v970, %v988
  %v997 = vpack.c.bf16 %v993, %v993
  %v998 = vpack.c.bf16 %v994, %v994
  %v999 = vpack.c.bf16 %v995, %v995
  %v1000 = vpack.c.bf16 %v996, %v996
  %v1005 = vunpack.c.l.b16 %v997
  %v1006 = vunpack.c.l.b16 %v998
  %v1007 = vunpack.c.l.b16 %v999
  %v1008 = vunpack.c.l.b16 %v1000
  %v1009 = vpack.c.b16 %v1006, %v1005
  %v1010 = vpack.c.b16 %v1008, %v1007
  %1013 = vst [vmem:[#allocation2 + $0x50] sm:$0xff] %v1009
  %1014 = vst [vmem:[#allocation2 + $0x58] sm:$0xff] %v1010
  %1015 = vrot.lane.b32.xlu0 %v713, 113
  %v1016 = vpop.permute.xlu0 %1015
  %1017 = vrot.lane.b32.xlu0 %v714, 113
  %v1018 = vpop.permute.xlu0 %1017
  %1019 = vrot.lane.b32.xlu0 %v715, 113
  %v1020 = vpop.permute.xlu0 %1019
  %1021 = vrot.lane.b32.xlu0 %v716, 113
  %v1022 = vpop.permute.xlu0 %1021
  %v1023 = vsel %vm339, %v1020, %v1022
  %v1024 = vsel %vm339, %v1018, %v1020
  %v1025 = vsel %vm339, %v1016, %v1018
  %v1026 = vsel %vm339, %v1022, %v1016
  %v1027 = vld [vmem:[%s344] ss:$8 sm:$0xf]
  %v1029 = vlaneseq
  %v1030 = vshrl.u32 %v1029, 7
  %v1031 = vsub.s32 0, %v1030
  %v1032 = vrot.slane %v1027, %v1031
  %v1033 = vlaneseq
  %v1034 = vshrl.u32 %v1033, 7
  %v1035 = vsub.s32 1, %v1034
  %v1036 = vrot.slane %v1027, %v1035
  %v1037 = vlaneseq
  %v1038 = vshrl.u32 %v1037, 7
  %v1039 = vsub.s32 2, %v1038
  %v1040 = vrot.slane %v1027, %v1039
  %v1041 = vlaneseq
  %v1042 = vshrl.u32 %v1041, 7
  %v1043 = vsub.s32 3, %v1042
  %v1044 = vrot.slane %v1027, %v1043
  %v1049 = vmul.f32 %v1025, %v1032
  %v1050 = vmul.f32 %v1024, %v1036
  %v1051 = vmul.f32 %v1023, %v1040
  %v1052 = vmul.f32 %v1026, %v1044
  %v1053 = vpack.c.bf16 %v1049, %v1049
  %v1054 = vpack.c.bf16 %v1050, %v1050
  %v1055 = vpack.c.bf16 %v1051, %v1051
  %v1056 = vpack.c.bf16 %v1052, %v1052
  %v1061 = vunpack.c.l.b16 %v1053
  %v1062 = vunpack.c.l.b16 %v1054
  %v1063 = vunpack.c.l.b16 %v1055
  %v1064 = vunpack.c.l.b16 %v1056
  %v1065 = vpack.c.b16 %v1062, %v1061
  %v1066 = vpack.c.b16 %v1064, %v1063
  %1069 = vst [vmem:[#allocation2 + $0x60] sm:$0xff] %v1065
  %1070 = vst [vmem:[#allocation2 + $0x68] sm:$0xff] %v1066
  %1071 = vrot.lane.b32.xlu0 %v713, 112
  %v1072 = vpop.permute.xlu0 %1071
  %1073 = vrot.lane.b32.xlu0 %v714, 112
  %v1074 = vpop.permute.xlu0 %1073
  %1075 = vrot.lane.b32.xlu0 %v715, 112
  %v1076 = vpop.permute.xlu0 %1075
  %1077 = vrot.lane.b32.xlu0 %v716, 112
  %v1078 = vpop.permute.xlu0 %1077
  %v1079 = vsel %vm397, %v1076, %v1078
  %v1080 = vsel %vm397, %v1074, %v1076
  %v1081 = vsel %vm397, %v1072, %v1074
  %v1082 = vsel %vm397, %v1078, %v1072
  %v1083 = vld [vmem:[%s402] ss:$8 sm:$0xf]
  %v1085 = vlaneseq
  %v1086 = vshrl.u32 %v1085, 7
  %v1087 = vsub.s32 0, %v1086
  %v1088 = vrot.slane %v1083, %v1087
  %v1089 = vlaneseq
  %v1090 = vshrl.u32 %v1089, 7
  %v1091 = vsub.s32 1, %v1090
  %v1092 = vrot.slane %v1083, %v1091
  %v1093 = vlaneseq
  %v1094 = vshrl.u32 %v1093, 7
  %v1095 = vsub.s32 2, %v1094
  %v1096 = vrot.slane %v1083, %v1095
  %v1097 = vlaneseq
  %v1098 = vshrl.u32 %v1097, 7
  %v1099 = vsub.s32 3, %v1098
  %v1100 = vrot.slane %v1083, %v1099
  %v1105 = vmul.f32 %v1081, %v1088
  %v1106 = vmul.f32 %v1080, %v1092
  %v1107 = vmul.f32 %v1079, %v1096
  %v1108 = vmul.f32 %v1082, %v1100
  %v1109 = vpack.c.bf16 %v1105, %v1105
  %v1110 = vpack.c.bf16 %v1106, %v1106
  %v1111 = vpack.c.bf16 %v1107, %v1107
  %v1112 = vpack.c.bf16 %v1108, %v1108
  %v1117 = vunpack.c.l.b16 %v1109
  %v1118 = vunpack.c.l.b16 %v1110
  %v1119 = vunpack.c.l.b16 %v1111
  %v1120 = vunpack.c.l.b16 %v1112
  %v1121 = vpack.c.b16 %v1118, %v1117
  %v1122 = vpack.c.b16 %v1120, %v1119
  %1125 = vst [vmem:[#allocation2 + $0x70] sm:$0xff] %v1121
  %1126 = vst [vmem:[#allocation2 + $0x78] sm:$0xff] %v1122
  %1127 = vrot.lane.b32.xlu0 %v713, 111
  %v1128 = vpop.permute.xlu0 %1127
  %1129 = vrot.lane.b32.xlu0 %v714, 111
  %v1130 = vpop.permute.xlu0 %1129
  %1131 = vrot.lane.b32.xlu0 %v715, 111
  %v1132 = vpop.permute.xlu0 %1131
  %1133 = vrot.lane.b32.xlu0 %v716, 111
  %v1134 = vpop.permute.xlu0 %1133
  %v1135 = vsel %vm455, %v1132, %v1134
  %v1136 = vsel %vm455, %v1130, %v1132
  %v1137 = vsel %vm455, %v1128, %v1130
  %v1138 = vsel %vm455, %v1134, %v1128
  %v1139 = vld [vmem:[%s460] ss:$8 sm:$0xf]
  %v1141 = vlaneseq
  %v1142 = vshrl.u32 %v1141, 7
  %v1143 = vsub.s32 0, %v1142
  %v1144 = vrot.slane %v1139, %v1143
  %v1145 = vlaneseq
  %v1146 = vshrl.u32 %v1145, 7
  %v1147 = vsub.s32 1, %v1146
  %v1148 = vrot.slane %v1139, %v1147
  %v1149 = vlaneseq
  %v1150 = vshrl.u32 %v1149, 7
  %v1151 = vsub.s32 2, %v1150
  %v1152 = vrot.slane %v1139, %v1151
  %v1153 = vlaneseq
  %v1154 = vshrl.u32 %v1153, 7
  %v1155 = vsub.s32 3, %v1154
  %v1156 = vrot.slane %v1139, %v1155
  %v1161 = vmul.f32 %v1137, %v1144
  %v1162 = vmul.f32 %v1136, %v1148
  %v1163 = vmul.f32 %v1135, %v1152
  %v1164 = vmul.f32 %v1138, %v1156
  %v1165 = vpack.c.bf16 %v1161, %v1161
  %v1166 = vpack.c.bf16 %v1162, %v1162
  %v1167 = vpack.c.bf16 %v1163, %v1163
  %v1168 = vpack.c.bf16 %v1164, %v1164
  %v1173 = vunpack.c.l.b16 %v1165
  %v1174 = vunpack.c.l.b16 %v1166
  %v1175 = vunpack.c.l.b16 %v1167
  %v1176 = vunpack.c.l.b16 %v1168
  %v1177 = vpack.c.b16 %v1174, %v1173
  %v1178 = vpack.c.b16 %v1176, %v1175
  %1181 = vst [vmem:[#allocation2 + $0x80] sm:$0xff] %v1177
  %1182 = vst [vmem:[#allocation2 + $0x88] sm:$0xff] %v1178
  %v1183 = vld [vmem:[%s3] sm:$0xf]
  %v1184 = vld [vmem:[#allocation2] sm:$0xff]
  %v1185 = vld [vmem:[#allocation2 + $0x8] sm:$0xff]
  %v1186 = vld [vmem:[#allocation2 + $0x10] sm:$0xff]
  %v1187 = vld [vmem:[#allocation2 + $0x18] sm:$0xff]
  %v1188 = vld [vmem:[#allocation2 + $0x20] sm:$0xff]
  %v1189 = vld [vmem:[#allocation2 + $0x28] sm:$0xff]
  %v1190 = vld [vmem:[#allocation2 + $0x30] sm:$0xff]
  %v1191 = vld [vmem:[#allocation2 + $0x38] sm:$0xff]
  %v1192 = vld [vmem:[#allocation2 + $0x40] sm:$0xff]
  %v1193 = vld [vmem:[#allocation2 + $0x48] sm:$0xff]
  %v1194 = vld [vmem:[#allocation2 + $0x50] sm:$0xff]
  %v1195 = vld [vmem:[#allocation2 + $0x58] sm:$0xff]
  %v1196 = vld [vmem:[#allocation2 + $0x60] sm:$0xff]
  %v1197 = vld [vmem:[#allocation2 + $0x68] sm:$0xff]
  %v1198 = vld [vmem:[#allocation2 + $0x70] sm:$0xff]
  %v1199 = vld [vmem:[#allocation2 + $0x78] sm:$0xff]
  %v1200 = vld [vmem:[#allocation2 + $0x80] sm:$0xff]
  %v1201 = vld [vmem:[#allocation2 + $0x88] sm:$0xff]
  %v1220 = vunpack.c.l.b16 %v1184
  %v1221 = vunpack.c.h.b16 %v1184
  %v1222 = vunpack.c.l.b16 %v1185
  %v1223 = vunpack.c.h.b16 %v1185
  %v1224 = vunpack.c.l.b16 %v1186
  %v1225 = vunpack.c.h.b16 %v1186
  %v1226 = vunpack.c.l.b16 %v1187
  %v1227 = vunpack.c.h.b16 %v1187
  %v1228 = vunpack.c.l.b16 %v1188
  %v1229 = vunpack.c.h.b16 %v1188
  %v1230 = vunpack.c.l.b16 %v1189
  %v1231 = vunpack.c.h.b16 %v1189
  %v1232 = vunpack.c.l.b16 %v1190
  %v1233 = vunpack.c.h.b16 %v1190
  %v1234 = vunpack.c.l.b16 %v1191
  %v1235 = vunpack.c.h.b16 %v1191
  %v1236 = vunpack.c.l.b16 %v1192
  %v1237 = vunpack.c.h.b16 %v1192
  %v1238 = vunpack.c.l.b16 %v1193
  %v1239 = vunpack.c.h.b16 %v1193
  %v1240 = vunpack.c.l.b16 %v1194
  %v1241 = vunpack.c.h.b16 %v1194
  %v1242 = vunpack.c.l.b16 %v1195
  %v1243 = vunpack.c.h.b16 %v1195
  %v1244 = vunpack.c.l.b16 %v1196
  %v1245 = vunpack.c.h.b16 %v1196
  %v1246 = vunpack.c.l.b16 %v1197
  %v1247 = vunpack.c.h.b16 %v1197
  %v1248 = vunpack.c.l.b16 %v1198
  %v1249 = vunpack.c.h.b16 %v1198
  %v1250 = vunpack.c.l.b16 %v1199
  %v1251 = vunpack.c.h.b16 %v1199
  %v1252 = vunpack.c.l.b16 %v1200
  %v1253 = vunpack.c.h.b16 %v1200
  %v1254 = vunpack.c.l.b16 %v1201
  %v1255 = vunpack.c.h.b16 %v1201
  %v1256 = vpack.c.b16 %v1224, %v1220
  %v1257 = vpack.c.b16 %v1225, %v1221
  %v1258 = vpack.c.b16 %v1226, %v1222
  %v1259 = vpack.c.b16 %v1227, %v1223
  %v1260 = vpack.c.b16 %v1232, %v1228
  %v1261 = vpack.c.b16 %v1233, %v1229
  %v1262 = vpack.c.b16 %v1234, %v1230
  %v1263 = vpack.c.b16 %v1235, %v1231
  %v1264 = vpack.c.b16 %v1240, %v1236
  %v1265 = vpack.c.b16 %v1241, %v1237
  %v1266 = vpack.c.b16 %v1242, %v1238
  %v1267 = vpack.c.b16 %v1243, %v1239
  %v1268 = vpack.c.b16 %v1248, %v1244
  %v1269 = vpack.c.b16 %v1249, %v1245
  %v1270 = vpack.c.b16 %v1250, %v1246
  %v1271 = vpack.c.b16 %v1251, %v1247
  %v1272 = vpack.c.b16 %v1252, %v1252
  %v1273 = vpack.c.b16 %v1253, %v1253
  %v1274 = vpack.c.b16 %v1254, %v1254
  %v1275 = vpack.c.b16 %v1255, %v1255
  %v1293 = vsel %vm614, %v1183, 0
  %v1296 = vsel %vm618, %v1272, 0
  %v1299 = vsel %vm618, %v1273, 0
  %v1302 = vsel %vm618, %v1274, 0
  %v1305 = vsel %vm618, %v1275, 0
  %1307 = vmatprep.subr.bf16.mxu0 %v1257
  %1308 = vmatpush1.bf16.msra.mxu0 %v1256
  %1309 = vmatprep.subr.bf16.mxu0 %v1261
  %1310 = vmatpush1.bf16.msra.mxu0 %v1260
  %1311 = vmatprep.subr.bf16.mxu0 %v1265
  %1312 = vmatpush1.bf16.msra.mxu0 %v1264
  %1313 = vmatprep.subr.bf16.mxu0 %v1269
  %1314 = vmatpush1.bf16.msra.mxu0 %v1268
  %1315 = vmatprep.subr.bf16.mxu0 %v1299
  %1316 = vmatpush1.bf16.msra.mxu0 %v1296
  %1317 = vmatprep.subr.bf16.mxu0 0
  %1318 = vmatpush1.bf16.msra.mxu0 0
  %1319 = vmatprep.subr.bf16.mxu0 0
  %1320 = vmatpush1.bf16.msra.mxu0 0
  %1321 = vmatprep.subr.bf16.mxu0 0
  %1322 = vmatpush1.bf16.msra.mxu0 0
  %1323 = vmatprep.subr.bf16.mxu0 0
  %1324 = vmatpush1.bf16.msra.mxu0 0
  %1325 = vmatprep.subr.bf16.mxu0 0
  %1326 = vmatpush1.bf16.msra.mxu0 0
  %1327 = vmatprep.subr.bf16.mxu0 0
  %1328 = vmatpush1.bf16.msra.mxu0 0
  %1329 = vmatprep.subr.bf16.mxu0 0
  %1330 = vmatpush1.bf16.msra.mxu0 0
  %1331 = vmatprep.subr.bf16.mxu0 0
  %1332 = vmatpush1.bf16.msra.mxu0 0
  %1333 = vmatprep.subr.bf16.mxu0 0
  %1334 = vmatpush1.bf16.msra.mxu0 0
  %1335 = vmatprep.subr.bf16.mxu0 0
  %1336 = vmatpush1.bf16.msra.mxu0 0
  %1337 = vmatprep.subr.bf16.mxu0 0
  %1338 = vmatpush1.bf16.msra.mxu0 0
  %1339 = vmatprep.mubr.bf16.mxu0 0
  %1340 = vmatmul.mubr.bf16.gmra.mrb[0].mxu0 %v1293
  %v1341 = vpop.f32.mrb[0].mxu0
  %v1342 = vadd.f32 %v666, %v1341
  %v1343 = vpop.f32.mrb[0].mxu0
  %v1344 = vadd.f32 %v668, %v1343
  %v1345 = vpop.f32.mrb[0].mxu0
  %v1346 = vpop.f32.mrb[0].mxu0
  %1347 = vdwg.mxu0
  %1348 = vmatprep.subr.bf16.mxu0 %v1259
  %1349 = vmatpush1.bf16.msra.mxu0 %v1258
  %1350 = vmatprep.subr.bf16.mxu0 %v1263
  %1351 = vmatpush1.bf16.msra.mxu0 %v1262
  %1352 = vmatprep.subr.bf16.mxu0 %v1267
  %1353 = vmatpush1.bf16.msra.mxu0 %v1266
  %1354 = vmatprep.subr.bf16.mxu0 %v1271
  %1355 = vmatpush1.bf16.msra.mxu0 %v1270
  %1356 = vmatprep.subr.bf16.mxu0 %v1305
  %1357 = vmatpush1.bf16.msra.mxu0 %v1302
  %1358 = vmatprep.subr.bf16.mxu0 0
  %1359 = vmatpush1.bf16.msra.mxu0 0
  %1360 = vmatprep.subr.bf16.mxu0 0
  %1361 = vmatpush1.bf16.msra.mxu0 0
  %1362 = vmatprep.subr.bf16.mxu0 0
  %1363 = vmatpush1.bf16.msra.mxu0 0
  %1364 = vmatprep.subr.bf16.mxu0 0
  %1365 = vmatpush1.bf16.msra.mxu0 0
  %1366 = vmatprep.subr.bf16.mxu0 0
  %1367 = vmatpush1.bf16.msra.mxu0 0
  %1368 = vmatprep.subr.bf16.mxu0 0
  %1369 = vmatpush1.bf16.msra.mxu0 0
  %1370 = vmatprep.subr.bf16.mxu0 0
  %1371 = vmatpush1.bf16.msra.mxu0 0
  %1372 = vmatprep.subr.bf16.mxu0 0
  %1373 = vmatpush1.bf16.msra.mxu0 0
  %1374 = vmatprep.subr.bf16.mxu0 0
  %1375 = vmatpush1.bf16.msra.mxu0 0
  %1376 = vmatprep.subr.bf16.mxu0 0
  %1377 = vmatpush1.bf16.msra.mxu0 0
  %1378 = vmatprep.subr.bf16.mxu0 0
  %1379 = vmatpush1.bf16.msra.mxu0 0
  %1380 = vmatprep.mubr.bf16.mxu0 0
  %1381 = vmatmul.mubr.bf16.gmra.mrb[0].mxu0 %v1293
  %v1382 = vpop.f32.mrb[0].mxu0
  %v1383 = vadd.f32 %v707, %v1382
  %v1384 = vpop.f32.mrb[0].mxu0
  %v1385 = vadd.f32 %v709, %v1384
  %v1386 = vpop.f32.mrb[0].mxu0
  %v1387 = vpop.f32.mrb[0].mxu0
  %1388 = vdwg.mxu0
  %v1389 = vmax.f32 %v1342, 0.0
  %v1390 = vmax.f32 %v1344, 0.0
  %v1391 = vmax.f32 %v1383, 0.0
  %v1392 = vmax.f32 %v1385, 0.0
  %1393 = vrot.lane.b32.xlu0 %v1389, 17
  %v1394 = vpop.permute.xlu0 %1393
  %1395 = vrot.lane.b32.xlu0 %v1390, 17
  %v1396 = vpop.permute.xlu0 %1395
  %1397 = vrot.lane.b32.xlu0 %v1391, 17
  %v1398 = vpop.permute.xlu0 %1397
  %1399 = vrot.lane.b32.xlu0 %v1392, 17
  %v1400 = vpop.permute.xlu0 %1399
  %v1401 = vsel %vm32, %v1398, %v1400
  %v1402 = vsel %vm32, %v1396, %v1398
  %v1403 = vsel %vm32, %v1394, %v1396
  %v1404 = vsel %vm32, %v1400, %v1394
  %v1405 = vld [vmem:[%s1] ss:$8 sm:$0xf]
  %v1407 = vlaneseq
  %v1408 = vshrl.u32 %v1407, 7
  %v1409 = vsub.s32 0, %v1408
  %v1410 = vrot.slane %v1405, %v1409
  %v1411 = vlaneseq
  %v1412 = vshrl.u32 %v1411, 7
  %v1413 = vsub.s32 1, %v1412
  %v1414 = vrot.slane %v1405, %v1413
  %v1415 = vlaneseq
  %v1416 = vshrl.u32 %v1415, 7
  %v1417 = vsub.s32 2, %v1416
  %v1418 = vrot.slane %v1405, %v1417
  %v1419 = vlaneseq
  %v1420 = vshrl.u32 %v1419, 7
  %v1421 = vsub.s32 3, %v1420
  %v1422 = vrot.slane %v1405, %v1421
  %v1427 = vmul.f32 %v1404, %v1410
  %v1428 = vmul.f32 %v1403, %v1414
  %v1429 = vmul.f32 %v1402, %v1418
  %v1430 = vmul.f32 %v1401, %v1422
  %v1431 = vpack.c.bf16 %v1427, %v1427
  %v1432 = vpack.c.bf16 %v1428, %v1428
  %v1433 = vpack.c.bf16 %v1429, %v1429
  %v1434 = vpack.c.bf16 %v1430, %v1430
  %v1439 = vunpack.c.l.b16 %v1431
  %v1440 = vunpack.c.l.b16 %v1432
  %v1441 = vunpack.c.l.b16 %v1433
  %v1442 = vunpack.c.l.b16 %v1434
  %v1443 = vpack.c.b16 %v1440, %v1439
  %v1444 = vpack.c.b16 %v1442, %v1441
  %1447 = vst [vmem:[#allocation2] sm:$0xff] %v1443
  %1448 = vst [vmem:[#allocation2 + $0x8] sm:$0xff] %v1444
  %1449 = vrot.lane.b32.xlu0 %v1389, 16
  %v1450 = vpop.permute.xlu0 %1449
  %1451 = vrot.lane.b32.xlu0 %v1390, 16
  %v1452 = vpop.permute.xlu0 %1451
  %1453 = vrot.lane.b32.xlu0 %v1391, 16
  %v1454 = vpop.permute.xlu0 %1453
  %1455 = vrot.lane.b32.xlu0 %v1392, 16
  %v1456 = vpop.permute.xlu0 %1455
  %v1457 = vsel %vm89, %v1454, %v1456
  %v1458 = vsel %vm89, %v1452, %v1454
  %v1459 = vsel %vm89, %v1450, %v1452
  %v1460 = vsel %vm89, %v1456, %v1450
  %v1461 = vld [vmem:[%s94] ss:$8 sm:$0xf]
  %v1463 = vlaneseq
  %v1464 = vshrl.u32 %v1463, 7
  %v1465 = vsub.s32 0, %v1464
  %v1466 = vrot.slane %v1461, %v1465
  %v1467 = vlaneseq
  %v1468 = vshrl.u32 %v1467, 7
  %v1469 = vsub.s32 1, %v1468
  %v1470 = vrot.slane %v1461, %v1469
  %v1471 = vlaneseq
  %v1472 = vshrl.u32 %v1471, 7
  %v1473 = vsub.s32 2, %v1472
  %v1474 = vrot.slane %v1461, %v1473
  %v1475 = vlaneseq
  %v1476 = vshrl.u32 %v1475, 7
  %v1477 = vsub.s32 3, %v1476
  %v1478 = vrot.slane %v1461, %v1477
  %v1483 = vmul.f32 %v1460, %v1466
  %v1484 = vmul.f32 %v1459, %v1470
  %v1485 = vmul.f32 %v1458, %v1474
  %v1486 = vmul.f32 %v1457, %v1478
  %v1487 = vpack.c.bf16 %v1483, %v1483
  %v1488 = vpack.c.bf16 %v1484, %v1484
  %v1489 = vpack.c.bf16 %v1485, %v1485
  %v1490 = vpack.c.bf16 %v1486, %v1486
  %v1495 = vunpack.c.l.b16 %v1487
  %v1496 = vunpack.c.l.b16 %v1488
  %v1497 = vunpack.c.l.b16 %v1489
  %v1498 = vunpack.c.l.b16 %v1490
  %v1499 = vpack.c.b16 %v1496, %v1495
  %v1500 = vpack.c.b16 %v1498, %v1497
  %1503 = vst [vmem:[#allocation2 + $0x10] sm:$0xff] %v1499
  %1504 = vst [vmem:[#allocation2 + $0x18] sm:$0xff] %v1500
  %1505 = vrot.lane.b32.xlu0 %v1389, 15
  %v1506 = vpop.permute.xlu0 %1505
  %1507 = vrot.lane.b32.xlu0 %v1390, 15
  %v1508 = vpop.permute.xlu0 %1507
  %1509 = vrot.lane.b32.xlu0 %v1391, 15
  %v1510 = vpop.permute.xlu0 %1509
  %1511 = vrot.lane.b32.xlu0 %v1392, 15
  %v1512 = vpop.permute.xlu0 %1511
  %v1513 = vsel %vm147, %v1510, %v1512
  %v1514 = vsel %vm147, %v1508, %v1510
  %v1515 = vsel %vm147, %v1506, %v1508
  %v1516 = vsel %vm147, %v1512, %v1506
  %v1517 = vld [vmem:[%s152] ss:$8 sm:$0xf]
  %v1519 = vlaneseq
  %v1520 = vshrl.u32 %v1519, 7
  %v1521 = vsub.s32 0, %v1520
  %v1522 = vrot.slane %v1517, %v1521
  %v1523 = vlaneseq
  %v1524 = vshrl.u32 %v1523, 7
  %v1525 = vsub.s32 1, %v1524
  %v1526 = vrot.slane %v1517, %v1525
  %v1527 = vlaneseq
  %v1528 = vshrl.u32 %v1527, 7
  %v1529 = vsub.s32 2, %v1528
  %v1530 = vrot.slane %v1517, %v1529
  %v1531 = vlaneseq
  %v1532 = vshrl.u32 %v1531, 7
  %v1533 = vsub.s32 3, %v1532
  %v1534 = vrot.slane %v1517, %v1533
  %v1539 = vmul.f32 %v1516, %v1522
  %v1540 = vmul.f32 %v1515, %v1526
  %v1541 = vmul.f32 %v1514, %v1530
  %v1542 = vmul.f32 %v1513, %v1534
  %v1543 = vpack.c.bf16 %v1539, %v1539
  %v1544 = vpack.c.bf16 %v1540, %v1540
  %v1545 = vpack.c.bf16 %v1541, %v1541
  %v1546 = vpack.c.bf16 %v1542, %v1542
  %v1551 = vunpack.c.l.b16 %v1543
  %v1552 = vunpack.c.l.b16 %v1544
  %v1553 = vunpack.c.l.b16 %v1545
  %v1554 = vunpack.c.l.b16 %v1546
  %v1555 = vpack.c.b16 %v1552, %v1551
  %v1556 = vpack.c.b16 %v1554, %v1553
  %1559 = vst [vmem:[#allocation2 + $0x20] sm:$0xff] %v1555
  %1560 = vst [vmem:[#allocation2 + $0x28] sm:$0xff] %v1556
  %1561 = vrot.lane.b32.xlu0 %v1389, 1
  %v1562 = vpop.permute.xlu0 %1561
  %1563 = vrot.lane.b32.xlu0 %v1390, 1
  %v1564 = vpop.permute.xlu0 %1563
  %1565 = vrot.lane.b32.xlu0 %v1391, 1
  %v1566 = vpop.permute.xlu0 %1565
  %1567 = vrot.lane.b32.xlu0 %v1392, 1
  %v1568 = vpop.permute.xlu0 %1567
  %v1569 = vsel %vm205, %v1566, %v1568
  %v1570 = vsel %vm205, %v1564, %v1566
  %v1571 = vsel %vm205, %v1562, %v1564
  %v1572 = vsel %vm205, %v1568, %v1562
  %v1573 = vld [vmem:[%s210] ss:$8 sm:$0xf]
  %v1575 = vlaneseq
  %v1576 = vshrl.u32 %v1575, 7
  %v1577 = vsub.s32 0, %v1576
  %v1578 = vrot.slane %v1573, %v1577
  %v1579 = vlaneseq
  %v1580 = vshrl.u32 %v1579, 7
  %v1581 = vsub.s32 1, %v1580
  %v1582 = vrot.slane %v1573, %v1581
  %v1583 = vlaneseq
  %v1584 = vshrl.u32 %v1583, 7
  %v1585 = vsub.s32 2, %v1584
  %v1586 = vrot.slane %v1573, %v1585
  %v1587 = vlaneseq
  %v1588 = vshrl.u32 %v1587, 7
  %v1589 = vsub.s32 3, %v1588
  %v1590 = vrot.slane %v1573, %v1589
  %v1595 = vmul.f32 %v1572, %v1578
  %v1596 = vmul.f32 %v1571, %v1582
  %v1597 = vmul.f32 %v1570, %v1586
  %v1598 = vmul.f32 %v1569, %v1590
  %v1599 = vpack.c.bf16 %v1595, %v1595
  %v1600 = vpack.c.bf16 %v1596, %v1596
  %v1601 = vpack.c.bf16 %v1597, %v1597
  %v1602 = vpack.c.bf16 %v1598, %v1598
  %v1607 = vunpack.c.l.b16 %v1599
  %v1608 = vunpack.c.l.b16 %v1600
  %v1609 = vunpack.c.l.b16 %v1601
  %v1610 = vunpack.c.l.b16 %v1602
  %v1611 = vpack.c.b16 %v1608, %v1607
  %v1612 = vpack.c.b16 %v1610, %v1609
  %1615 = vst [vmem:[#allocation2 + $0x30] sm:$0xff] %v1611
  %1616 = vst [vmem:[#allocation2 + $0x38] sm:$0xff] %v1612
  %v1617 = vpack.c.bf16 %v1389, %v1389
  %v1618 = vpack.c.bf16 %v1390, %v1390
  %v1619 = vpack.c.bf16 %v1391, %v1391
  %v1620 = vpack.c.bf16 %v1392, %v1392
  %v1625 = vunpack.c.l.b16 %v1617
  %v1626 = vunpack.c.l.b16 %v1618
  %v1627 = vunpack.c.l.b16 %v1619
  %v1628 = vunpack.c.l.b16 %v1620
  %v1629 = vpack.c.b16 %v1626, %v1625
  %v1630 = vpack.c.b16 %v1628, %v1627
  %1633 = vst [vmem:[#allocation2 + $0x40] sm:$0xff] %v1629
  %1634 = vst [vmem:[#allocation2 + $0x48] sm:$0xff] %v1630
  %1635 = vrot.lane.b32.xlu0 %v1389, 127
  %v1636 = vpop.permute.xlu0 %1635
  %1637 = vrot.lane.b32.xlu0 %v1390, 127
  %v1638 = vpop.permute.xlu0 %1637
  %1639 = vrot.lane.b32.xlu0 %v1391, 127
  %v1640 = vpop.permute.xlu0 %1639
  %1641 = vrot.lane.b32.xlu0 %v1392, 127
  %v1642 = vpop.permute.xlu0 %1641
  %v1643 = vsel %vm281, %v1640, %v1642
  %v1644 = vsel %vm281, %v1638, %v1640
  %v1645 = vsel %vm281, %v1636, %v1638
  %v1646 = vsel %vm281, %v1642, %v1636
  %v1647 = vld [vmem:[%s286] ss:$8 sm:$0xf]
  %v1649 = vlaneseq
  %v1650 = vshrl.u32 %v1649, 7
  %v1651 = vsub.s32 0, %v1650
  %v1652 = vrot.slane %v1647, %v1651
  %v1653 = vlaneseq
  %v1654 = vshrl.u32 %v1653, 7
  %v1655 = vsub.s32 1, %v1654
  %v1656 = vrot.slane %v1647, %v1655
  %v1657 = vlaneseq
  %v1658 = vshrl.u32 %v1657, 7
  %v1659 = vsub.s32 2, %v1658
  %v1660 = vrot.slane %v1647, %v1659
  %v1661 = vlaneseq
  %v1662 = vshrl.u32 %v1661, 7
  %v1663 = vsub.s32 3, %v1662
  %v1664 = vrot.slane %v1647, %v1663
  %v1669 = vmul.f32 %v1645, %v1652
  %v1670 = vmul.f32 %v1644, %v1656
  %v1671 = vmul.f32 %v1643, %v1660
  %v1672 = vmul.f32 %v1646, %v1664
  %v1673 = vpack.c.bf16 %v1669, %v1669
  %v1674 = vpack.c.bf16 %v1670, %v1670
  %v1675 = vpack.c.bf16 %v1671, %v1671
  %v1676 = vpack.c.bf16 %v1672, %v1672
  %v1681 = vunpack.c.l.b16 %v1673
  %v1682 = vunpack.c.l.b16 %v1674
  %v1683 = vunpack.c.l.b16 %v1675
  %v1684 = vunpack.c.l.b16 %v1676
  %v1685 = vpack.c.b16 %v1682, %v1681
  %v1686 = vpack.c.b16 %v1684, %v1683
  %1689 = vst [vmem:[#allocation2 + $0x50] sm:$0xff] %v1685
  %1690 = vst [vmem:[#allocation2 + $0x58] sm:$0xff] %v1686
  %1691 = vrot.lane.b32.xlu0 %v1389, 113
  %v1692 = vpop.permute.xlu0 %1691
  %1693 = vrot.lane.b32.xlu0 %v1390, 113
  %v1694 = vpop.permute.xlu0 %1693
  %1695 = vrot.lane.b32.xlu0 %v1391, 113
  %v1696 = vpop.permute.xlu0 %1695
  %1697 = vrot.lane.b32.xlu0 %v1392, 113
  %v1698 = vpop.permute.xlu0 %1697
  %v1699 = vsel %vm339, %v1696, %v1698
  %v1700 = vsel %vm339, %v1694, %v1696
  %v1701 = vsel %vm339, %v1692, %v1694
  %v1702 = vsel %vm339, %v1698, %v1692
  %v1703 = vld [vmem:[%s344] ss:$8 sm:$0xf]
  %v1705 = vlaneseq
  %v1706 = vshrl.u32 %v1705, 7
  %v1707 = vsub.s32 0, %v1706
  %v1708 = vrot.slane %v1703, %v1707
  %v1709 = vlaneseq
  %v1710 = vshrl.u32 %v1709, 7
  %v1711 = vsub.s32 1, %v1710
  %v1712 = vrot.slane %v1703, %v1711
  %v1713 = vlaneseq
  %v1714 = vshrl.u32 %v1713, 7
  %v1715 = vsub.s32 2, %v1714
  %v1716 = vrot.slane %v1703, %v1715
  %v1717 = vlaneseq
  %v1718 = vshrl.u32 %v1717, 7
  %v1719 = vsub.s32 3, %v1718
  %v1720 = vrot.slane %v1703, %v1719
  %v1725 = vmul.f32 %v1701, %v1708
  %v1726 = vmul.f32 %v1700, %v1712
  %v1727 = vmul.f32 %v1699, %v1716
  %v1728 = vmul.f32 %v1702, %v1720
  %v1729 = vpack.c.bf16 %v1725, %v1725
  %v1730 = vpack.c.bf16 %v1726, %v1726
  %v1731 = vpack.c.bf16 %v1727, %v1727
  %v1732 = vpack.c.bf16 %v1728, %v1728
  %v1737 = vunpack.c.l.b16 %v1729
  %v1738 = vunpack.c.l.b16 %v1730
  %v1739 = vunpack.c.l.b16 %v1731
  %v1740 = vunpack.c.l.b16 %v1732
  %v1741 = vpack.c.b16 %v1738, %v1737
  %v1742 = vpack.c.b16 %v1740, %v1739
  %1745 = vst [vmem:[#allocation2 + $0x60] sm:$0xff] %v1741
  %1746 = vst [vmem:[#allocation2 + $0x68] sm:$0xff] %v1742
  %1747 = vrot.lane.b32.xlu0 %v1389, 112
  %v1748 = vpop.permute.xlu0 %1747
  %1749 = vrot.lane.b32.xlu0 %v1390, 112
  %v1750 = vpop.permute.xlu0 %1749
  %1751 = vrot.lane.b32.xlu0 %v1391, 112
  %v1752 = vpop.permute.xlu0 %1751
  %1753 = vrot.lane.b32.xlu0 %v1392, 112
  %v1754 = vpop.permute.xlu0 %1753
  %v1755 = vsel %vm397, %v1752, %v1754
  %v1756 = vsel %vm397, %v1750, %v1752
  %v1757 = vsel %vm397, %v1748, %v1750
  %v1758 = vsel %vm397, %v1754, %v1748
  %v1759 = vld [vmem:[%s402] ss:$8 sm:$0xf]
  %v1761 = vlaneseq
  %v1762 = vshrl.u32 %v1761, 7
  %v1763 = vsub.s32 0, %v1762
  %v1764 = vrot.slane %v1759, %v1763
  %v1765 = vlaneseq
  %v1766 = vshrl.u32 %v1765, 7
  %v1767 = vsub.s32 1, %v1766
  %v1768 = vrot.slane %v1759, %v1767
  %v1769 = vlaneseq
  %v1770 = vshrl.u32 %v1769, 7
  %v1771 = vsub.s32 2, %v1770
  %v1772 = vrot.slane %v1759, %v1771
  %v1773 = vlaneseq
  %v1774 = vshrl.u32 %v1773, 7
  %v1775 = vsub.s32 3, %v1774
  %v1776 = vrot.slane %v1759, %v1775
  %v1781 = vmul.f32 %v1757, %v1764
  %v1782 = vmul.f32 %v1756, %v1768
  %v1783 = vmul.f32 %v1755, %v1772
  %v1784 = vmul.f32 %v1758, %v1776
  %v1785 = vpack.c.bf16 %v1781, %v1781
  %v1786 = vpack.c.bf16 %v1782, %v1782
  %v1787 = vpack.c.bf16 %v1783, %v1783
  %v1788 = vpack.c.bf16 %v1784, %v1784
  %v1793 = vunpack.c.l.b16 %v1785
  %v1794 = vunpack.c.l.b16 %v1786
  %v1795 = vunpack.c.l.b16 %v1787
  %v1796 = vunpack.c.l.b16 %v1788
  %v1797 = vpack.c.b16 %v1794, %v1793
  %v1798 = vpack.c.b16 %v1796, %v1795
  %1801 = vst [vmem:[#allocation2 + $0x70] sm:$0xff] %v1797
  %1802 = vst [vmem:[#allocation2 + $0x78] sm:$0xff] %v1798
  %1803 = vrot.lane.b32.xlu0 %v1389, 111
  %v1804 = vpop.permute.xlu0 %1803
  %1805 = vrot.lane.b32.xlu0 %v1390, 111
  %v1806 = vpop.permute.xlu0 %1805
  %1807 = vrot.lane.b32.xlu0 %v1391, 111
  %v1808 = vpop.permute.xlu0 %1807
  %1809 = vrot.lane.b32.xlu0 %v1392, 111
  %v1810 = vpop.permute.xlu0 %1809
  %v1811 = vsel %vm455, %v1808, %v1810
  %v1812 = vsel %vm455, %v1806, %v1808
  %v1813 = vsel %vm455, %v1804, %v1806
  %v1814 = vsel %vm455, %v1810, %v1804
  %v1815 = vld [vmem:[%s460] ss:$8 sm:$0xf]
  %v1817 = vlaneseq
  %v1818 = vshrl.u32 %v1817, 7
  %v1819 = vsub.s32 0, %v1818
  %v1820 = vrot.slane %v1815, %v1819
  %v1821 = vlaneseq
  %v1822 = vshrl.u32 %v1821, 7
  %v1823 = vsub.s32 1, %v1822
  %v1824 = vrot.slane %v1815, %v1823
  %v1825 = vlaneseq
  %v1826 = vshrl.u32 %v1825, 7
  %v1827 = vsub.s32 2, %v1826
  %v1828 = vrot.slane %v1815, %v1827
  %v1829 = vlaneseq
  %v1830 = vshrl.u32 %v1829, 7
  %v1831 = vsub.s32 3, %v1830
  %v1832 = vrot.slane %v1815, %v1831
  %v1837 = vmul.f32 %v1813, %v1820
  %v1838 = vmul.f32 %v1812, %v1824
  %v1839 = vmul.f32 %v1811, %v1828
  %v1840 = vmul.f32 %v1814, %v1832
  %v1841 = vpack.c.bf16 %v1837, %v1837
  %v1842 = vpack.c.bf16 %v1838, %v1838
  %v1843 = vpack.c.bf16 %v1839, %v1839
  %v1844 = vpack.c.bf16 %v1840, %v1840
  %v1849 = vunpack.c.l.b16 %v1841
  %v1850 = vunpack.c.l.b16 %v1842
  %v1851 = vunpack.c.l.b16 %v1843
  %v1852 = vunpack.c.l.b16 %v1844
  %v1853 = vpack.c.b16 %v1850, %v1849
  %v1854 = vpack.c.b16 %v1852, %v1851
  %1857 = vst [vmem:[#allocation2 + $0x80] sm:$0xff] %v1853
  %1858 = vst [vmem:[#allocation2 + $0x88] sm:$0xff] %v1854
  %v1859 = vld [vmem:[%s3] sm:$0xf]
  %v1860 = vld [vmem:[#allocation2] sm:$0xff]
  %v1861 = vld [vmem:[#allocation2 + $0x8] sm:$0xff]
  %v1862 = vld [vmem:[#allocation2 + $0x10] sm:$0xff]
  %v1863 = vld [vmem:[#allocation2 + $0x18] sm:$0xff]
  %v1864 = vld [vmem:[#allocation2 + $0x20] sm:$0xff]
  %v1865 = vld [vmem:[#allocation2 + $0x28] sm:$0xff]
  %v1866 = vld [vmem:[#allocation2 + $0x30] sm:$0xff]
  %v1867 = vld [vmem:[#allocation2 + $0x38] sm:$0xff]
  %v1868 = vld [vmem:[#allocation2 + $0x40] sm:$0xff]
  %v1869 = vld [vmem:[#allocation2 + $0x48] sm:$0xff]
  %v1870 = vld [vmem:[#allocation2 + $0x50] sm:$0xff]
  %v1871 = vld [vmem:[#allocation2 + $0x58] sm:$0xff]
  %v1872 = vld [vmem:[#allocation2 + $0x60] sm:$0xff]
  %v1873 = vld [vmem:[#allocation2 + $0x68] sm:$0xff]
  %v1874 = vld [vmem:[#allocation2 + $0x70] sm:$0xff]
  %v1875 = vld [vmem:[#allocation2 + $0x78] sm:$0xff]
  %v1876 = vld [vmem:[#allocation2 + $0x80] sm:$0xff]
  %v1877 = vld [vmem:[#allocation2 + $0x88] sm:$0xff]
  %v1896 = vunpack.c.l.b16 %v1860
  %v1897 = vunpack.c.h.b16 %v1860
  %v1898 = vunpack.c.l.b16 %v1861
  %v1899 = vunpack.c.h.b16 %v1861
  %v1900 = vunpack.c.l.b16 %v1862
  %v1901 = vunpack.c.h.b16 %v1862
  %v1902 = vunpack.c.l.b16 %v1863
  %v1903 = vunpack.c.h.b16 %v1863
  %v1904 = vunpack.c.l.b16 %v1864
  %v1905 = vunpack.c.h.b16 %v1864
  %v1906 = vunpack.c.l.b16 %v1865
  %v1907 = vunpack.c.h.b16 %v1865
  %v1908 = vunpack.c.l.b16 %v1866
  %v1909 = vunpack.c.h.b16 %v1866
  %v1910 = vunpack.c.l.b16 %v1867
  %v1911 = vunpack.c.h.b16 %v1867
  %v1912 = vunpack.c.l.b16 %v1868
  %v1913 = vunpack.c.h.b16 %v1868
  %v1914 = vunpack.c.l.b16 %v1869
  %v1915 = vunpack.c.h.b16 %v1869
  %v1916 = vunpack.c.l.b16 %v1870
  %v1917 = vunpack.c.h.b16 %v1870
  %v1918 = vunpack.c.l.b16 %v1871
  %v1919 = vunpack.c.h.b16 %v1871
  %v1920 = vunpack.c.l.b16 %v1872
  %v1921 = vunpack.c.h.b16 %v1872
  %v1922 = vunpack.c.l.b16 %v1873
  %v1923 = vunpack.c.h.b16 %v1873
  %v1924 = vunpack.c.l.b16 %v1874
  %v1925 = vunpack.c.h.b16 %v1874
  %v1926 = vunpack.c.l.b16 %v1875
  %v1927 = vunpack.c.h.b16 %v1875
  %v1928 = vunpack.c.l.b16 %v1876
  %v1929 = vunpack.c.h.b16 %v1876
  %v1930 = vunpack.c.l.b16 %v1877
  %v1931 = vunpack.c.h.b16 %v1877
  %v1932 = vpack.c.b16 %v1900, %v1896
  %v1933 = vpack.c.b16 %v1901, %v1897
  %v1934 = vpack.c.b16 %v1902, %v1898
  %v1935 = vpack.c.b16 %v1903, %v1899
  %v1936 = vpack.c.b16 %v1908, %v1904
  %v1937 = vpack.c.b16 %v1909, %v1905
  %v1938 = vpack.c.b16 %v1910, %v1906
  %v1939 = vpack.c.b16 %v1911, %v1907
  %v1940 = vpack.c.b16 %v1916, %v1912
  %v1941 = vpack.c.b16 %v1917, %v1913
  %v1942 = vpack.c.b16 %v1918, %v1914
  %v1943 = vpack.c.b16 %v1919, %v1915
  %v1944 = vpack.c.b16 %v1924, %v1920
  %v1945 = vpack.c.b16 %v1925, %v1921
  %v1946 = vpack.c.b16 %v1926, %v1922
  %v1947 = vpack.c.b16 %v1927, %v1923
  %v1948 = vpack.c.b16 %v1928, %v1928
  %v1949 = vpack.c.b16 %v1929, %v1929
  %v1950 = vpack.c.b16 %v1930, %v1930
  %v1951 = vpack.c.b16 %v1931, %v1931
  %v1969 = vsel %vm614, %v1859, 0
  %v1972 = vsel %vm618, %v1948, 0
  %v1975 = vsel %vm618, %v1949, 0
  %v1978 = vsel %vm618, %v1950, 0
  %v1981 = vsel %vm618, %v1951, 0
  %1983 = vmatprep.subr.bf16.mxu0 %v1933
  %1984 = vmatpush1.bf16.msra.mxu0 %v1932
  %1985 = vmatprep.subr.bf16.mxu0 %v1937
  %1986 = vmatpush1.bf16.msra.mxu0 %v1936
  %1987 = vmatprep.subr.bf16.mxu0 %v1941
  %1988 = vmatpush1.bf16.msra.mxu0 %v1940
  %1989 = vmatprep.subr.bf16.mxu0 %v1945
  %1990 = vmatpush1.bf16.msra.mxu0 %v1944
  %1991 = vmatprep.subr.bf16.mxu0 %v1975
  %1992 = vmatpush1.bf16.msra.mxu0 %v1972
  %1993 = vmatprep.subr.bf16.mxu0 0
  %1994 = vmatpush1.bf16.msra.mxu0 0
  %1995 = vmatprep.subr.bf16.mxu0 0
  %1996 = vmatpush1.bf16.msra.mxu0 0
  %1997 = vmatprep.subr.bf16.mxu0 0
  %1998 = vmatpush1.bf16.msra.mxu0 0
  %1999 = vmatprep.subr.bf16.mxu0 0
  %2000 = vmatpush1.bf16.msra.mxu0 0
  %2001 = vmatprep.subr.bf16.mxu0 0
  %2002 = vmatpush1.bf16.msra.mxu0 0
  %2003 = vmatprep.subr.bf16.mxu0 0
  %2004 = vmatpush1.bf16.msra.mxu0 0
  %2005 = vmatprep.subr.bf16.mxu0 0
  %2006 = vmatpush1.bf16.msra.mxu0 0
  %2007 = vmatprep.subr.bf16.mxu0 0
  %2008 = vmatpush1.bf16.msra.mxu0 0
  %2009 = vmatprep.subr.bf16.mxu0 0
  %2010 = vmatpush1.bf16.msra.mxu0 0
  %2011 = vmatprep.subr.bf16.mxu0 0
  %2012 = vmatpush1.bf16.msra.mxu0 0
  %2013 = vmatprep.subr.bf16.mxu0 0
  %2014 = vmatpush1.bf16.msra.mxu0 0
  %2015 = vmatprep.mubr.bf16.mxu0 0
  %2016 = vmatmul.mubr.bf16.gmra.mrb[0].mxu0 %v1969
  %v2017 = vpop.f32.mrb[0].mxu0
  %v2018 = vadd.f32 %v666, %v2017
  %v2019 = vpop.f32.mrb[0].mxu0
  %v2020 = vadd.f32 %v668, %v2019
  %v2021 = vpop.f32.mrb[0].mxu0
  %v2022 = vpop.f32.mrb[0].mxu0
  %2023 = vdwg.mxu0
  %2024 = vmatprep.subr.bf16.mxu0 %v1935
  %2025 = vmatpush1.bf16.msra.mxu0 %v1934
  %2026 = vmatprep.subr.bf16.mxu0 %v1939
  %2027 = vmatpush1.bf16.msra.mxu0 %v1938
  %2028 = vmatprep.subr.bf16.mxu0 %v1943
  %2029 = vmatpush1.bf16.msra.mxu0 %v1942
  %2030 = vmatprep.subr.bf16.mxu0 %v1947
  %2031 = vmatpush1.bf16.msra.mxu0 %v1946
  %2032 = vmatprep.subr.bf16.mxu0 %v1981
  %2033 = vmatpush1.bf16.msra.mxu0 %v1978
  %2034 = vmatprep.subr.bf16.mxu0 0
  %2035 = vmatpush1.bf16.msra.mxu0 0
  %2036 = vmatprep.subr.bf16.mxu0 0
  %2037 = vmatpush1.bf16.msra.mxu0 0
  %2038 = vmatprep.subr.bf16.mxu0 0
  %2039 = vmatpush1.bf16.msra.mxu0 0
  %2040 = vmatprep.subr.bf16.mxu0 0
  %2041 = vmatpush1.bf16.msra.mxu0 0
  %2042 = vmatprep.subr.bf16.mxu0 0
  %2043 = vmatpush1.bf16.msra.mxu0 0
  %2044 = vmatprep.subr.bf16.mxu0 0
  %2045 = vmatpush1.bf16.msra.mxu0 0
  %2046 = vmatprep.subr.bf16.mxu0 0
  %2047 = vmatpush1.bf16.msra.mxu0 0
  %2048 = vmatprep.subr.bf16.mxu0 0
  %2049 = vmatpush1.bf16.msra.mxu0 0
  %2050 = vmatprep.subr.bf16.mxu0 0
  %2051 = vmatpush1.bf16.msra.mxu0 0
  %2052 = vmatprep.subr.bf16.mxu0 0
  %2053 = vmatpush1.bf16.msra.mxu0 0
  %2054 = vmatprep.subr.bf16.mxu0 0
  %2055 = vmatpush1.bf16.msra.mxu0 0
  %2056 = vmatprep.mubr.bf16.mxu0 0
  %2057 = vmatmul.mubr.bf16.gmra.mrb[0].mxu0 %v1969
  %v2058 = vpop.f32.mrb[0].mxu0
  %v2059 = vadd.f32 %v707, %v2058
  %v2060 = vpop.f32.mrb[0].mxu0
  %v2061 = vadd.f32 %v709, %v2060
  %v2062 = vpop.f32.mrb[0].mxu0
  %v2063 = vpop.f32.mrb[0].mxu0
  %2064 = vdwg.mxu0
  %v2065 = vmax.f32 %v2018, 0.0
  %v2066 = vmax.f32 %v2020, 0.0
  %v2067 = vmax.f32 %v2059, 0.0
  %v2068 = vmax.f32 %v2061, 0.0
  %2069 = vrot.lane.b32.xlu0 %v2065, 17
  %v2070 = vpop.permute.xlu0 %2069
  %2071 = vrot.lane.b32.xlu0 %v2066, 17
  %v2072 = vpop.permute.xlu0 %2071
  %2073 = vrot.lane.b32.xlu0 %v2067, 17
  %v2074 = vpop.permute.xlu0 %2073
  %2075 = vrot.lane.b32.xlu0 %v2068, 17
  %v2076 = vpop.permute.xlu0 %2075
  %v2077 = vsel %vm32, %v2074, %v2076
  %v2078 = vsel %vm32, %v2072, %v2074
  %v2079 = vsel %vm32, %v2070, %v2072
  %v2080 = vsel %vm32, %v2076, %v2070
  %v2081 = vld [vmem:[%s1] ss:$8 sm:$0xf]
  %v2083 = vlaneseq
  %v2084 = vshrl.u32 %v2083, 7
  %v2085 = vsub.s32 0, %v2084
  %v2086 = vrot.slane %v2081, %v2085
  %v2087 = vlaneseq
  %v2088 = vshrl.u32 %v2087, 7
  %v2089 = vsub.s32 1, %v2088
  %v2090 = vrot.slane %v2081, %v2089
  %v2091 = vlaneseq
  %v2092 = vshrl.u32 %v2091, 7
  %v2093 = vsub.s32 2, %v2092
  %v2094 = vrot.slane %v2081, %v2093
  %v2095 = vlaneseq
  %v2096 = vshrl.u32 %v2095, 7
  %v2097 = vsub.s32 3, %v2096
  %v2098 = vrot.slane %v2081, %v2097
  %v2103 = vmul.f32 %v2080, %v2086
  %v2104 = vmul.f32 %v2079, %v2090
  %v2105 = vmul.f32 %v2078, %v2094
  %v2106 = vmul.f32 %v2077, %v2098
  %v2107 = vpack.c.bf16 %v2103, %v2103
  %v2108 = vpack.c.bf16 %v2104, %v2104
  %v2109 = vpack.c.bf16 %v2105, %v2105
  %v2110 = vpack.c.bf16 %v2106, %v2106
  %v2115 = vunpack.c.l.b16 %v2107
  %v2116 = vunpack.c.l.b16 %v2108
  %v2117 = vunpack.c.l.b16 %v2109
  %v2118 = vunpack.c.l.b16 %v2110
  %v2119 = vpack.c.b16 %v2116, %v2115
  %v2120 = vpack.c.b16 %v2118, %v2117
  %2123 = vst [vmem:[#allocation2] sm:$0xff] %v2119
  %2124 = vst [vmem:[#allocation2 + $0x8] sm:$0xff] %v2120
  %2125 = vrot.lane.b32.xlu0 %v2065, 16
  %v2126 = vpop.permute.xlu0 %2125
  %2127 = vrot.lane.b32.xlu0 %v2066, 16
  %v2128 = vpop.permute.xlu0 %2127
  %2129 = vrot.lane.b32.xlu0 %v2067, 16
  %v2130 = vpop.permute.xlu0 %2129
  %2131 = vrot.lane.b32.xlu0 %v2068, 16
  %v2132 = vpop.permute.xlu0 %2131
  %v2133 = vsel %vm89, %v2130, %v2132
  %v2134 = vsel %vm89, %v2128, %v2130
  %v2135 = vsel %vm89, %v2126, %v2128
  %v2136 = vsel %vm89, %v2132, %v2126
  %v2137 = vld [vmem:[%s94] ss:$8 sm:$0xf]
  %v2139 = vlaneseq
  %v2140 = vshrl.u32 %v2139, 7
  %v2141 = vsub.s32 0, %v2140
  %v2142 = vrot.slane %v2137, %v2141
  %v2143 = vlaneseq
  %v2144 = vshrl.u32 %v2143, 7
  %v2145 = vsub.s32 1, %v2144
  %v2146 = vrot.slane %v2137, %v2145
  %v2147 = vlaneseq
  %v2148 = vshrl.u32 %v2147, 7
  %v2149 = vsub.s32 2, %v2148
  %v2150 = vrot.slane %v2137, %v2149
  %v2151 = vlaneseq
  %v2152 = vshrl.u32 %v2151, 7
  %v2153 = vsub.s32 3, %v2152
  %v2154 = vrot.slane %v2137, %v2153
  %v2159 = vmul.f32 %v2136, %v2142
  %v2160 = vmul.f32 %v2135, %v2146
  %v2161 = vmul.f32 %v2134, %v2150
  %v2162 = vmul.f32 %v2133, %v2154
  %v2163 = vpack.c.bf16 %v2159, %v2159
  %v2164 = vpack.c.bf16 %v2160, %v2160
  %v2165 = vpack.c.bf16 %v2161, %v2161
  %v2166 = vpack.c.bf16 %v2162, %v2162
  %v2171 = vunpack.c.l.b16 %v2163
  %v2172 = vunpack.c.l.b16 %v2164
  %v2173 = vunpack.c.l.b16 %v2165
  %v2174 = vunpack.c.l.b16 %v2166
  %v2175 = vpack.c.b16 %v2172, %v2171
  %v2176 = vpack.c.b16 %v2174, %v2173
  %2179 = vst [vmem:[#allocation2 + $0x10] sm:$0xff] %v2175
  %2180 = vst [vmem:[#allocation2 + $0x18] sm:$0xff] %v2176
  %2181 = vrot.lane.b32.xlu0 %v2065, 15
  %v2182 = vpop.permute.xlu0 %2181
  %2183 = vrot.lane.b32.xlu0 %v2066, 15
  %v2184 = vpop.permute.xlu0 %2183
  %2185 = vrot.lane.b32.xlu0 %v2067, 15
  %v2186 = vpop.permute.xlu0 %2185
  %2187 = vrot.lane.b32.xlu0 %v2068, 15
  %v2188 = vpop.permute.xlu0 %2187
  %v2189 = vsel %vm147, %v2186, %v2188
  %v2190 = vsel %vm147, %v2184, %v2186
  %v2191 = vsel %vm147, %v2182, %v2184
  %v2192 = vsel %vm147, %v2188, %v2182
  %v2193 = vld [vmem:[%s152] ss:$8 sm:$0xf]
  %v2195 = vlaneseq
  %v2196 = vshrl.u32 %v2195, 7
  %v2197 = vsub.s32 0, %v2196
  %v2198 = vrot.slane %v2193, %v2197
  %v2199 = vlaneseq
  %v2200 = vshrl.u32 %v2199, 7
  %v2201 = vsub.s32 1, %v2200
  %v2202 = vrot.slane %v2193, %v2201
  %v2203 = vlaneseq
  %v2204 = vshrl.u32 %v2203, 7
  %v2205 = vsub.s32 2, %v2204
  %v2206 = vrot.slane %v2193, %v2205
  %v2207 = vlaneseq
  %v2208 = vshrl.u32 %v2207, 7
  %v2209 = vsub.s32 3, %v2208
  %v2210 = vrot.slane %v2193, %v2209
  %v2215 = vmul.f32 %v2192, %v2198
  %v2216 = vmul.f32 %v2191, %v2202
  %v2217 = vmul.f32 %v2190, %v2206
  %v2218 = vmul.f32 %v2189, %v2210
  %v2219 = vpack.c.bf16 %v2215, %v2215
  %v2220 = vpack.c.bf16 %v2216, %v2216
  %v2221 = vpack.c.bf16 %v2217, %v2217
  %v2222 = vpack.c.bf16 %v2218, %v2218
  %v2227 = vunpack.c.l.b16 %v2219
  %v2228 = vunpack.c.l.b16 %v2220
  %v2229 = vunpack.c.l.b16 %v2221
  %v2230 = vunpack.c.l.b16 %v2222
  %v2231 = vpack.c.b16 %v2228, %v2227
  %v2232 = vpack.c.b16 %v2230, %v2229
  %2235 = vst [vmem:[#allocation2 + $0x20] sm:$0xff] %v2231
  %2236 = vst [vmem:[#allocation2 + $0x28] sm:$0xff] %v2232
  %2237 = vrot.lane.b32.xlu0 %v2065, 1
  %v2238 = vpop.permute.xlu0 %2237
  %2239 = vrot.lane.b32.xlu0 %v2066, 1
  %v2240 = vpop.permute.xlu0 %2239
  %2241 = vrot.lane.b32.xlu0 %v2067, 1
  %v2242 = vpop.permute.xlu0 %2241
  %2243 = vrot.lane.b32.xlu0 %v2068, 1
  %v2244 = vpop.permute.xlu0 %2243
  %v2245 = vsel %vm205, %v2242, %v2244
  %v2246 = vsel %vm205, %v2240, %v2242
  %v2247 = vsel %vm205, %v2238, %v2240
  %v2248 = vsel %vm205, %v2244, %v2238
  %v2249 = vld [vmem:[%s210] ss:$8 sm:$0xf]
  %v2251 = vlaneseq
  %v2252 = vshrl.u32 %v2251, 7
  %v2253 = vsub.s32 0, %v2252
  %v2254 = vrot.slane %v2249, %v2253
  %v2255 = vlaneseq
  %v2256 = vshrl.u32 %v2255, 7
  %v2257 = vsub.s32 1, %v2256
  %v2258 = vrot.slane %v2249, %v2257
  %v2259 = vlaneseq
  %v2260 = vshrl.u32 %v2259, 7
  %v2261 = vsub.s32 2, %v2260
  %v2262 = vrot.slane %v2249, %v2261
  %v2263 = vlaneseq
  %v2264 = vshrl.u32 %v2263, 7
  %v2265 = vsub.s32 3, %v2264
  %v2266 = vrot.slane %v2249, %v2265
  %v2271 = vmul.f32 %v2248, %v2254
  %v2272 = vmul.f32 %v2247, %v2258
  %v2273 = vmul.f32 %v2246, %v2262
  %v2274 = vmul.f32 %v2245, %v2266
  %v2275 = vpack.c.bf16 %v2271, %v2271
  %v2276 = vpack.c.bf16 %v2272, %v2272
  %v2277 = vpack.c.bf16 %v2273, %v2273
  %v2278 = vpack.c.bf16 %v2274, %v2274
  %v2283 = vunpack.c.l.b16 %v2275
  %v2284 = vunpack.c.l.b16 %v2276
  %v2285 = vunpack.c.l.b16 %v2277
  %v2286 = vunpack.c.l.b16 %v2278
  %v2287 = vpack.c.b16 %v2284, %v2283
  %v2288 = vpack.c.b16 %v2286, %v2285
  %2291 = vst [vmem:[#allocation2 + $0x30] sm:$0xff] %v2287
  %2292 = vst [vmem:[#allocation2 + $0x38] sm:$0xff] %v2288
  %v2293 = vpack.c.bf16 %v2065, %v2065
  %v2294 = vpack.c.bf16 %v2066, %v2066
  %v2295 = vpack.c.bf16 %v2067, %v2067
  %v2296 = vpack.c.bf16 %v2068, %v2068
  %v2301 = vunpack.c.l.b16 %v2293
  %v2302 = vunpack.c.l.b16 %v2294
  %v2303 = vunpack.c.l.b16 %v2295
  %v2304 = vunpack.c.l.b16 %v2296
  %v2305 = vpack.c.b16 %v2302, %v2301
  %v2306 = vpack.c.b16 %v2304, %v2303
  %2309 = vst [vmem:[#allocation2 + $0x40] sm:$0xff] %v2305
  %2310 = vst [vmem:[#allocation2 + $0x48] sm:$0xff] %v2306
  %2311 = vrot.lane.b32.xlu0 %v2065, 127
  %v2312 = vpop.permute.xlu0 %2311
  %2313 = vrot.lane.b32.xlu0 %v2066, 127
  %v2314 = vpop.permute.xlu0 %2313
  %2315 = vrot.lane.b32.xlu0 %v2067, 127
  %v2316 = vpop.permute.xlu0 %2315
  %2317 = vrot.lane.b32.xlu0 %v2068, 127
  %v2318 = vpop.permute.xlu0 %2317
  %v2319 = vsel %vm281, %v2316, %v2318
  %v2320 = vsel %vm281, %v2314, %v2316
  %v2321 = vsel %vm281, %v2312, %v2314
  %v2322 = vsel %vm281, %v2318, %v2312
  %v2323 = vld [vmem:[%s286] ss:$8 sm:$0xf]
  %v2325 = vlaneseq
  %v2326 = vshrl.u32 %v2325, 7
  %v2327 = vsub.s32 0, %v2326
  %v2328 = vrot.slane %v2323, %v2327
  %v2329 = vlaneseq
  %v2330 = vshrl.u32 %v2329, 7
  %v2331 = vsub.s32 1, %v2330
  %v2332 = vrot.slane %v2323, %v2331
  %v2333 = vlaneseq
  %v2334 = vshrl.u32 %v2333, 7
  %v2335 = vsub.s32 2, %v2334
  %v2336 = vrot.slane %v2323, %v2335
  %v2337 = vlaneseq
  %v2338 = vshrl.u32 %v2337, 7
  %v2339 = vsub.s32 3, %v2338
  %v2340 = vrot.slane %v2323, %v2339
  %v2345 = vmul.f32 %v2321, %v2328
  %v2346 = vmul.f32 %v2320, %v2332
  %v2347 = vmul.f32 %v2319, %v2336
  %v2348 = vmul.f32 %v2322, %v2340
  %v2349 = vpack.c.bf16 %v2345, %v2345
  %v2350 = vpack.c.bf16 %v2346, %v2346
  %v2351 = vpack.c.bf16 %v2347, %v2347
  %v2352 = vpack.c.bf16 %v2348, %v2348
  %v2357 = vunpack.c.l.b16 %v2349
  %v2358 = vunpack.c.l.b16 %v2350
  %v2359 = vunpack.c.l.b16 %v2351
  %v2360 = vunpack.c.l.b16 %v2352
  %v2361 = vpack.c.b16 %v2358, %v2357
  %v2362 = vpack.c.b16 %v2360, %v2359
  %2365 = vst [vmem:[#allocation2 + $0x50] sm:$0xff] %v2361
  %2366 = vst [vmem:[#allocation2 + $0x58] sm:$0xff] %v2362
  %2367 = vrot.lane.b32.xlu0 %v2065, 113
  %v2368 = vpop.permute.xlu0 %2367
  %2369 = vrot.lane.b32.xlu0 %v2066, 113
  %v2370 = vpop.permute.xlu0 %2369
  %2371 = vrot.lane.b32.xlu0 %v2067, 113
  %v2372 = vpop.permute.xlu0 %2371
  %2373 = vrot.lane.b32.xlu0 %v2068, 113
  %v2374 = vpop.permute.xlu0 %2373
  %v2375 = vsel %vm339, %v2372, %v2374
  %v2376 = vsel %vm339, %v2370, %v2372
  %v2377 = vsel %vm339, %v2368, %v2370
  %v2378 = vsel %vm339, %v2374, %v2368
  %v2379 = vld [vmem:[%s344] ss:$8 sm:$0xf]
  %v2381 = vlaneseq
  %v2382 = vshrl.u32 %v2381, 7
  %v2383 = vsub.s32 0, %v2382
  %v2384 = vrot.slane %v2379, %v2383
  %v2385 = vlaneseq
  %v2386 = vshrl.u32 %v2385, 7
  %v2387 = vsub.s32 1, %v2386
  %v2388 = vrot.slane %v2379, %v2387
  %v2389 = vlaneseq
  %v2390 = vshrl.u32 %v2389, 7
  %v2391 = vsub.s32 2, %v2390
  %v2392 = vrot.slane %v2379, %v2391
  %v2393 = vlaneseq
  %v2394 = vshrl.u32 %v2393, 7
  %v2395 = vsub.s32 3, %v2394
  %v2396 = vrot.slane %v2379, %v2395
  %v2401 = vmul.f32 %v2377, %v2384
  %v2402 = vmul.f32 %v2376, %v2388
  %v2403 = vmul.f32 %v2375, %v2392
  %v2404 = vmul.f32 %v2378, %v2396
  %v2405 = vpack.c.bf16 %v2401, %v2401
  %v2406 = vpack.c.bf16 %v2402, %v2402
  %v2407 = vpack.c.bf16 %v2403, %v2403
  %v2408 = vpack.c.bf16 %v2404, %v2404
  %v2413 = vunpack.c.l.b16 %v2405
  %v2414 = vunpack.c.l.b16 %v2406
  %v2415 = vunpack.c.l.b16 %v2407
  %v2416 = vunpack.c.l.b16 %v2408
  %v2417 = vpack.c.b16 %v2414, %v2413
  %v2418 = vpack.c.b16 %v2416, %v2415
  %2421 = vst [vmem:[#allocation2 + $0x60] sm:$0xff] %v2417
  %2422 = vst [vmem:[#allocation2 + $0x68] sm:$0xff] %v2418
  %2423 = vrot.lane.b32.xlu0 %v2065, 112
  %v2424 = vpop.permute.xlu0 %2423
  %2425 = vrot.lane.b32.xlu0 %v2066, 112
  %v2426 = vpop.permute.xlu0 %2425
  %2427 = vrot.lane.b32.xlu0 %v2067, 112
  %v2428 = vpop.permute.xlu0 %2427
  %2429 = vrot.lane.b32.xlu0 %v2068, 112
  %v2430 = vpop.permute.xlu0 %2429
  %v2431 = vsel %vm397, %v2428, %v2430
  %v2432 = vsel %vm397, %v2426, %v2428
  %v2433 = vsel %vm397, %v2424, %v2426
  %v2434 = vsel %vm397, %v2430, %v2424
  %v2435 = vld [vmem:[%s402] ss:$8 sm:$0xf]
  %v2437 = vlaneseq
  %v2438 = vshrl.u32 %v2437, 7
  %v2439 = vsub.s32 0, %v2438
  %v2440 = vrot.slane %v2435, %v2439
  %v2441 = vlaneseq
  %v2442 = vshrl.u32 %v2441, 7
  %v2443 = vsub.s32 1, %v2442
  %v2444 = vrot.slane %v2435, %v2443
  %v2445 = vlaneseq
  %v2446 = vshrl.u32 %v2445, 7
  %v2447 = vsub.s32 2, %v2446
  %v2448 = vrot.slane %v2435, %v2447
  %v2449 = vlaneseq
  %v2450 = vshrl.u32 %v2449, 7
  %v2451 = vsub.s32 3, %v2450
  %v2452 = vrot.slane %v2435, %v2451
  %v2457 = vmul.f32 %v2433, %v2440
  %v2458 = vmul.f32 %v2432, %v2444
  %v2459 = vmul.f32 %v2431, %v2448
  %v2460 = vmul.f32 %v2434, %v2452
  %v2461 = vpack.c.bf16 %v2457, %v2457
  %v2462 = vpack.c.bf16 %v2458, %v2458
  %v2463 = vpack.c.bf16 %v2459, %v2459
  %v2464 = vpack.c.bf16 %v2460, %v2460
  %v2469 = vunpack.c.l.b16 %v2461
  %v2470 = vunpack.c.l.b16 %v2462
  %v2471 = vunpack.c.l.b16 %v2463
  %v2472 = vunpack.c.l.b16 %v2464
  %v2473 = vpack.c.b16 %v2470, %v2469
  %v2474 = vpack.c.b16 %v2472, %v2471
  %2477 = vst [vmem:[#allocation2 + $0x70] sm:$0xff] %v2473
  %2478 = vst [vmem:[#allocation2 + $0x78] sm:$0xff] %v2474
  %2479 = vrot.lane.b32.xlu0 %v2065, 111
  %v2480 = vpop.permute.xlu0 %2479
  %2481 = vrot.lane.b32.xlu0 %v2066, 111
  %v2482 = vpop.permute.xlu0 %2481
  %2483 = vrot.lane.b32.xlu0 %v2067, 111
  %v2484 = vpop.permute.xlu0 %2483
  %2485 = vrot.lane.b32.xlu0 %v2068, 111
  %v2486 = vpop.permute.xlu0 %2485
  %v2487 = vsel %vm455, %v2484, %v2486
  %v2488 = vsel %vm455, %v2482, %v2484
  %v2489 = vsel %vm455, %v2480, %v2482
  %v2490 = vsel %vm455, %v2486, %v2480
  %v2491 = vld [vmem:[%s460] ss:$8 sm:$0xf]
  %v2493 = vlaneseq
  %v2494 = vshrl.u32 %v2493, 7
  %v2495 = vsub.s32 0, %v2494
  %v2496 = vrot.slane %v2491, %v2495
  %v2497 = vlaneseq
  %v2498 = vshrl.u32 %v2497, 7
  %v2499 = vsub.s32 1, %v2498
  %v2500 = vrot.slane %v2491, %v2499
  %v2501 = vlaneseq
  %v2502 = vshrl.u32 %v2501, 7
  %v2503 = vsub.s32 2, %v2502
  %v2504 = vrot.slane %v2491, %v2503
  %v2505 = vlaneseq
  %v2506 = vshrl.u32 %v2505, 7
  %v2507 = vsub.s32 3, %v2506
  %v2508 = vrot.slane %v2491, %v2507
  %v2513 = vmul.f32 %v2489, %v2496
  %v2514 = vmul.f32 %v2488, %v2500
  %v2515 = vmul.f32 %v2487, %v2504
  %v2516 = vmul.f32 %v2490, %v2508
  %v2517 = vpack.c.bf16 %v2513, %v2513
  %v2518 = vpack.c.bf16 %v2514, %v2514
  %v2519 = vpack.c.bf16 %v2515, %v2515
  %v2520 = vpack.c.bf16 %v2516, %v2516
  %v2525 = vunpack.c.l.b16 %v2517
  %v2526 = vunpack.c.l.b16 %v2518
  %v2527 = vunpack.c.l.b16 %v2519
  %v2528 = vunpack.c.l.b16 %v2520
  %v2529 = vpack.c.b16 %v2526, %v2525
  %v2530 = vpack.c.b16 %v2528, %v2527
  %2533 = vst [vmem:[#allocation2 + $0x80] sm:$0xff] %v2529
  %2534 = vst [vmem:[#allocation2 + $0x88] sm:$0xff] %v2530
  %v2535 = vld [vmem:[%s3] sm:$0xf]
  %v2536 = vld [vmem:[#allocation2] sm:$0xff]
  %v2537 = vld [vmem:[#allocation2 + $0x8] sm:$0xff]
  %v2538 = vld [vmem:[#allocation2 + $0x10] sm:$0xff]
  %v2539 = vld [vmem:[#allocation2 + $0x18] sm:$0xff]
  %v2540 = vld [vmem:[#allocation2 + $0x20] sm:$0xff]
  %v2541 = vld [vmem:[#allocation2 + $0x28] sm:$0xff]
  %v2542 = vld [vmem:[#allocation2 + $0x30] sm:$0xff]
  %v2543 = vld [vmem:[#allocation2 + $0x38] sm:$0xff]
  %v2544 = vld [vmem:[#allocation2 + $0x40] sm:$0xff]
  %v2545 = vld [vmem:[#allocation2 + $0x48] sm:$0xff]
  %v2546 = vld [vmem:[#allocation2 + $0x50] sm:$0xff]
  %v2547 = vld [vmem:[#allocation2 + $0x58] sm:$0xff]
  %v2548 = vld [vmem:[#allocation2 + $0x60] sm:$0xff]
  %v2549 = vld [vmem:[#allocation2 + $0x68] sm:$0xff]
  %v2550 = vld [vmem:[#allocation2 + $0x70] sm:$0xff]
  %v2551 = vld [vmem:[#allocation2 + $0x78] sm:$0xff]
  %v2552 = vld [vmem:[#allocation2 + $0x80] sm:$0xff]
  %v2553 = vld [vmem:[#allocation2 + $0x88] sm:$0xff]
  %v2572 = vunpack.c.l.b16 %v2536
  %v2573 = vunpack.c.h.b16 %v2536
  %v2574 = vunpack.c.l.b16 %v2537
  %v2575 = vunpack.c.h.b16 %v2537
  %v2576 = vunpack.c.l.b16 %v2538
  %v2577 = vunpack.c.h.b16 %v2538
  %v2578 = vunpack.c.l.b16 %v2539
  %v2579 = vunpack.c.h.b16 %v2539
  %v2580 = vunpack.c.l.b16 %v2540
  %v2581 = vunpack.c.h.b16 %v2540
  %v2582 = vunpack.c.l.b16 %v2541
  %v2583 = vunpack.c.h.b16 %v2541
  %v2584 = vunpack.c.l.b16 %v2542
  %v2585 = vunpack.c.h.b16 %v2542
  %v2586 = vunpack.c.l.b16 %v2543
  %v2587 = vunpack.c.h.b16 %v2543
  %v2588 = vunpack.c.l.b16 %v2544
  %v2589 = vunpack.c.h.b16 %v2544
  %v2590 = vunpack.c.l.b16 %v2545
  %v2591 = vunpack.c.h.b16 %v2545
  %v2592 = vunpack.c.l.b16 %v2546
  %v2593 = vunpack.c.h.b16 %v2546
  %v2594 = vunpack.c.l.b16 %v2547
  %v2595 = vunpack.c.h.b16 %v2547
  %v2596 = vunpack.c.l.b16 %v2548
  %v2597 = vunpack.c.h.b16 %v2548
  %v2598 = vunpack.c.l.b16 %v2549
  %v2599 = vunpack.c.h.b16 %v2549
  %v2600 = vunpack.c.l.b16 %v2550
  %v2601 = vunpack.c.h.b16 %v2550
  %v2602 = vunpack.c.l.b16 %v2551
  %v2603 = vunpack.c.h.b16 %v2551
  %v2604 = vunpack.c.l.b16 %v2552
  %v2605 = vunpack.c.h.b16 %v2552
  %v2606 = vunpack.c.l.b16 %v2553
  %v2607 = vunpack.c.h.b16 %v2553
  %v2608 = vpack.c.b16 %v2576, %v2572
  %v2609 = vpack.c.b16 %v2577, %v2573
  %v2610 = vpack.c.b16 %v2578, %v2574
  %v2611 = vpack.c.b16 %v2579, %v2575
  %v2612 = vpack.c.b16 %v2584, %v2580
  %v2613 = vpack.c.b16 %v2585, %v2581
  %v2614 = vpack.c.b16 %v2586, %v2582
  %v2615 = vpack.c.b16 %v2587, %v2583
  %v2616 = vpack.c.b16 %v2592, %v2588
  %v2617 = vpack.c.b16 %v2593, %v2589
  %v2618 = vpack.c.b16 %v2594, %v2590
  %v2619 = vpack.c.b16 %v2595, %v2591
  %v2620 = vpack.c.b16 %v2600, %v2596
  %v2621 = vpack.c.b16 %v2601, %v2597
  %v2622 = vpack.c.b16 %v2602, %v2598
  %v2623 = vpack.c.b16 %v2603, %v2599
  %v2624 = vpack.c.b16 %v2604, %v2604
  %v2625 = vpack.c.b16 %v2605, %v2605
  %v2626 = vpack.c.b16 %v2606, %v2606
  %v2627 = vpack.c.b16 %v2607, %v2607
  %v2645 = vsel %vm614, %v2535, 0
  %v2648 = vsel %vm618, %v2624, 0
  %v2651 = vsel %vm618, %v2625, 0
  %v2654 = vsel %vm618, %v2626, 0
  %v2657 = vsel %vm618, %v2627, 0
  %2659 = vmatprep.subr.bf16.mxu0 %v2609
  %2660 = vmatpush1.bf16.msra.mxu0 %v2608
  %2661 = vmatprep.subr.bf16.mxu0 %v2613
  %2662 = vmatpush1.bf16.msra.mxu0 %v2612
  %2663 = vmatprep.subr.bf16.mxu0 %v2617
  %2664 = vmatpush1.bf16.msra.mxu0 %v2616
  %2665 = vmatprep.subr.bf16.mxu0 %v2621
  %2666 = vmatpush1.bf16.msra.mxu0 %v2620
  %2667 = vmatprep.subr.bf16.mxu0 %v2651
  %2668 = vmatpush1.bf16.msra.mxu0 %v2648
  %2669 = vmatprep.subr.bf16.mxu0 0
  %2670 = vmatpush1.bf16.msra.mxu0 0
  %2671 = vmatprep.subr.bf16.mxu0 0
  %2672 = vmatpush1.bf16.msra.mxu0 0
  %2673 = vmatprep.subr.bf16.mxu0 0
  %2674 = vmatpush1.bf16.msra.mxu0 0
  %2675 = vmatprep.subr.bf16.mxu0 0
  %2676 = vmatpush1.bf16.msra.mxu0 0
  %2677 = vmatprep.subr.bf16.mxu0 0
  %2678 = vmatpush1.bf16.msra.mxu0 0
  %2679 = vmatprep.subr.bf16.mxu0 0
  %2680 = vmatpush1.bf16.msra.mxu0 0
  %2681 = vmatprep.subr.bf16.mxu0 0
  %2682 = vmatpush1.bf16.msra.mxu0 0
  %2683 = vmatprep.subr.bf16.mxu0 0
  %2684 = vmatpush1.bf16.msra.mxu0 0
  %2685 = vmatprep.subr.bf16.mxu0 0
  %2686 = vmatpush1.bf16.msra.mxu0 0
  %2687 = vmatprep.subr.bf16.mxu0 0
  %2688 = vmatpush1.bf16.msra.mxu0 0
  %2689 = vmatprep.subr.bf16.mxu0 0
  %2690 = vmatpush1.bf16.msra.mxu0 0
  %2691 = vmatprep.mubr.bf16.mxu0 0
  %2692 = vmatmul.mubr.bf16.gmra.mrb[0].mxu0 %v2645
  %v2693 = vpop.f32.mrb[0].mxu0
  %v2694 = vadd.f32 %v666, %v2693
  %v2695 = vpop.f32.mrb[0].mxu0
  %v2696 = vadd.f32 %v668, %v2695
  %v2697 = vpop.f32.mrb[0].mxu0
  %v2698 = vpop.f32.mrb[0].mxu0
  %2699 = vdwg.mxu0
  %2700 = vmatprep.subr.bf16.mxu0 %v2611
  %2701 = vmatpush1.bf16.msra.mxu0 %v2610
  %2702 = vmatprep.subr.bf16.mxu0 %v2615
  %2703 = vmatpush1.bf16.msra.mxu0 %v2614
  %2704 = vmatprep.subr.bf16.mxu0 %v2619
  %2705 = vmatpush1.bf16.msra.mxu0 %v2618
  %2706 = vmatprep.subr.bf16.mxu0 %v2623
  %2707 = vmatpush1.bf16.msra.mxu0 %v2622
  %2708 = vmatprep.subr.bf16.mxu0 %v2657
  %2709 = vmatpush1.bf16.msra.mxu0 %v2654
  %2710 = vmatprep.subr.bf16.mxu0 0
  %2711 = vmatpush1.bf16.msra.mxu0 0
  %2712 = vmatprep.subr.bf16.mxu0 0
  %2713 = vmatpush1.bf16.msra.mxu0 0
  %2714 = vmatprep.subr.bf16.mxu0 0
  %2715 = vmatpush1.bf16.msra.mxu0 0
  %2716 = vmatprep.subr.bf16.mxu0 0
  %2717 = vmatpush1.bf16.msra.mxu0 0
  %2718 = vmatprep.subr.bf16.mxu0 0
  %2719 = vmatpush1.bf16.msra.mxu0 0
  %2720 = vmatprep.subr.bf16.mxu0 0
  %2721 = vmatpush1.bf16.msra.mxu0 0
  %2722 = vmatprep.subr.bf16.mxu0 0
  %2723 = vmatpush1.bf16.msra.mxu0 0
  %2724 = vmatprep.subr.bf16.mxu0 0
  %2725 = vmatpush1.bf16.msra.mxu0 0
  %2726 = vmatprep.subr.bf16.mxu0 0
  %2727 = vmatpush1.bf16.msra.mxu0 0
  %2728 = vmatprep.subr.bf16.mxu0 0
  %2729 = vmatpush1.bf16.msra.mxu0 0
  %2730 = vmatprep.subr.bf16.mxu0 0
  %2731 = vmatpush1.bf16.msra.mxu0 0
  %2732 = vmatprep.mubr.bf16.mxu0 0
  %2733 = vmatmul.mubr.bf16.gmra.mrb[0].mxu0 %v2645
  %v2734 = vpop.f32.mrb[0].mxu0
  %v2735 = vadd.f32 %v707, %v2734
  %v2736 = vpop.f32.mrb[0].mxu0
  %v2737 = vadd.f32 %v709, %v2736
  %v2738 = vpop.f32.mrb[0].mxu0
  %v2739 = vpop.f32.mrb[0].mxu0
  %2740 = vdwg.mxu0
  %v2741 = vmax.f32 %v2694, 0.0
  %v2742 = vmax.f32 %v2696, 0.0
  %v2743 = vmax.f32 %v2735, 0.0
  %v2744 = vmax.f32 %v2737, 0.0
  %2745 = vrot.lane.b32.xlu0 %v2741, 17
  %v2746 = vpop.permute.xlu0 %2745
  %2747 = vrot.lane.b32.xlu0 %v2742, 17
  %v2748 = vpop.permute.xlu0 %2747
  %2749 = vrot.lane.b32.xlu0 %v2743, 17
  %v2750 = vpop.permute.xlu0 %2749
  %2751 = vrot.lane.b32.xlu0 %v2744, 17
  %v2752 = vpop.permute.xlu0 %2751
  %v2753 = vsel %vm32, %v2750, %v2752
  %v2754 = vsel %vm32, %v2748, %v2750
  %v2755 = vsel %vm32, %v2746, %v2748
  %v2756 = vsel %vm32, %v2752, %v2746
  %v2757 = vld [vmem:[%s1] ss:$8 sm:$0xf]
  %v2759 = vlaneseq
  %v2760 = vshrl.u32 %v2759, 7
  %v2761 = vsub.s32 0, %v2760
  %v2762 = vrot.slane %v2757, %v2761
  %v2763 = vlaneseq
  %v2764 = vshrl.u32 %v2763, 7
  %v2765 = vsub.s32 1, %v2764
  %v2766 = vrot.slane %v2757, %v2765
  %v2767 = vlaneseq
  %v2768 = vshrl.u32 %v2767, 7
  %v2769 = vsub.s32 2, %v2768
  %v2770 = vrot.slane %v2757, %v2769
  %v2771 = vlaneseq
  %v2772 = vshrl.u32 %v2771, 7
  %v2773 = vsub.s32 3, %v2772
  %v2774 = vrot.slane %v2757, %v2773
  %v2779 = vmul.f32 %v2756, %v2762
  %v2780 = vmul.f32 %v2755, %v2766
  %v2781 = vmul.f32 %v2754, %v2770
  %v2782 = vmul.f32 %v2753, %v2774
  %v2783 = vpack.c.bf16 %v2779, %v2779
  %v2784 = vpack.c.bf16 %v2780, %v2780
  %v2785 = vpack.c.bf16 %v2781, %v2781
  %v2786 = vpack.c.bf16 %v2782, %v2782
  %v2791 = vunpack.c.l.b16 %v2783
  %v2792 = vunpack.c.l.b16 %v2784
  %v2793 = vunpack.c.l.b16 %v2785
  %v2794 = vunpack.c.l.b16 %v2786
  %v2795 = vpack.c.b16 %v2792, %v2791
  %v2796 = vpack.c.b16 %v2794, %v2793
  %2799 = vst [vmem:[#allocation2] sm:$0xff] %v2795
  %2800 = vst [vmem:[#allocation2 + $0x8] sm:$0xff] %v2796
  %2801 = vrot.lane.b32.xlu0 %v2741, 16
  %v2802 = vpop.permute.xlu0 %2801
  %2803 = vrot.lane.b32.xlu0 %v2742, 16
  %v2804 = vpop.permute.xlu0 %2803
  %2805 = vrot.lane.b32.xlu0 %v2743, 16
  %v2806 = vpop.permute.xlu0 %2805
  %2807 = vrot.lane.b32.xlu0 %v2744, 16
  %v2808 = vpop.permute.xlu0 %2807
  %v2809 = vsel %vm89, %v2806, %v2808
  %v2810 = vsel %vm89, %v2804, %v2806
  %v2811 = vsel %vm89, %v2802, %v2804
  %v2812 = vsel %vm89, %v2808, %v2802
  %v2813 = vld [vmem:[%s94] ss:$8 sm:$0xf]
  %v2815 = vlaneseq
  %v2816 = vshrl.u32 %v2815, 7
  %v2817 = vsub.s32 0, %v2816
  %v2818 = vrot.slane %v2813, %v2817
  %v2819 = vlaneseq
  %v2820 = vshrl.u32 %v2819, 7
  %v2821 = vsub.s32 1, %v2820
  %v2822 = vrot.slane %v2813, %v2821
  %v2823 = vlaneseq
  %v2824 = vshrl.u32 %v2823, 7
  %v2825 = vsub.s32 2, %v2824
  %v2826 = vrot.slane %v2813, %v2825
  %v2827 = vlaneseq
  %v2828 = vshrl.u32 %v2827, 7
  %v2829 = vsub.s32 3, %v2828
  %v2830 = vrot.slane %v2813, %v2829
  %v2835 = vmul.f32 %v2812, %v2818
  %v2836 = vmul.f32 %v2811, %v2822
  %v2837 = vmul.f32 %v2810, %v2826
  %v2838 = vmul.f32 %v2809, %v2830
  %v2839 = vpack.c.bf16 %v2835, %v2835
  %v2840 = vpack.c.bf16 %v2836, %v2836
  %v2841 = vpack.c.bf16 %v2837, %v2837
  %v2842 = vpack.c.bf16 %v2838, %v2838
  %v2847 = vunpack.c.l.b16 %v2839
  %v2848 = vunpack.c.l.b16 %v2840
  %v2849 = vunpack.c.l.b16 %v2841
  %v2850 = vunpack.c.l.b16 %v2842
  %v2851 = vpack.c.b16 %v2848, %v2847
  %v2852 = vpack.c.b16 %v2850, %v2849
  %2855 = vst [vmem:[#allocation2 + $0x10] sm:$0xff] %v2851
  %2856 = vst [vmem:[#allocation2 + $0x18] sm:$0xff] %v2852
  %2857 = vrot.lane.b32.xlu0 %v2741, 15
  %v2858 = vpop.permute.xlu0 %2857
  %2859 = vrot.lane.b32.xlu0 %v2742, 15
  %v2860 = vpop.permute.xlu0 %2859
  %2861 = vrot.lane.b32.xlu0 %v2743, 15
  %v2862 = vpop.permute.xlu0 %2861
  %2863 = vrot.lane.b32.xlu0 %v2744, 15
  %v2864 = vpop.permute.xlu0 %2863
  %v2865 = vsel %vm147, %v2862, %v2864
  %v2866 = vsel %vm147, %v2860, %v2862
  %v2867 = vsel %vm147, %v2858, %v2860
  %v2868 = vsel %vm147, %v2864, %v2858
  %v2869 = vld [vmem:[%s152] ss:$8 sm:$0xf]
  %v2871 = vlaneseq
  %v2872 = vshrl.u32 %v2871, 7
  %v2873 = vsub.s32 0, %v2872
  %v2874 = vrot.slane %v2869, %v2873
  %v2875 = vlaneseq
  %v2876 = vshrl.u32 %v2875, 7
  %v2877 = vsub.s32 1, %v2876
  %v2878 = vrot.slane %v2869, %v2877
  %v2879 = vlaneseq
  %v2880 = vshrl.u32 %v2879, 7
  %v2881 = vsub.s32 2, %v2880
  %v2882 = vrot.slane %v2869, %v2881
  %v2883 = vlaneseq
  %v2884 = vshrl.u32 %v2883, 7
  %v2885 = vsub.s32 3, %v2884
  %v2886 = vrot.slane %v2869, %v2885
  %v2891 = vmul.f32 %v2868, %v2874
  %v2892 = vmul.f32 %v2867, %v2878
  %v2893 = vmul.f32 %v2866, %v2882
  %v2894 = vmul.f32 %v2865, %v2886
  %v2895 = vpack.c.bf16 %v2891, %v2891
  %v2896 = vpack.c.bf16 %v2892, %v2892
  %v2897 = vpack.c.bf16 %v2893, %v2893
  %v2898 = vpack.c.bf16 %v2894, %v2894
  %v2903 = vunpack.c.l.b16 %v2895
  %v2904 = vunpack.c.l.b16 %v2896
  %v2905 = vunpack.c.l.b16 %v2897
  %v2906 = vunpack.c.l.b16 %v2898
  %v2907 = vpack.c.b16 %v2904, %v2903
  %v2908 = vpack.c.b16 %v2906, %v2905
  %2911 = vst [vmem:[#allocation2 + $0x20] sm:$0xff] %v2907
  %2912 = vst [vmem:[#allocation2 + $0x28] sm:$0xff] %v2908
  %2913 = vrot.lane.b32.xlu0 %v2741, 1
  %v2914 = vpop.permute.xlu0 %2913
  %2915 = vrot.lane.b32.xlu0 %v2742, 1
  %v2916 = vpop.permute.xlu0 %2915
  %2917 = vrot.lane.b32.xlu0 %v2743, 1
  %v2918 = vpop.permute.xlu0 %2917
  %2919 = vrot.lane.b32.xlu0 %v2744, 1
  %v2920 = vpop.permute.xlu0 %2919
  %v2921 = vsel %vm205, %v2918, %v2920
  %v2922 = vsel %vm205, %v2916, %v2918
  %v2923 = vsel %vm205, %v2914, %v2916
  %v2924 = vsel %vm205, %v2920, %v2914
  %v2925 = vld [vmem:[%s210] ss:$8 sm:$0xf]
  %v2927 = vlaneseq
  %v2928 = vshrl.u32 %v2927, 7
  %v2929 = vsub.s32 0, %v2928
  %v2930 = vrot.slane %v2925, %v2929
  %v2931 = vlaneseq
  %v2932 = vshrl.u32 %v2931, 7
  %v2933 = vsub.s32 1, %v2932
  %v2934 = vrot.slane %v2925, %v2933
  %v2935 = vlaneseq
  %v2936 = vshrl.u32 %v2935, 7
  %v2937 = vsub.s32 2, %v2936
  %v2938 = vrot.slane %v2925, %v2937
  %v2939 = vlaneseq
  %v2940 = vshrl.u32 %v2939, 7
  %v2941 = vsub.s32 3, %v2940
  %v2942 = vrot.slane %v2925, %v2941
  %v2947 = vmul.f32 %v2924, %v2930
  %v2948 = vmul.f32 %v2923, %v2934
  %v2949 = vmul.f32 %v2922, %v2938
  %v2950 = vmul.f32 %v2921, %v2942
  %v2951 = vpack.c.bf16 %v2947, %v2947
  %v2952 = vpack.c.bf16 %v2948, %v2948
  %v2953 = vpack.c.bf16 %v2949, %v2949
  %v2954 = vpack.c.bf16 %v2950, %v2950
  %v2959 = vunpack.c.l.b16 %v2951
  %v2960 = vunpack.c.l.b16 %v2952
  %v2961 = vunpack.c.l.b16 %v2953
  %v2962 = vunpack.c.l.b16 %v2954
  %v2963 = vpack.c.b16 %v2960, %v2959
  %v2964 = vpack.c.b16 %v2962, %v2961
  %2967 = vst [vmem:[#allocation2 + $0x30] sm:$0xff] %v2963
  %2968 = vst [vmem:[#allocation2 + $0x38] sm:$0xff] %v2964
  %v2969 = vpack.c.bf16 %v2741, %v2741
  %v2970 = vpack.c.bf16 %v2742, %v2742
  %v2971 = vpack.c.bf16 %v2743, %v2743
  %v2972 = vpack.c.bf16 %v2744, %v2744
  %v2977 = vunpack.c.l.b16 %v2969
  %v2978 = vunpack.c.l.b16 %v2970
  %v2979 = vunpack.c.l.b16 %v2971
  %v2980 = vunpack.c.l.b16 %v2972
  %v2981 = vpack.c.b16 %v2978, %v2977
  %v2982 = vpack.c.b16 %v2980, %v2979
  %2985 = vst [vmem:[#allocation2 + $0x40] sm:$0xff] %v2981
  %2986 = vst [vmem:[#allocation2 + $0x48] sm:$0xff] %v2982
  %2987 = vrot.lane.b32.xlu0 %v2741, 127
  %v2988 = vpop.permute.xlu0 %2987
  %2989 = vrot.lane.b32.xlu0 %v2742, 127
  %v2990 = vpop.permute.xlu0 %2989
  %2991 = vrot.lane.b32.xlu0 %v2743, 127
  %v2992 = vpop.permute.xlu0 %2991
  %2993 = vrot.lane.b32.xlu0 %v2744, 127
  %v2994 = vpop.permute.xlu0 %2993
  %v2995 = vsel %vm281, %v2992, %v2994
  %v2996 = vsel %vm281, %v2990, %v2992
  %v2997 = vsel %vm281, %v2988, %v2990
  %v2998 = vsel %vm281, %v2994, %v2988
  %v2999 = vld [vmem:[%s286] ss:$8 sm:$0xf]
  %v3001 = vlaneseq
  %v3002 = vshrl.u32 %v3001, 7
  %v3003 = vsub.s32 0, %v3002
  %v3004 = vrot.slane %v2999, %v3003
  %v3005 = vlaneseq
  %v3006 = vshrl.u32 %v3005, 7
  %v3007 = vsub.s32 1, %v3006
  %v3008 = vrot.slane %v2999, %v3007
  %v3009 = vlaneseq
  %v3010 = vshrl.u32 %v3009, 7
  %v3011 = vsub.s32 2, %v3010
  %v3012 = vrot.slane %v2999, %v3011
  %v3013 = vlaneseq
  %v3014 = vshrl.u32 %v3013, 7
  %v3015 = vsub.s32 3, %v3014
  %v3016 = vrot.slane %v2999, %v3015
  %v3021 = vmul.f32 %v2997, %v3004
  %v3022 = vmul.f32 %v2996, %v3008
  %v3023 = vmul.f32 %v2995, %v3012
  %v3024 = vmul.f32 %v2998, %v3016
  %v3025 = vpack.c.bf16 %v3021, %v3021
  %v3026 = vpack.c.bf16 %v3022, %v3022
  %v3027 = vpack.c.bf16 %v3023, %v3023
  %v3028 = vpack.c.bf16 %v3024, %v3024
  %v3033 = vunpack.c.l.b16 %v3025
  %v3034 = vunpack.c.l.b16 %v3026
  %v3035 = vunpack.c.l.b16 %v3027
  %v3036 = vunpack.c.l.b16 %v3028
  %v3037 = vpack.c.b16 %v3034, %v3033
  %v3038 = vpack.c.b16 %v3036, %v3035
  %3041 = vst [vmem:[#allocation2 + $0x50] sm:$0xff] %v3037
  %3042 = vst [vmem:[#allocation2 + $0x58] sm:$0xff] %v3038
  %3043 = vrot.lane.b32.xlu0 %v2741, 113
  %v3044 = vpop.permute.xlu0 %3043
  %3045 = vrot.lane.b32.xlu0 %v2742, 113
  %v3046 = vpop.permute.xlu0 %3045
  %3047 = vrot.lane.b32.xlu0 %v2743, 113
  %v3048 = vpop.permute.xlu0 %3047
  %3049 = vrot.lane.b32.xlu0 %v2744, 113
  %v3050 = vpop.permute.xlu0 %3049
  %v3051 = vsel %vm339, %v3048, %v3050
  %v3052 = vsel %vm339, %v3046, %v3048
  %v3053 = vsel %vm339, %v3044, %v3046
  %v3054 = vsel %vm339, %v3050, %v3044
  %v3055 = vld [vmem:[%s344] ss:$8 sm:$0xf]
  %v3057 = vlaneseq
  %v3058 = vshrl.u32 %v3057, 7
  %v3059 = vsub.s32 0, %v3058
  %v3060 = vrot.slane %v3055, %v3059
  %v3061 = vlaneseq
  %v3062 = vshrl.u32 %v3061, 7
  %v3063 = vsub.s32 1, %v3062
  %v3064 = vrot.slane %v3055, %v3063
  %v3065 = vlaneseq
  %v3066 = vshrl.u32 %v3065, 7
  %v3067 = vsub.s32 2, %v3066
  %v3068 = vrot.slane %v3055, %v3067
  %v3069 = vlaneseq
  %v3070 = vshrl.u32 %v3069, 7
  %v3071 = vsub.s32 3, %v3070
  %v3072 = vrot.slane %v3055, %v3071
  %v3077 = vmul.f32 %v3053, %v3060
  %v3078 = vmul.f32 %v3052, %v3064
  %v3079 = vmul.f32 %v3051, %v3068
  %v3080 = vmul.f32 %v3054, %v3072
  %v3081 = vpack.c.bf16 %v3077, %v3077
  %v3082 = vpack.c.bf16 %v3078, %v3078
  %v3083 = vpack.c.bf16 %v3079, %v3079
  %v3084 = vpack.c.bf16 %v3080, %v3080
  %v3089 = vunpack.c.l.b16 %v3081
  %v3090 = vunpack.c.l.b16 %v3082
  %v3091 = vunpack.c.l.b16 %v3083
  %v3092 = vunpack.c.l.b16 %v3084
  %v3093 = vpack.c.b16 %v3090, %v3089
  %v3094 = vpack.c.b16 %v3092, %v3091
  %3097 = vst [vmem:[#allocation2 + $0x60] sm:$0xff] %v3093
  %3098 = vst [vmem:[#allocation2 + $0x68] sm:$0xff] %v3094
  %3099 = vrot.lane.b32.xlu0 %v2741, 112
  %v3100 = vpop.permute.xlu0 %3099
  %3101 = vrot.lane.b32.xlu0 %v2742, 112
  %v3102 = vpop.permute.xlu0 %3101
  %3103 = vrot.lane.b32.xlu0 %v2743, 112
  %v3104 = vpop.permute.xlu0 %3103
  %3105 = vrot.lane.b32.xlu0 %v2744, 112
  %v3106 = vpop.permute.xlu0 %3105
  %v3107 = vsel %vm397, %v3104, %v3106
  %v3108 = vsel %vm397, %v3102, %v3104
  %v3109 = vsel %vm397, %v3100, %v3102
  %v3110 = vsel %vm397, %v3106, %v3100
  %v3111 = vld [vmem:[%s402] ss:$8 sm:$0xf]
  %v3113 = vlaneseq
  %v3114 = vshrl.u32 %v3113, 7
  %v3115 = vsub.s32 0, %v3114
  %v3116 = vrot.slane %v3111, %v3115
  %v3117 = vlaneseq
  %v3118 = vshrl.u32 %v3117, 7
  %v3119 = vsub.s32 1, %v3118
  %v3120 = vrot.slane %v3111, %v3119
  %v3121 = vlaneseq
  %v3122 = vshrl.u32 %v3121, 7
  %v3123 = vsub.s32 2, %v3122
  %v3124 = vrot.slane %v3111, %v3123
  %v3125 = vlaneseq
  %v3126 = vshrl.u32 %v3125, 7
  %v3127 = vsub.s32 3, %v3126
  %v3128 = vrot.slane %v3111, %v3127
  %v3133 = vmul.f32 %v3109, %v3116
  %v3134 = vmul.f32 %v3108, %v3120
  %v3135 = vmul.f32 %v3107, %v3124
  %v3136 = vmul.f32 %v3110, %v3128
  %v3137 = vpack.c.bf16 %v3133, %v3133
  %v3138 = vpack.c.bf16 %v3134, %v3134
  %v3139 = vpack.c.bf16 %v3135, %v3135
  %v3140 = vpack.c.bf16 %v3136, %v3136
  %v3145 = vunpack.c.l.b16 %v3137
  %v3146 = vunpack.c.l.b16 %v3138
  %v3147 = vunpack.c.l.b16 %v3139
  %v3148 = vunpack.c.l.b16 %v3140
  %v3149 = vpack.c.b16 %v3146, %v3145
  %v3150 = vpack.c.b16 %v3148, %v3147
  %3153 = vst [vmem:[#allocation2 + $0x70] sm:$0xff] %v3149
  %3154 = vst [vmem:[#allocation2 + $0x78] sm:$0xff] %v3150
  %3155 = vrot.lane.b32.xlu0 %v2741, 111
  %v3156 = vpop.permute.xlu0 %3155
  %3157 = vrot.lane.b32.xlu0 %v2742, 111
  %v3158 = vpop.permute.xlu0 %3157
  %3159 = vrot.lane.b32.xlu0 %v2743, 111
  %v3160 = vpop.permute.xlu0 %3159
  %3161 = vrot.lane.b32.xlu0 %v2744, 111
  %v3162 = vpop.permute.xlu0 %3161
  %v3163 = vsel %vm455, %v3160, %v3162
  %v3164 = vsel %vm455, %v3158, %v3160
  %v3165 = vsel %vm455, %v3156, %v3158
  %v3166 = vsel %vm455, %v3162, %v3156
  %v3167 = vld [vmem:[%s460] ss:$8 sm:$0xf]
  %v3169 = vlaneseq
  %v3170 = vshrl.u32 %v3169, 7
  %v3171 = vsub.s32 0, %v3170
  %v3172 = vrot.slane %v3167, %v3171
  %v3173 = vlaneseq
  %v3174 = vshrl.u32 %v3173, 7
  %v3175 = vsub.s32 1, %v3174
  %v3176 = vrot.slane %v3167, %v3175
  %v3177 = vlaneseq
  %v3178 = vshrl.u32 %v3177, 7
  %v3179 = vsub.s32 2, %v3178
  %v3180 = vrot.slane %v3167, %v3179
  %v3181 = vlaneseq
  %v3182 = vshrl.u32 %v3181, 7
  %v3183 = vsub.s32 3, %v3182
  %v3184 = vrot.slane %v3167, %v3183
  %v3189 = vmul.f32 %v3165, %v3172
  %v3190 = vmul.f32 %v3164, %v3176
  %v3191 = vmul.f32 %v3163, %v3180
  %v3192 = vmul.f32 %v3166, %v3184
  %v3193 = vpack.c.bf16 %v3189, %v3189
  %v3194 = vpack.c.bf16 %v3190, %v3190
  %v3195 = vpack.c.bf16 %v3191, %v3191
  %v3196 = vpack.c.bf16 %v3192, %v3192
  %v3201 = vunpack.c.l.b16 %v3193
  %v3202 = vunpack.c.l.b16 %v3194
  %v3203 = vunpack.c.l.b16 %v3195
  %v3204 = vunpack.c.l.b16 %v3196
  %v3205 = vpack.c.b16 %v3202, %v3201
  %v3206 = vpack.c.b16 %v3204, %v3203
  %3209 = vst [vmem:[#allocation2 + $0x80] sm:$0xff] %v3205
  %3210 = vst [vmem:[#allocation2 + $0x88] sm:$0xff] %v3206
  %v3211 = vld [vmem:[%s3] sm:$0xf]
  %v3212 = vld [vmem:[#allocation2] sm:$0xff]
  %v3213 = vld [vmem:[#allocation2 + $0x8] sm:$0xff]
  %v3214 = vld [vmem:[#allocation2 + $0x10] sm:$0xff]
  %v3215 = vld [vmem:[#allocation2 + $0x18] sm:$0xff]
  %v3216 = vld [vmem:[#allocation2 + $0x20] sm:$0xff]
  %v3217 = vld [vmem:[#allocation2 + $0x28] sm:$0xff]
  %v3218 = vld [vmem:[#allocation2 + $0x30] sm:$0xff]
  %v3219 = vld [vmem:[#allocation2 + $0x38] sm:$0xff]
  %v3220 = vld [vmem:[#allocation2 + $0x40] sm:$0xff]
  %v3221 = vld [vmem:[#allocation2 + $0x48] sm:$0xff]
  %v3222 = vld [vmem:[#allocation2 + $0x50] sm:$0xff]
  %v3223 = vld [vmem:[#allocation2 + $0x58] sm:$0xff]
  %v3224 = vld [vmem:[#allocation2 + $0x60] sm:$0xff]
  %v3225 = vld [vmem:[#allocation2 + $0x68] sm:$0xff]
  %v3226 = vld [vmem:[#allocation2 + $0x70] sm:$0xff]
  %v3227 = vld [vmem:[#allocation2 + $0x78] sm:$0xff]
  %v3228 = vld [vmem:[#allocation2 + $0x80] sm:$0xff]
  %v3229 = vld [vmem:[#allocation2 + $0x88] sm:$0xff]
  %v3248 = vunpack.c.l.b16 %v3212
  %v3249 = vunpack.c.h.b16 %v3212
  %v3250 = vunpack.c.l.b16 %v3213
  %v3251 = vunpack.c.h.b16 %v3213
  %v3252 = vunpack.c.l.b16 %v3214
  %v3253 = vunpack.c.h.b16 %v3214
  %v3254 = vunpack.c.l.b16 %v3215
  %v3255 = vunpack.c.h.b16 %v3215
  %v3256 = vunpack.c.l.b16 %v3216
  %v3257 = vunpack.c.h.b16 %v3216
  %v3258 = vunpack.c.l.b16 %v3217
  %v3259 = vunpack.c.h.b16 %v3217
  %v3260 = vunpack.c.l.b16 %v3218
  %v3261 = vunpack.c.h.b16 %v3218
  %v3262 = vunpack.c.l.b16 %v3219
  %v3263 = vunpack.c.h.b16 %v3219
  %v3264 = vunpack.c.l.b16 %v3220
  %v3265 = vunpack.c.h.b16 %v3220
  %v3266 = vunpack.c.l.b16 %v3221
  %v3267 = vunpack.c.h.b16 %v3221
  %v3268 = vunpack.c.l.b16 %v3222
  %v3269 = vunpack.c.h.b16 %v3222
  %v3270 = vunpack.c.l.b16 %v3223
  %v3271 = vunpack.c.h.b16 %v3223
  %v3272 = vunpack.c.l.b16 %v3224
  %v3273 = vunpack.c.h.b16 %v3224
  %v3274 = vunpack.c.l.b16 %v3225
  %v3275 = vunpack.c.h.b16 %v3225
  %v3276 = vunpack.c.l.b16 %v3226
  %v3277 = vunpack.c.h.b16 %v3226
  %v3278 = vunpack.c.l.b16 %v3227
  %v3279 = vunpack.c.h.b16 %v3227
  %v3280 = vunpack.c.l.b16 %v3228
  %v3281 = vunpack.c.h.b16 %v3228
  %v3282 = vunpack.c.l.b16 %v3229
  %v3283 = vunpack.c.h.b16 %v3229
  %v3284 = vpack.c.b16 %v3252, %v3248
  %v3285 = vpack.c.b16 %v3253, %v3249
  %v3286 = vpack.c.b16 %v3254, %v3250
  %v3287 = vpack.c.b16 %v3255, %v3251
  %v3288 = vpack.c.b16 %v3260, %v3256
  %v3289 = vpack.c.b16 %v3261, %v3257
  %v3290 = vpack.c.b16 %v3262, %v3258
  %v3291 = vpack.c.b16 %v3263, %v3259
  %v3292 = vpack.c.b16 %v3268, %v3264
  %v3293 = vpack.c.b16 %v3269, %v3265
  %v3294 = vpack.c.b16 %v3270, %v3266
  %v3295 = vpack.c.b16 %v3271, %v3267
  %v3296 = vpack.c.b16 %v3276, %v3272
  %v3297 = vpack.c.b16 %v3277, %v3273
  %v3298 = vpack.c.b16 %v3278, %v3274
  %v3299 = vpack.c.b16 %v3279, %v3275
  %v3300 = vpack.c.b16 %v3280, %v3280
  %v3301 = vpack.c.b16 %v3281, %v3281
  %v3302 = vpack.c.b16 %v3282, %v3282
  %v3303 = vpack.c.b16 %v3283, %v3283
  %v3321 = vsel %vm614, %v3211, 0
  %v3324 = vsel %vm618, %v3300, 0
  %v3327 = vsel %vm618, %v3301, 0
  %v3330 = vsel %vm618, %v3302, 0
  %v3333 = vsel %vm618, %v3303, 0
  %3335 = vmatprep.subr.bf16.mxu0 %v3285
  %3336 = vmatpush1.bf16.msra.mxu0 %v3284
  %3337 = vmatprep.subr.bf16.mxu0 %v3289
  %3338 = vmatpush1.bf16.msra.mxu0 %v3288
  %3339 = vmatprep.subr.bf16.mxu0 %v3293
  %3340 = vmatpush1.bf16.msra.mxu0 %v3292
  %3341 = vmatprep.subr.bf16.mxu0 %v3297
  %3342 = vmatpush1.bf16.msra.mxu0 %v3296
  %3343 = vmatprep.subr.bf16.mxu0 %v3327
  %3344 = vmatpush1.bf16.msra.mxu0 %v3324
  %3345 = vmatprep.subr.bf16.mxu0 0
  %3346 = vmatpush1.bf16.msra.mxu0 0
  %3347 = vmatprep.subr.bf16.mxu0 0
  %3348 = vmatpush1.bf16.msra.mxu0 0
  %3349 = vmatprep.subr.bf16.mxu0 0
  %3350 = vmatpush1.bf16.msra.mxu0 0
  %3351 = vmatprep.subr.bf16.mxu0 0
  %3352 = vmatpush1.bf16.msra.mxu0 0
  %3353 = vmatprep.subr.bf16.mxu0 0
  %3354 = vmatpush1.bf16.msra.mxu0 0
  %3355 = vmatprep.subr.bf16.mxu0 0
  %3356 = vmatpush1.bf16.msra.mxu0 0
  %3357 = vmatprep.subr.bf16.mxu0 0
  %3358 = vmatpush1.bf16.msra.mxu0 0
  %3359 = vmatprep.subr.bf16.mxu0 0
  %3360 = vmatpush1.bf16.msra.mxu0 0
  %3361 = vmatprep.subr.bf16.mxu0 0
  %3362 = vmatpush1.bf16.msra.mxu0 0
  %3363 = vmatprep.subr.bf16.mxu0 0
  %3364 = vmatpush1.bf16.msra.mxu0 0
  %3365 = vmatprep.subr.bf16.mxu0 0
  %3366 = vmatpush1.bf16.msra.mxu0 0
  %3367 = vmatprep.mubr.bf16.mxu0 0
  %3368 = vmatmul.mubr.bf16.gmra.mrb[0].mxu0 %v3321
  %v3369 = vpop.f32.mrb[0].mxu0
  %v3370 = vadd.f32 %v666, %v3369
  %v3371 = vpop.f32.mrb[0].mxu0
  %v3372 = vadd.f32 %v668, %v3371
  %v3373 = vpop.f32.mrb[0].mxu0
  %v3374 = vpop.f32.mrb[0].mxu0
  %3375 = vdwg.mxu0
  %3376 = vmatprep.subr.bf16.mxu0 %v3287
  %3377 = vmatpush1.bf16.msra.mxu0 %v3286
  %3378 = vmatprep.subr.bf16.mxu0 %v3291
  %3379 = vmatpush1.bf16.msra.mxu0 %v3290
  %3380 = vmatprep.subr.bf16.mxu0 %v3295
  %3381 = vmatpush1.bf16.msra.mxu0 %v3294
  %3382 = vmatprep.subr.bf16.mxu0 %v3299
  %3383 = vmatpush1.bf16.msra.mxu0 %v3298
  %3384 = vmatprep.subr.bf16.mxu0 %v3333
  %3385 = vmatpush1.bf16.msra.mxu0 %v3330
  %3386 = vmatprep.subr.bf16.mxu0 0
  %3387 = vmatpush1.bf16.msra.mxu0 0
  %3388 = vmatprep.subr.bf16.mxu0 0
  %3389 = vmatpush1.bf16.msra.mxu0 0
  %3390 = vmatprep.subr.bf16.mxu0 0
  %3391 = vmatpush1.bf16.msra.mxu0 0
  %3392 = vmatprep.subr.bf16.mxu0 0
  %3393 = vmatpush1.bf16.msra.mxu0 0
  %3394 = vmatprep.subr.bf16.mxu0 0
  %3395 = vmatpush1.bf16.msra.mxu0 0
  %3396 = vmatprep.subr.bf16.mxu0 0
  %3397 = vmatpush1.bf16.msra.mxu0 0
  %3398 = vmatprep.subr.bf16.mxu0 0
  %3399 = vmatpush1.bf16.msra.mxu0 0
  %3400 = vmatprep.subr.bf16.mxu0 0
  %3401 = vmatpush1.bf16.msra.mxu0 0
  %3402 = vmatprep.subr.bf16.mxu0 0
  %3403 = vmatpush1.bf16.msra.mxu0 0
  %3404 = vmatprep.subr.bf16.mxu0 0
  %3405 = vmatpush1.bf16.msra.mxu0 0
  %3406 = vmatprep.subr.bf16.mxu0 0
  %3407 = vmatpush1.bf16.msra.mxu0 0
  %3408 = vmatprep.mubr.bf16.mxu0 0
  %3409 = vmatmul.mubr.bf16.gmra.mrb[0].mxu0 %v3321
  %v3410 = vpop.f32.mrb[0].mxu0
  %v3411 = vadd.f32 %v707, %v3410
  %v3412 = vpop.f32.mrb[0].mxu0
  %v3413 = vadd.f32 %v709, %v3412
  %v3414 = vpop.f32.mrb[0].mxu0
  %v3415 = vpop.f32.mrb[0].mxu0
  %3416 = vdwg.mxu0
  %v3417 = vmax.f32 %v3370, 0.0
  %v3418 = vmax.f32 %v3372, 0.0
  %v3419 = vmax.f32 %v3411, 0.0
  %v3420 = vmax.f32 %v3413, 0.0
  %3421 = vrot.lane.b32.xlu0 %v3417, 17
  %v3422 = vpop.permute.xlu0 %3421
  %3423 = vrot.lane.b32.xlu0 %v3418, 17
  %v3424 = vpop.permute.xlu0 %3423
  %3425 = vrot.lane.b32.xlu0 %v3419, 17
  %v3426 = vpop.permute.xlu0 %3425
  %3427 = vrot.lane.b32.xlu0 %v3420, 17
  %v3428 = vpop.permute.xlu0 %3427
  %v3429 = vsel %vm32, %v3426, %v3428
  %v3430 = vsel %vm32, %v3424, %v3426
  %v3431 = vsel %vm32, %v3422, %v3424
  %v3432 = vsel %vm32, %v3428, %v3422
  %v3433 = vld [vmem:[%s1] ss:$8 sm:$0xf]
  %v3435 = vlaneseq
  %v3436 = vshrl.u32 %v3435, 7
  %v3437 = vsub.s32 0, %v3436
  %v3438 = vrot.slane %v3433, %v3437
  %v3439 = vlaneseq
  %v3440 = vshrl.u32 %v3439, 7
  %v3441 = vsub.s32 1, %v3440
  %v3442 = vrot.slane %v3433, %v3441
  %v3443 = vlaneseq
  %v3444 = vshrl.u32 %v3443, 7
  %v3445 = vsub.s32 2, %v3444
  %v3446 = vrot.slane %v3433, %v3445
  %v3447 = vlaneseq
  %v3448 = vshrl.u32 %v3447, 7
  %v3449 = vsub.s32 3, %v3448
  %v3450 = vrot.slane %v3433, %v3449
  %v3455 = vmul.f32 %v3432, %v3438
  %v3456 = vmul.f32 %v3431, %v3442
  %v3457 = vmul.f32 %v3430, %v3446
  %v3458 = vmul.f32 %v3429, %v3450
  %v3459 = vpack.c.bf16 %v3455, %v3455
  %v3460 = vpack.c.bf16 %v3456, %v3456
  %v3461 = vpack.c.bf16 %v3457, %v3457
  %v3462 = vpack.c.bf16 %v3458, %v3458
  %v3467 = vunpack.c.l.b16 %v3459
  %v3468 = vunpack.c.l.b16 %v3460
  %v3469 = vunpack.c.l.b16 %v3461
  %v3470 = vunpack.c.l.b16 %v3462
  %v3471 = vpack.c.b16 %v3468, %v3467
  %v3472 = vpack.c.b16 %v3470, %v3469
  %3475 = vst [vmem:[#allocation2] sm:$0xff] %v3471
  %3476 = vst [vmem:[#allocation2 + $0x8] sm:$0xff] %v3472
  %3477 = vrot.lane.b32.xlu0 %v3417, 16
  %v3478 = vpop.permute.xlu0 %3477
  %3479 = vrot.lane.b32.xlu0 %v3418, 16
  %v3480 = vpop.permute.xlu0 %3479
  %3481 = vrot.lane.b32.xlu0 %v3419, 16
  %v3482 = vpop.permute.xlu0 %3481
  %3483 = vrot.lane.b32.xlu0 %v3420, 16
  %v3484 = vpop.permute.xlu0 %3483
  %v3485 = vsel %vm89, %v3482, %v3484
  %v3486 = vsel %vm89, %v3480, %v3482
  %v3487 = vsel %vm89, %v3478, %v3480
  %v3488 = vsel %vm89, %v3484, %v3478
  %v3489 = vld [vmem:[%s94] ss:$8 sm:$0xf]
  %v3491 = vlaneseq
  %v3492 = vshrl.u32 %v3491, 7
  %v3493 = vsub.s32 0, %v3492
  %v3494 = vrot.slane %v3489, %v3493
  %v3495 = vlaneseq
  %v3496 = vshrl.u32 %v3495, 7
  %v3497 = vsub.s32 1, %v3496
  %v3498 = vrot.slane %v3489, %v3497
  %v3499 = vlaneseq
  %v3500 = vshrl.u32 %v3499, 7
  %v3501 = vsub.s32 2, %v3500
  %v3502 = vrot.slane %v3489, %v3501
  %v3503 = vlaneseq
  %v3504 = vshrl.u32 %v3503, 7
  %v3505 = vsub.s32 3, %v3504
  %v3506 = vrot.slane %v3489, %v3505
  %v3511 = vmul.f32 %v3488, %v3494
  %v3512 = vmul.f32 %v3487, %v3498
  %v3513 = vmul.f32 %v3486, %v3502
  %v3514 = vmul.f32 %v3485, %v3506
  %v3515 = vpack.c.bf16 %v3511, %v3511
  %v3516 = vpack.c.bf16 %v3512, %v3512
  %v3517 = vpack.c.bf16 %v3513, %v3513
  %v3518 = vpack.c.bf16 %v3514, %v3514
  %v3523 = vunpack.c.l.b16 %v3515
  %v3524 = vunpack.c.l.b16 %v3516
  %v3525 = vunpack.c.l.b16 %v3517
  %v3526 = vunpack.c.l.b16 %v3518
  %v3527 = vpack.c.b16 %v3524, %v3523
  %v3528 = vpack.c.b16 %v3526, %v3525
  %3531 = vst [vmem:[#allocation2 + $0x10] sm:$0xff] %v3527
  %3532 = vst [vmem:[#allocation2 + $0x18] sm:$0xff] %v3528
  %3533 = vrot.lane.b32.xlu0 %v3417, 15
  %v3534 = vpop.permute.xlu0 %3533
  %3535 = vrot.lane.b32.xlu0 %v3418, 15
  %v3536 = vpop.permute.xlu0 %3535
  %3537 = vrot.lane.b32.xlu0 %v3419, 15
  %v3538 = vpop.permute.xlu0 %3537
  %3539 = vrot.lane.b32.xlu0 %v3420, 15
  %v3540 = vpop.permute.xlu0 %3539
  %v3541 = vsel %vm147, %v3538, %v3540
  %v3542 = vsel %vm147, %v3536, %v3538
  %v3543 = vsel %vm147, %v3534, %v3536
  %v3544 = vsel %vm147, %v3540, %v3534
  %v3545 = vld [vmem:[%s152] ss:$8 sm:$0xf]
  %v3547 = vlaneseq
  %v3548 = vshrl.u32 %v3547, 7
  %v3549 = vsub.s32 0, %v3548
  %v3550 = vrot.slane %v3545, %v3549
  %v3551 = vlaneseq
  %v3552 = vshrl.u32 %v3551, 7
  %v3553 = vsub.s32 1, %v3552
  %v3554 = vrot.slane %v3545, %v3553
  %v3555 = vlaneseq
  %v3556 = vshrl.u32 %v3555, 7
  %v3557 = vsub.s32 2, %v3556
  %v3558 = vrot.slane %v3545, %v3557
  %v3559 = vlaneseq
  %v3560 = vshrl.u32 %v3559, 7
  %v3561 = vsub.s32 3, %v3560
  %v3562 = vrot.slane %v3545, %v3561
  %v3567 = vmul.f32 %v3544, %v3550
  %v3568 = vmul.f32 %v3543, %v3554
  %v3569 = vmul.f32 %v3542, %v3558
  %v3570 = vmul.f32 %v3541, %v3562
  %v3571 = vpack.c.bf16 %v3567, %v3567
  %v3572 = vpack.c.bf16 %v3568, %v3568
  %v3573 = vpack.c.bf16 %v3569, %v3569
  %v3574 = vpack.c.bf16 %v3570, %v3570
  %v3579 = vunpack.c.l.b16 %v3571
  %v3580 = vunpack.c.l.b16 %v3572
  %v3581 = vunpack.c.l.b16 %v3573
  %v3582 = vunpack.c.l.b16 %v3574
  %v3583 = vpack.c.b16 %v3580, %v3579
  %v3584 = vpack.c.b16 %v3582, %v3581
  %3587 = vst [vmem:[#allocation2 + $0x20] sm:$0xff] %v3583
  %3588 = vst [vmem:[#allocation2 + $0x28] sm:$0xff] %v3584
  %3589 = vrot.lane.b32.xlu0 %v3417, 1
  %v3590 = vpop.permute.xlu0 %3589
  %3591 = vrot.lane.b32.xlu0 %v3418, 1
  %v3592 = vpop.permute.xlu0 %3591
  %3593 = vrot.lane.b32.xlu0 %v3419, 1
  %v3594 = vpop.permute.xlu0 %3593
  %3595 = vrot.lane.b32.xlu0 %v3420, 1
  %v3596 = vpop.permute.xlu0 %3595
  %v3597 = vsel %vm205, %v3594, %v3596
  %v3598 = vsel %vm205, %v3592, %v3594
  %v3599 = vsel %vm205, %v3590, %v3592
  %v3600 = vsel %vm205, %v3596, %v3590
  %v3601 = vld [vmem:[%s210] ss:$8 sm:$0xf]
  %v3603 = vlaneseq
  %v3604 = vshrl.u32 %v3603, 7
  %v3605 = vsub.s32 0, %v3604
  %v3606 = vrot.slane %v3601, %v3605
  %v3607 = vlaneseq
  %v3608 = vshrl.u32 %v3607, 7
  %v3609 = vsub.s32 1, %v3608
  %v3610 = vrot.slane %v3601, %v3609
  %v3611 = vlaneseq
  %v3612 = vshrl.u32 %v3611, 7
  %v3613 = vsub.s32 2, %v3612
  %v3614 = vrot.slane %v3601, %v3613
  %v3615 = vlaneseq
  %v3616 = vshrl.u32 %v3615, 7
  %v3617 = vsub.s32 3, %v3616
  %v3618 = vrot.slane %v3601, %v3617
  %v3623 = vmul.f32 %v3600, %v3606
  %v3624 = vmul.f32 %v3599, %v3610
  %v3625 = vmul.f32 %v3598, %v3614
  %v3626 = vmul.f32 %v3597, %v3618
  %v3627 = vpack.c.bf16 %v3623, %v3623
  %v3628 = vpack.c.bf16 %v3624, %v3624
  %v3629 = vpack.c.bf16 %v3625, %v3625
  %v3630 = vpack.c.bf16 %v3626, %v3626
  %v3635 = vunpack.c.l.b16 %v3627
  %v3636 = vunpack.c.l.b16 %v3628
  %v3637 = vunpack.c.l.b16 %v3629
  %v3638 = vunpack.c.l.b16 %v3630
  %v3639 = vpack.c.b16 %v3636, %v3635
  %v3640 = vpack.c.b16 %v3638, %v3637
  %3643 = vst [vmem:[#allocation2 + $0x30] sm:$0xff] %v3639
  %3644 = vst [vmem:[#allocation2 + $0x38] sm:$0xff] %v3640
  %v3645 = vpack.c.bf16 %v3417, %v3417
  %v3646 = vpack.c.bf16 %v3418, %v3418
  %v3647 = vpack.c.bf16 %v3419, %v3419
  %v3648 = vpack.c.bf16 %v3420, %v3420
  %v3653 = vunpack.c.l.b16 %v3645
  %v3654 = vunpack.c.l.b16 %v3646
  %v3655 = vunpack.c.l.b16 %v3647
  %v3656 = vunpack.c.l.b16 %v3648
  %v3657 = vpack.c.b16 %v3654, %v3653
  %v3658 = vpack.c.b16 %v3656, %v3655
  %3661 = vst [vmem:[#allocation2 + $0x40] sm:$0xff] %v3657
  %3662 = vst [vmem:[#allocation2 + $0x48] sm:$0xff] %v3658
  %3663 = vrot.lane.b32.xlu0 %v3417, 127
  %v3664 = vpop.permute.xlu0 %3663
  %3665 = vrot.lane.b32.xlu0 %v3418, 127
  %v3666 = vpop.permute.xlu0 %3665
  %3667 = vrot.lane.b32.xlu0 %v3419, 127
  %v3668 = vpop.permute.xlu0 %3667
  %3669 = vrot.lane.b32.xlu0 %v3420, 127
  %v3670 = vpop.permute.xlu0 %3669
  %v3671 = vsel %vm281, %v3668, %v3670
  %v3672 = vsel %vm281, %v3666, %v3668
  %v3673 = vsel %vm281, %v3664, %v3666
  %v3674 = vsel %vm281, %v3670, %v3664
  %v3675 = vld [vmem:[%s286] ss:$8 sm:$0xf]
  %v3677 = vlaneseq
  %v3678 = vshrl.u32 %v3677, 7
  %v3679 = vsub.s32 0, %v3678
  %v3680 = vrot.slane %v3675, %v3679
  %v3681 = vlaneseq
  %v3682 = vshrl.u32 %v3681, 7
  %v3683 = vsub.s32 1, %v3682
  %v3684 = vrot.slane %v3675, %v3683
  %v3685 = vlaneseq
  %v3686 = vshrl.u32 %v3685, 7
  %v3687 = vsub.s32 2, %v3686
  %v3688 = vrot.slane %v3675, %v3687
  %v3689 = vlaneseq
  %v3690 = vshrl.u32 %v3689, 7
  %v3691 = vsub.s32 3, %v3690
  %v3692 = vrot.slane %v3675, %v3691
  %v3697 = vmul.f32 %v3673, %v3680
  %v3698 = vmul.f32 %v3672, %v3684
  %v3699 = vmul.f32 %v3671, %v3688
  %v3700 = vmul.f32 %v3674, %v3692
  %v3701 = vpack.c.bf16 %v3697, %v3697
  %v3702 = vpack.c.bf16 %v3698, %v3698
  %v3703 = vpack.c.bf16 %v3699, %v3699
  %v3704 = vpack.c.bf16 %v3700, %v3700
  %v3709 = vunpack.c.l.b16 %v3701
  %v3710 = vunpack.c.l.b16 %v3702
  %v3711 = vunpack.c.l.b16 %v3703
  %v3712 = vunpack.c.l.b16 %v3704
  %v3713 = vpack.c.b16 %v3710, %v3709
  %v3714 = vpack.c.b16 %v3712, %v3711
  %3717 = vst [vmem:[#allocation2 + $0x50] sm:$0xff] %v3713
  %3718 = vst [vmem:[#allocation2 + $0x58] sm:$0xff] %v3714
  %3719 = vrot.lane.b32.xlu0 %v3417, 113
  %v3720 = vpop.permute.xlu0 %3719
  %3721 = vrot.lane.b32.xlu0 %v3418, 113
  %v3722 = vpop.permute.xlu0 %3721
  %3723 = vrot.lane.b32.xlu0 %v3419, 113
  %v3724 = vpop.permute.xlu0 %3723
  %3725 = vrot.lane.b32.xlu0 %v3420, 113
  %v3726 = vpop.permute.xlu0 %3725
  %v3727 = vsel %vm339, %v3724, %v3726
  %v3728 = vsel %vm339, %v3722, %v3724
  %v3729 = vsel %vm339, %v3720, %v3722
  %v3730 = vsel %vm339, %v3726, %v3720
  %v3731 = vld [vmem:[%s344] ss:$8 sm:$0xf]
  %v3733 = vlaneseq
  %v3734 = vshrl.u32 %v3733, 7
  %v3735 = vsub.s32 0, %v3734
  %v3736 = vrot.slane %v3731, %v3735
  %v3737 = vlaneseq
  %v3738 = vshrl.u32 %v3737, 7
  %v3739 = vsub.s32 1, %v3738
  %v3740 = vrot.slane %v3731, %v3739
  %v3741 = vlaneseq
  %v3742 = vshrl.u32 %v3741, 7
  %v3743 = vsub.s32 2, %v3742
  %v3744 = vrot.slane %v3731, %v3743
  %v3745 = vlaneseq
  %v3746 = vshrl.u32 %v3745, 7
  %v3747 = vsub.s32 3, %v3746
  %v3748 = vrot.slane %v3731, %v3747
  %v3753 = vmul.f32 %v3729, %v3736
  %v3754 = vmul.f32 %v3728, %v3740
  %v3755 = vmul.f32 %v3727, %v3744
  %v3756 = vmul.f32 %v3730, %v3748
  %v3757 = vpack.c.bf16 %v3753, %v3753
  %v3758 = vpack.c.bf16 %v3754, %v3754
  %v3759 = vpack.c.bf16 %v3755, %v3755
  %v3760 = vpack.c.bf16 %v3756, %v3756
  %v3765 = vunpack.c.l.b16 %v3757
  %v3766 = vunpack.c.l.b16 %v3758
  %v3767 = vunpack.c.l.b16 %v3759
  %v3768 = vunpack.c.l.b16 %v3760
  %v3769 = vpack.c.b16 %v3766, %v3765
  %v3770 = vpack.c.b16 %v3768, %v3767
  %3773 = vst [vmem:[#allocation2 + $0x60] sm:$0xff] %v3769
  %3774 = vst [vmem:[#allocation2 + $0x68] sm:$0xff] %v3770
  %3775 = vrot.lane.b32.xlu0 %v3417, 112
  %v3776 = vpop.permute.xlu0 %3775
  %3777 = vrot.lane.b32.xlu0 %v3418, 112
  %v3778 = vpop.permute.xlu0 %3777
  %3779 = vrot.lane.b32.xlu0 %v3419, 112
  %v3780 = vpop.permute.xlu0 %3779
  %3781 = vrot.lane.b32.xlu0 %v3420, 112
  %v3782 = vpop.permute.xlu0 %3781
  %v3783 = vsel %vm397, %v3780, %v3782
  %v3784 = vsel %vm397, %v3778, %v3780
  %v3785 = vsel %vm397, %v3776, %v3778
  %v3786 = vsel %vm397, %v3782, %v3776
  %v3787 = vld [vmem:[%s402] ss:$8 sm:$0xf]
  %v3789 = vlaneseq
  %v3790 = vshrl.u32 %v3789, 7
  %v3791 = vsub.s32 0, %v3790
  %v3792 = vrot.slane %v3787, %v3791
  %v3793 = vlaneseq
  %v3794 = vshrl.u32 %v3793, 7
  %v3795 = vsub.s32 1, %v3794
  %v3796 = vrot.slane %v3787, %v3795
  %v3797 = vlaneseq
  %v3798 = vshrl.u32 %v3797, 7
  %v3799 = vsub.s32 2, %v3798
  %v3800 = vrot.slane %v3787, %v3799
  %v3801 = vlaneseq
  %v3802 = vshrl.u32 %v3801, 7
  %v3803 = vsub.s32 3, %v3802
  %v3804 = vrot.slane %v3787, %v3803
  %v3809 = vmul.f32 %v3785, %v3792
  %v3810 = vmul.f32 %v3784, %v3796
  %v3811 = vmul.f32 %v3783, %v3800
  %v3812 = vmul.f32 %v3786, %v3804
  %v3813 = vpack.c.bf16 %v3809, %v3809
  %v3814 = vpack.c.bf16 %v3810, %v3810
  %v3815 = vpack.c.bf16 %v3811, %v3811
  %v3816 = vpack.c.bf16 %v3812, %v3812
  %v3821 = vunpack.c.l.b16 %v3813
  %v3822 = vunpack.c.l.b16 %v3814
  %v3823 = vunpack.c.l.b16 %v3815
  %v3824 = vunpack.c.l.b16 %v3816
  %v3825 = vpack.c.b16 %v3822, %v3821
  %v3826 = vpack.c.b16 %v3824, %v3823
  %3829 = vst [vmem:[#allocation2 + $0x70] sm:$0xff] %v3825
  %3830 = vst [vmem:[#allocation2 + $0x78] sm:$0xff] %v3826
  %3831 = vrot.lane.b32.xlu0 %v3417, 111
  %v3832 = vpop.permute.xlu0 %3831
  %3833 = vrot.lane.b32.xlu0 %v3418, 111
  %v3834 = vpop.permute.xlu0 %3833
  %3835 = vrot.lane.b32.xlu0 %v3419, 111
  %v3836 = vpop.permute.xlu0 %3835
  %3837 = vrot.lane.b32.xlu0 %v3420, 111
  %v3838 = vpop.permute.xlu0 %3837
  %v3839 = vsel %vm455, %v3836, %v3838
  %v3840 = vsel %vm455, %v3834, %v3836
  %v3841 = vsel %vm455, %v3832, %v3834
  %v3842 = vsel %vm455, %v3838, %v3832
  %v3843 = vld [vmem:[%s460] ss:$8 sm:$0xf]
  %v3845 = vlaneseq
  %v3846 = vshrl.u32 %v3845, 7
  %v3847 = vsub.s32 0, %v3846
  %v3848 = vrot.slane %v3843, %v3847
  %v3849 = vlaneseq
  %v3850 = vshrl.u32 %v3849, 7
  %v3851 = vsub.s32 1, %v3850
  %v3852 = vrot.slane %v3843, %v3851
  %v3853 = vlaneseq
  %v3854 = vshrl.u32 %v3853, 7
  %v3855 = vsub.s32 2, %v3854
  %v3856 = vrot.slane %v3843, %v3855
  %v3857 = vlaneseq
  %v3858 = vshrl.u32 %v3857, 7
  %v3859 = vsub.s32 3, %v3858
  %v3860 = vrot.slane %v3843, %v3859
  %v3865 = vmul.f32 %v3841, %v3848
  %v3866 = vmul.f32 %v3840, %v3852
  %v3867 = vmul.f32 %v3839, %v3856
  %v3868 = vmul.f32 %v3842, %v3860
  %v3869 = vpack.c.bf16 %v3865, %v3865
  %v3870 = vpack.c.bf16 %v3866, %v3866
  %v3871 = vpack.c.bf16 %v3867, %v3867
  %v3872 = vpack.c.bf16 %v3868, %v3868
  %v3877 = vunpack.c.l.b16 %v3869
  %v3878 = vunpack.c.l.b16 %v3870
  %v3879 = vunpack.c.l.b16 %v3871
  %v3880 = vunpack.c.l.b16 %v3872
  %v3881 = vpack.c.b16 %v3878, %v3877
  %v3882 = vpack.c.b16 %v3880, %v3879
  %3885 = vst [vmem:[#allocation2 + $0x80] sm:$0xff] %v3881
  %3886 = vst [vmem:[#allocation2 + $0x88] sm:$0xff] %v3882
  %v3887 = vld [vmem:[%s3] sm:$0xf]
  %v3888 = vld [vmem:[#allocation2] sm:$0xff]
  %v3889 = vld [vmem:[#allocation2 + $0x8] sm:$0xff]
  %v3890 = vld [vmem:[#allocation2 + $0x10] sm:$0xff]
  %v3891 = vld [vmem:[#allocation2 + $0x18] sm:$0xff]
  %v3892 = vld [vmem:[#allocation2 + $0x20] sm:$0xff]
  %v3893 = vld [vmem:[#allocation2 + $0x28] sm:$0xff]
  %v3894 = vld [vmem:[#allocation2 + $0x30] sm:$0xff]
  %v3895 = vld [vmem:[#allocation2 + $0x38] sm:$0xff]
  %v3896 = vld [vmem:[#allocation2 + $0x40] sm:$0xff]
  %v3897 = vld [vmem:[#allocation2 + $0x48] sm:$0xff]
  %v3898 = vld [vmem:[#allocation2 + $0x50] sm:$0xff]
  %v3899 = vld [vmem:[#allocation2 + $0x58] sm:$0xff]
  %v3900 = vld [vmem:[#allocation2 + $0x60] sm:$0xff]
  %v3901 = vld [vmem:[#allocation2 + $0x68] sm:$0xff]
  %v3902 = vld [vmem:[#allocation2 + $0x70] sm:$0xff]
  %v3903 = vld [vmem:[#allocation2 + $0x78] sm:$0xff]
  %v3904 = vld [vmem:[#allocation2 + $0x80] sm:$0xff]
  %v3905 = vld [vmem:[#allocation2 + $0x88] sm:$0xff]
  %v3924 = vunpack.c.l.b16 %v3888
  %v3925 = vunpack.c.h.b16 %v3888
  %v3926 = vunpack.c.l.b16 %v3889
  %v3927 = vunpack.c.h.b16 %v3889
  %v3928 = vunpack.c.l.b16 %v3890
  %v3929 = vunpack.c.h.b16 %v3890
  %v3930 = vunpack.c.l.b16 %v3891
  %v3931 = vunpack.c.h.b16 %v3891
  %v3932 = vunpack.c.l.b16 %v3892
  %v3933 = vunpack.c.h.b16 %v3892
  %v3934 = vunpack.c.l.b16 %v3893
  %v3935 = vunpack.c.h.b16 %v3893
  %v3936 = vunpack.c.l.b16 %v3894
  %v3937 = vunpack.c.h.b16 %v3894
  %v3938 = vunpack.c.l.b16 %v3895
  %v3939 = vunpack.c.h.b16 %v3895
  %v3940 = vunpack.c.l.b16 %v3896
  %v3941 = vunpack.c.h.b16 %v3896
  %v3942 = vunpack.c.l.b16 %v3897
  %v3943 = vunpack.c.h.b16 %v3897
  %v3944 = vunpack.c.l.b16 %v3898
  %v3945 = vunpack.c.h.b16 %v3898
  %v3946 = vunpack.c.l.b16 %v3899
  %v3947 = vunpack.c.h.b16 %v3899
  %v3948 = vunpack.c.l.b16 %v3900
  %v3949 = vunpack.c.h.b16 %v3900
  %v3950 = vunpack.c.l.b16 %v3901
  %v3951 = vunpack.c.h.b16 %v3901
  %v3952 = vunpack.c.l.b16 %v3902
  %v3953 = vunpack.c.h.b16 %v3902
  %v3954 = vunpack.c.l.b16 %v3903
  %v3955 = vunpack.c.h.b16 %v3903
  %v3956 = vunpack.c.l.b16 %v3904
  %v3957 = vunpack.c.h.b16 %v3904
  %v3958 = vunpack.c.l.b16 %v3905
  %v3959 = vunpack.c.h.b16 %v3905
  %v3960 = vpack.c.b16 %v3928, %v3924
  %v3961 = vpack.c.b16 %v3929, %v3925
  %v3962 = vpack.c.b16 %v3930, %v3926
  %v3963 = vpack.c.b16 %v3931, %v3927
  %v3964 = vpack.c.b16 %v3936, %v3932
  %v3965 = vpack.c.b16 %v3937, %v3933
  %v3966 = vpack.c.b16 %v3938, %v3934
  %v3967 = vpack.c.b16 %v3939, %v3935
  %v3968 = vpack.c.b16 %v3944, %v3940
  %v3969 = vpack.c.b16 %v3945, %v3941
  %v3970 = vpack.c.b16 %v3946, %v3942
  %v3971 = vpack.c.b16 %v3947, %v3943
  %v3972 = vpack.c.b16 %v3952, %v3948
  %v3973 = vpack.c.b16 %v3953, %v3949
  %v3974 = vpack.c.b16 %v3954, %v3950
  %v3975 = vpack.c.b16 %v3955, %v3951
  %v3976 = vpack.c.b16 %v3956, %v3956
  %v3977 = vpack.c.b16 %v3957, %v3957
  %v3978 = vpack.c.b16 %v3958, %v3958
  %v3979 = vpack.c.b16 %v3959, %v3959
  %v3997 = vsel %vm614, %v3887, 0
  %v4000 = vsel %vm618, %v3976, 0
  %v4003 = vsel %vm618, %v3977, 0
  %v4006 = vsel %vm618, %v3978, 0
  %v4009 = vsel %vm618, %v3979, 0
  %4011 = vmatprep.subr.bf16.mxu0 %v3961
  %4012 = vmatpush1.bf16.msra.mxu0 %v3960
  %4013 = vmatprep.subr.bf16.mxu0 %v3965
  %4014 = vmatpush1.bf16.msra.mxu0 %v3964
  %4015 = vmatprep.subr.bf16.mxu0 %v3969
  %4016 = vmatpush1.bf16.msra.mxu0 %v3968
  %4017 = vmatprep.subr.bf16.mxu0 %v3973
  %4018 = vmatpush1.bf16.msra.mxu0 %v3972
  %4019 = vmatprep.subr.bf16.mxu0 %v4003
  %4020 = vmatpush1.bf16.msra.mxu0 %v4000
  %4021 = vmatprep.subr.bf16.mxu0 0
  %4022 = vmatpush1.bf16.msra.mxu0 0
  %4023 = vmatprep.subr.bf16.mxu0 0
  %4024 = vmatpush1.bf16.msra.mxu0 0
  %4025 = vmatprep.subr.bf16.mxu0 0
  %4026 = vmatpush1.bf16.msra.mxu0 0
  %4027 = vmatprep.subr.bf16.mxu0 0
  %4028 = vmatpush1.bf16.msra.mxu0 0
  %4029 = vmatprep.subr.bf16.mxu0 0
  %4030 = vmatpush1.bf16.msra.mxu0 0
  %4031 = vmatprep.subr.bf16.mxu0 0
  %4032 = vmatpush1.bf16.msra.mxu0 0
  %4033 = vmatprep.subr.bf16.mxu0 0
  %4034 = vmatpush1.bf16.msra.mxu0 0
  %4035 = vmatprep.subr.bf16.mxu0 0
  %4036 = vmatpush1.bf16.msra.mxu0 0
  %4037 = vmatprep.subr.bf16.mxu0 0
  %4038 = vmatpush1.bf16.msra.mxu0 0
  %4039 = vmatprep.subr.bf16.mxu0 0
  %4040 = vmatpush1.bf16.msra.mxu0 0
  %4041 = vmatprep.subr.bf16.mxu0 0
  %4042 = vmatpush1.bf16.msra.mxu0 0
  %4043 = vmatprep.mubr.bf16.mxu0 0
  %4044 = vmatmul.mubr.bf16.gmra.mrb[0].mxu0 %v3997
  %v4045 = vpop.f32.mrb[0].mxu0
  %v4046 = vadd.f32 %v666, %v4045
  %v4047 = vpop.f32.mrb[0].mxu0
  %v4048 = vadd.f32 %v668, %v4047
  %v4049 = vpop.f32.mrb[0].mxu0
  %v4050 = vpop.f32.mrb[0].mxu0
  %4051 = vdwg.mxu0
  %4052 = vmatprep.subr.bf16.mxu0 %v3963
  %4053 = vmatpush1.bf16.msra.mxu0 %v3962
  %4054 = vmatprep.subr.bf16.mxu0 %v3967
  %4055 = vmatpush1.bf16.msra.mxu0 %v3966
  %4056 = vmatprep.subr.bf16.mxu0 %v3971
  %4057 = vmatpush1.bf16.msra.mxu0 %v3970
  %4058 = vmatprep.subr.bf16.mxu0 %v3975
  %4059 = vmatpush1.bf16.msra.mxu0 %v3974
  %4060 = vmatprep.subr.bf16.mxu0 %v4009
  %4061 = vmatpush1.bf16.msra.mxu0 %v4006
  %4062 = vmatprep.subr.bf16.mxu0 0
  %4063 = vmatpush1.bf16.msra.mxu0 0
  %4064 = vmatprep.subr.bf16.mxu0 0
  %4065 = vmatpush1.bf16.msra.mxu0 0
  %4066 = vmatprep.subr.bf16.mxu0 0
  %4067 = vmatpush1.bf16.msra.mxu0 0
  %4068 = vmatprep.subr.bf16.mxu0 0
  %4069 = vmatpush1.bf16.msra.mxu0 0
  %4070 = vmatprep.subr.bf16.mxu0 0
  %4071 = vmatpush1.bf16.msra.mxu0 0
  %4072 = vmatprep.subr.bf16.mxu0 0
  %4073 = vmatpush1.bf16.msra.mxu0 0
  %4074 = vmatprep.subr.bf16.mxu0 0
  %4075 = vmatpush1.bf16.msra.mxu0 0
  %4076 = vmatprep.subr.bf16.mxu0 0
  %4077 = vmatpush1.bf16.msra.mxu0 0
  %4078 = vmatprep.subr.bf16.mxu0 0
  %4079 = vmatpush1.bf16.msra.mxu0 0
  %4080 = vmatprep.subr.bf16.mxu0 0
  %4081 = vmatpush1.bf16.msra.mxu0 0
  %4082 = vmatprep.subr.bf16.mxu0 0
  %4083 = vmatpush1.bf16.msra.mxu0 0
  %4084 = vmatprep.mubr.bf16.mxu0 0
  %4085 = vmatmul.mubr.bf16.gmra.mrb[0].mxu0 %v3997
  %v4086 = vpop.f32.mrb[0].mxu0
  %v4087 = vadd.f32 %v707, %v4086
  %v4088 = vpop.f32.mrb[0].mxu0
  %v4089 = vadd.f32 %v709, %v4088
  %v4090 = vpop.f32.mrb[0].mxu0
  %v4091 = vpop.f32.mrb[0].mxu0
  %4092 = vdwg.mxu0
  %4093 = vrot.lane.b32.xlu0 %v4046, 17
  %v4094 = vpop.permute.xlu0 %4093
  %4095 = vrot.lane.b32.xlu0 %v4048, 17
  %v4096 = vpop.permute.xlu0 %4095
  %4097 = vrot.lane.b32.xlu0 %v4087, 17
  %v4098 = vpop.permute.xlu0 %4097
  %4099 = vrot.lane.b32.xlu0 %v4089, 17
  %v4100 = vpop.permute.xlu0 %4099
  %v4101 = vsel %vm32, %v4098, %v4100
  %v4102 = vsel %vm32, %v4096, %v4098
  %v4103 = vsel %vm32, %v4094, %v4096
  %v4104 = vsel %vm32, %v4100, %v4094
  %v4105 = vld [vmem:[%s1] ss:$8 sm:$0xf]
  %v4107 = vlaneseq
  %v4108 = vshrl.u32 %v4107, 7
  %v4109 = vsub.s32 0, %v4108
  %v4110 = vrot.slane %v4105, %v4109
  %v4111 = vlaneseq
  %v4112 = vshrl.u32 %v4111, 7
  %v4113 = vsub.s32 1, %v4112
  %v4114 = vrot.slane %v4105, %v4113
  %v4115 = vlaneseq
  %v4116 = vshrl.u32 %v4115, 7
  %v4117 = vsub.s32 2, %v4116
  %v4118 = vrot.slane %v4105, %v4117
  %v4119 = vlaneseq
  %v4120 = vshrl.u32 %v4119, 7
  %v4121 = vsub.s32 3, %v4120
  %v4122 = vrot.slane %v4105, %v4121
  %v4127 = vmul.f32 %v4104, %v4110
  %v4128 = vmul.f32 %v4103, %v4114
  %v4129 = vmul.f32 %v4102, %v4118
  %v4130 = vmul.f32 %v4101, %v4122
  %v4131 = vpack.c.bf16 %v4127, %v4127
  %v4132 = vpack.c.bf16 %v4128, %v4128
  %v4133 = vpack.c.bf16 %v4129, %v4129
  %v4134 = vpack.c.bf16 %v4130, %v4130
  %v4139 = vunpack.c.l.b16 %v4131
  %v4140 = vunpack.c.l.b16 %v4132
  %v4141 = vunpack.c.l.b16 %v4133
  %v4142 = vunpack.c.l.b16 %v4134
  %v4143 = vpack.c.b16 %v4140, %v4139
  %v4144 = vpack.c.b16 %v4142, %v4141
  %4147 = vst [vmem:[#allocation2] sm:$0xff] %v4143
  %4148 = vst [vmem:[#allocation2 + $0x8] sm:$0xff] %v4144
  %4149 = vrot.lane.b32.xlu0 %v4046, 16
  %v4150 = vpop.permute.xlu0 %4149
  %4151 = vrot.lane.b32.xlu0 %v4048, 16
  %v4152 = vpop.permute.xlu0 %4151
  %4153 = vrot.lane.b32.xlu0 %v4087, 16
  %v4154 = vpop.permute.xlu0 %4153
  %4155 = vrot.lane.b32.xlu0 %v4089, 16
  %v4156 = vpop.permute.xlu0 %4155
  %v4157 = vsel %vm89, %v4154, %v4156
  %v4158 = vsel %vm89, %v4152, %v4154
  %v4159 = vsel %vm89, %v4150, %v4152
  %v4160 = vsel %vm89, %v4156, %v4150
  %v4161 = vld [vmem:[%s94] ss:$8 sm:$0xf]
  %v4163 = vlaneseq
  %v4164 = vshrl.u32 %v4163, 7
  %v4165 = vsub.s32 0, %v4164
  %v4166 = vrot.slane %v4161, %v4165
  %v4167 = vlaneseq
  %v4168 = vshrl.u32 %v4167, 7
  %v4169 = vsub.s32 1, %v4168
  %v4170 = vrot.slane %v4161, %v4169
  %v4171 = vlaneseq
  %v4172 = vshrl.u32 %v4171, 7
  %v4173 = vsub.s32 2, %v4172
  %v4174 = vrot.slane %v4161, %v4173
  %v4175 = vlaneseq
  %v4176 = vshrl.u32 %v4175, 7
  %v4177 = vsub.s32 3, %v4176
  %v4178 = vrot.slane %v4161, %v4177
  %v4183 = vmul.f32 %v4160, %v4166
  %v4184 = vmul.f32 %v4159, %v4170
  %v4185 = vmul.f32 %v4158, %v4174
  %v4186 = vmul.f32 %v4157, %v4178
  %v4187 = vpack.c.bf16 %v4183, %v4183
  %v4188 = vpack.c.bf16 %v4184, %v4184
  %v4189 = vpack.c.bf16 %v4185, %v4185
  %v4190 = vpack.c.bf16 %v4186, %v4186
  %v4195 = vunpack.c.l.b16 %v4187
  %v4196 = vunpack.c.l.b16 %v4188
  %v4197 = vunpack.c.l.b16 %v4189
  %v4198 = vunpack.c.l.b16 %v4190
  %v4199 = vpack.c.b16 %v4196, %v4195
  %v4200 = vpack.c.b16 %v4198, %v4197
  %4203 = vst [vmem:[#allocation2 + $0x10] sm:$0xff] %v4199
  %4204 = vst [vmem:[#allocation2 + $0x18] sm:$0xff] %v4200
  %4205 = vrot.lane.b32.xlu0 %v4046, 15
  %v4206 = vpop.permute.xlu0 %4205
  %4207 = vrot.lane.b32.xlu0 %v4048, 15
  %v4208 = vpop.permute.xlu0 %4207
  %4209 = vrot.lane.b32.xlu0 %v4087, 15
  %v4210 = vpop.permute.xlu0 %4209
  %4211 = vrot.lane.b32.xlu0 %v4089, 15
  %v4212 = vpop.permute.xlu0 %4211
  %v4213 = vsel %vm147, %v4210, %v4212
  %v4214 = vsel %vm147, %v4208, %v4210
  %v4215 = vsel %vm147, %v4206, %v4208
  %v4216 = vsel %vm147, %v4212, %v4206
  %v4217 = vld [vmem:[%s152] ss:$8 sm:$0xf]
  %v4219 = vlaneseq
  %v4220 = vshrl.u32 %v4219, 7
  %v4221 = vsub.s32 0, %v4220
  %v4222 = vrot.slane %v4217, %v4221
  %v4223 = vlaneseq
  %v4224 = vshrl.u32 %v4223, 7
  %v4225 = vsub.s32 1, %v4224
  %v4226 = vrot.slane %v4217, %v4225
  %v4227 = vlaneseq
  %v4228 = vshrl.u32 %v4227, 7
  %v4229 = vsub.s32 2, %v4228
  %v4230 = vrot.slane %v4217, %v4229
  %v4231 = vlaneseq
  %v4232 = vshrl.u32 %v4231, 7
  %v4233 = vsub.s32 3, %v4232
  %v4234 = vrot.slane %v4217, %v4233
  %v4239 = vmul.f32 %v4216, %v4222
  %v4240 = vmul.f32 %v4215, %v4226
  %v4241 = vmul.f32 %v4214, %v4230
  %v4242 = vmul.f32 %v4213, %v4234
  %v4243 = vpack.c.bf16 %v4239, %v4239
  %v4244 = vpack.c.bf16 %v4240, %v4240
  %v4245 = vpack.c.bf16 %v4241, %v4241
  %v4246 = vpack.c.bf16 %v4242, %v4242
  %v4251 = vunpack.c.l.b16 %v4243
  %v4252 = vunpack.c.l.b16 %v4244
  %v4253 = vunpack.c.l.b16 %v4245
  %v4254 = vunpack.c.l.b16 %v4246
  %v4255 = vpack.c.b16 %v4252, %v4251
  %v4256 = vpack.c.b16 %v4254, %v4253
  %4259 = vst [vmem:[#allocation2 + $0x20] sm:$0xff] %v4255
  %4260 = vst [vmem:[#allocation2 + $0x28] sm:$0xff] %v4256
  %4261 = vrot.lane.b32.xlu0 %v4046, 1
  %v4262 = vpop.permute.xlu0 %4261
  %4263 = vrot.lane.b32.xlu0 %v4048, 1
  %v4264 = vpop.permute.xlu0 %4263
  %4265 = vrot.lane.b32.xlu0 %v4087, 1
  %v4266 = vpop.permute.xlu0 %4265
  %4267 = vrot.lane.b32.xlu0 %v4089, 1
  %v4268 = vpop.permute.xlu0 %4267
  %v4269 = vsel %vm205, %v4266, %v4268
  %v4270 = vsel %vm205, %v4264, %v4266
  %v4271 = vsel %vm205, %v4262, %v4264
  %v4272 = vsel %vm205, %v4268, %v4262
  %v4273 = vld [vmem:[%s210] ss:$8 sm:$0xf]
  %v4275 = vlaneseq
  %v4276 = vshrl.u32 %v4275, 7
  %v4277 = vsub.s32 0, %v4276
  %v4278 = vrot.slane %v4273, %v4277
  %v4279 = vlaneseq
  %v4280 = vshrl.u32 %v4279, 7
  %v4281 = vsub.s32 1, %v4280
  %v4282 = vrot.slane %v4273, %v4281
  %v4283 = vlaneseq
  %v4284 = vshrl.u32 %v4283, 7
  %v4285 = vsub.s32 2, %v4284
  %v4286 = vrot.slane %v4273, %v4285
  %v4287 = vlaneseq
  %v4288 = vshrl.u32 %v4287, 7
  %v4289 = vsub.s32 3, %v4288
  %v4290 = vrot.slane %v4273, %v4289
  %v4295 = vmul.f32 %v4272, %v4278
  %v4296 = vmul.f32 %v4271, %v4282
  %v4297 = vmul.f32 %v4270, %v4286
  %v4298 = vmul.f32 %v4269, %v4290
  %v4299 = vpack.c.bf16 %v4295, %v4295
  %v4300 = vpack.c.bf16 %v4296, %v4296
  %v4301 = vpack.c.bf16 %v4297, %v4297
  %v4302 = vpack.c.bf16 %v4298, %v4298
  %v4307 = vunpack.c.l.b16 %v4299
  %v4308 = vunpack.c.l.b16 %v4300
  %v4309 = vunpack.c.l.b16 %v4301
  %v4310 = vunpack.c.l.b16 %v4302
  %v4311 = vpack.c.b16 %v4308, %v4307
  %v4312 = vpack.c.b16 %v4310, %v4309
  %4315 = vst [vmem:[#allocation2 + $0x30] sm:$0xff] %v4311
  %4316 = vst [vmem:[#allocation2 + $0x38] sm:$0xff] %v4312
  %v4317 = vpack.c.bf16 %v4046, %v4046
  %v4318 = vpack.c.bf16 %v4048, %v4048
  %v4319 = vpack.c.bf16 %v4087, %v4087
  %v4320 = vpack.c.bf16 %v4089, %v4089
  %v4325 = vunpack.c.l.b16 %v4317
  %v4326 = vunpack.c.l.b16 %v4318
  %v4327 = vunpack.c.l.b16 %v4319
  %v4328 = vunpack.c.l.b16 %v4320
  %v4329 = vpack.c.b16 %v4326, %v4325
  %v4330 = vpack.c.b16 %v4328, %v4327
  %4333 = vst [vmem:[#allocation2 + $0x40] sm:$0xff] %v4329
  %4334 = vst [vmem:[#allocation2 + $0x48] sm:$0xff] %v4330
  %4335 = vrot.lane.b32.xlu0 %v4046, 127
  %v4336 = vpop.permute.xlu0 %4335
  %4337 = vrot.lane.b32.xlu0 %v4048, 127
  %v4338 = vpop.permute.xlu0 %4337
  %4339 = vrot.lane.b32.xlu0 %v4087, 127
  %v4340 = vpop.permute.xlu0 %4339
  %4341 = vrot.lane.b32.xlu0 %v4089, 127
  %v4342 = vpop.permute.xlu0 %4341
  %v4343 = vsel %vm281, %v4340, %v4342
  %v4344 = vsel %vm281, %v4338, %v4340
  %v4345 = vsel %vm281, %v4336, %v4338
  %v4346 = vsel %vm281, %v4342, %v4336
  %v4347 = vld [vmem:[%s286] ss:$8 sm:$0xf]
  %v4349 = vlaneseq
  %v4350 = vshrl.u32 %v4349, 7
  %v4351 = vsub.s32 0, %v4350
  %v4352 = vrot.slane %v4347, %v4351
  %v4353 = vlaneseq
  %v4354 = vshrl.u32 %v4353, 7
  %v4355 = vsub.s32 1, %v4354
  %v4356 = vrot.slane %v4347, %v4355
  %v4357 = vlaneseq
  %v4358 = vshrl.u32 %v4357, 7
  %v4359 = vsub.s32 2, %v4358
  %v4360 = vrot.slane %v4347, %v4359
  %v4361 = vlaneseq
  %v4362 = vshrl.u32 %v4361, 7
  %v4363 = vsub.s32 3, %v4362
  %v4364 = vrot.slane %v4347, %v4363
  %v4369 = vmul.f32 %v4345, %v4352
  %v4370 = vmul.f32 %v4344, %v4356
  %v4371 = vmul.f32 %v4343, %v4360
  %v4372 = vmul.f32 %v4346, %v4364
  %v4373 = vpack.c.bf16 %v4369, %v4369
  %v4374 = vpack.c.bf16 %v4370, %v4370
  %v4375 = vpack.c.bf16 %v4371, %v4371
  %v4376 = vpack.c.bf16 %v4372, %v4372
  %v4381 = vunpack.c.l.b16 %v4373
  %v4382 = vunpack.c.l.b16 %v4374
  %v4383 = vunpack.c.l.b16 %v4375
  %v4384 = vunpack.c.l.b16 %v4376
  %v4385 = vpack.c.b16 %v4382, %v4381
  %v4386 = vpack.c.b16 %v4384, %v4383
  %4389 = vst [vmem:[#allocation2 + $0x50] sm:$0xff] %v4385
  %4390 = vst [vmem:[#allocation2 + $0x58] sm:$0xff] %v4386
  %4391 = vrot.lane.b32.xlu0 %v4046, 113
  %v4392 = vpop.permute.xlu0 %4391
  %4393 = vrot.lane.b32.xlu0 %v4048, 113
  %v4394 = vpop.permute.xlu0 %4393
  %4395 = vrot.lane.b32.xlu0 %v4087, 113
  %v4396 = vpop.permute.xlu0 %4395
  %4397 = vrot.lane.b32.xlu0 %v4089, 113
  %v4398 = vpop.permute.xlu0 %4397
  %v4399 = vsel %vm339, %v4396, %v4398
  %v4400 = vsel %vm339, %v4394, %v4396
  %v4401 = vsel %vm339, %v4392, %v4394
  %v4402 = vsel %vm339, %v4398, %v4392
  %v4403 = vld [vmem:[%s344] ss:$8 sm:$0xf]
  %v4405 = vlaneseq
  %v4406 = vshrl.u32 %v4405, 7
  %v4407 = vsub.s32 0, %v4406
  %v4408 = vrot.slane %v4403, %v4407
  %v4409 = vlaneseq
  %v4410 = vshrl.u32 %v4409, 7
  %v4411 = vsub.s32 1, %v4410
  %v4412 = vrot.slane %v4403, %v4411
  %v4413 = vlaneseq
  %v4414 = vshrl.u32 %v4413, 7
  %v4415 = vsub.s32 2, %v4414
  %v4416 = vrot.slane %v4403, %v4415
  %v4417 = vlaneseq
  %v4418 = vshrl.u32 %v4417, 7
  %v4419 = vsub.s32 3, %v4418
  %v4420 = vrot.slane %v4403, %v4419
  %v4425 = vmul.f32 %v4401, %v4408
  %v4426 = vmul.f32 %v4400, %v4412
  %v4427 = vmul.f32 %v4399, %v4416
  %v4428 = vmul.f32 %v4402, %v4420
  %v4429 = vpack.c.bf16 %v4425, %v4425
  %v4430 = vpack.c.bf16 %v4426, %v4426
  %v4431 = vpack.c.bf16 %v4427, %v4427
  %v4432 = vpack.c.bf16 %v4428, %v4428
  %v4437 = vunpack.c.l.b16 %v4429
  %v4438 = vunpack.c.l.b16 %v4430
  %v4439 = vunpack.c.l.b16 %v4431
  %v4440 = vunpack.c.l.b16 %v4432
  %v4441 = vpack.c.b16 %v4438, %v4437
  %v4442 = vpack.c.b16 %v4440, %v4439
  %4445 = vst [vmem:[#allocation2 + $0x60] sm:$0xff] %v4441
  %4446 = vst [vmem:[#allocation2 + $0x68] sm:$0xff] %v4442
  %4447 = vrot.lane.b32.xlu0 %v4046, 112
  %v4448 = vpop.permute.xlu0 %4447
  %4449 = vrot.lane.b32.xlu0 %v4048, 112
  %v4450 = vpop.permute.xlu0 %4449
  %4451 = vrot.lane.b32.xlu0 %v4087, 112
  %v4452 = vpop.permute.xlu0 %4451
  %4453 = vrot.lane.b32.xlu0 %v4089, 112
  %v4454 = vpop.permute.xlu0 %4453
  %v4455 = vsel %vm397, %v4452, %v4454
  %v4456 = vsel %vm397, %v4450, %v4452
  %v4457 = vsel %vm397, %v4448, %v4450
  %v4458 = vsel %vm397, %v4454, %v4448
  %v4459 = vld [vmem:[%s402] ss:$8 sm:$0xf]
  %v4461 = vlaneseq
  %v4462 = vshrl.u32 %v4461, 7
  %v4463 = vsub.s32 0, %v4462
  %v4464 = vrot.slane %v4459, %v4463
  %v4465 = vlaneseq
  %v4466 = vshrl.u32 %v4465, 7
  %v4467 = vsub.s32 1, %v4466
  %v4468 = vrot.slane %v4459, %v4467
  %v4469 = vlaneseq
  %v4470 = vshrl.u32 %v4469, 7
  %v4471 = vsub.s32 2, %v4470
  %v4472 = vrot.slane %v4459, %v4471
  %v4473 = vlaneseq
  %v4474 = vshrl.u32 %v4473, 7
  %v4475 = vsub.s32 3, %v4474
  %v4476 = vrot.slane %v4459, %v4475
  %v4481 = vmul.f32 %v4457, %v4464
  %v4482 = vmul.f32 %v4456, %v4468
  %v4483 = vmul.f32 %v4455, %v4472
  %v4484 = vmul.f32 %v4458, %v4476
  %v4485 = vpack.c.bf16 %v4481, %v4481
  %v4486 = vpack.c.bf16 %v4482, %v4482
  %v4487 = vpack.c.bf16 %v4483, %v4483
  %v4488 = vpack.c.bf16 %v4484, %v4484
  %v4493 = vunpack.c.l.b16 %v4485
  %v4494 = vunpack.c.l.b16 %v4486
  %v4495 = vunpack.c.l.b16 %v4487
  %v4496 = vunpack.c.l.b16 %v4488
  %v4497 = vpack.c.b16 %v4494, %v4493
  %v4498 = vpack.c.b16 %v4496, %v4495
  %4501 = vst [vmem:[#allocation2 + $0x70] sm:$0xff] %v4497
  %4502 = vst [vmem:[#allocation2 + $0x78] sm:$0xff] %v4498
  %4503 = vrot.lane.b32.xlu0 %v4046, 111
  %v4504 = vpop.permute.xlu0 %4503
  %4505 = vrot.lane.b32.xlu0 %v4048, 111
  %v4506 = vpop.permute.xlu0 %4505
  %4507 = vrot.lane.b32.xlu0 %v4087, 111
  %v4508 = vpop.permute.xlu0 %4507
  %4509 = vrot.lane.b32.xlu0 %v4089, 111
  %v4510 = vpop.permute.xlu0 %4509
  %v4511 = vsel %vm455, %v4508, %v4510
  %v4512 = vsel %vm455, %v4506, %v4508
  %v4513 = vsel %vm455, %v4504, %v4506
  %v4514 = vsel %vm455, %v4510, %v4504
  %v4515 = vld [vmem:[%s460] ss:$8 sm:$0xf]
  %v4517 = vlaneseq
  %v4518 = vshrl.u32 %v4517, 7
  %v4519 = vsub.s32 0, %v4518
  %v4520 = vrot.slane %v4515, %v4519
  %v4521 = vlaneseq
  %v4522 = vshrl.u32 %v4521, 7
  %v4523 = vsub.s32 1, %v4522
  %v4524 = vrot.slane %v4515, %v4523
  %v4525 = vlaneseq
  %v4526 = vshrl.u32 %v4525, 7
  %v4527 = vsub.s32 2, %v4526
  %v4528 = vrot.slane %v4515, %v4527
  %v4529 = vlaneseq
  %v4530 = vshrl.u32 %v4529, 7
  %v4531 = vsub.s32 3, %v4530
  %v4532 = vrot.slane %v4515, %v4531
  %v4537 = vmul.f32 %v4513, %v4520
  %v4538 = vmul.f32 %v4512, %v4524
  %v4539 = vmul.f32 %v4511, %v4528
  %v4540 = vmul.f32 %v4514, %v4532
  %v4541 = vpack.c.bf16 %v4537, %v4537
  %v4542 = vpack.c.bf16 %v4538, %v4538
  %v4543 = vpack.c.bf16 %v4539, %v4539
  %v4544 = vpack.c.bf16 %v4540, %v4540
  %v4549 = vunpack.c.l.b16 %v4541
  %v4550 = vunpack.c.l.b16 %v4542
  %v4551 = vunpack.c.l.b16 %v4543
  %v4552 = vunpack.c.l.b16 %v4544
  %v4553 = vpack.c.b16 %v4550, %v4549
  %v4554 = vpack.c.b16 %v4552, %v4551
  %4557 = vst [vmem:[#allocation2 + $0x80] sm:$0xff] %v4553
  %4558 = vst [vmem:[#allocation2 + $0x88] sm:$0xff] %v4554
  %v4559 = vld [vmem:[%s3] sm:$0xf]
  %v4560 = vld [vmem:[#allocation2] sm:$0xff]
  %v4561 = vld [vmem:[#allocation2 + $0x8] sm:$0xff]
  %v4562 = vld [vmem:[#allocation2 + $0x10] sm:$0xff]
  %v4563 = vld [vmem:[#allocation2 + $0x18] sm:$0xff]
  %v4564 = vld [vmem:[#allocation2 + $0x20] sm:$0xff]
  %v4565 = vld [vmem:[#allocation2 + $0x28] sm:$0xff]
  %v4566 = vld [vmem:[#allocation2 + $0x30] sm:$0xff]
  %v4567 = vld [vmem:[#allocation2 + $0x38] sm:$0xff]
  %v4568 = vld [vmem:[#allocation2 + $0x40] sm:$0xff]
  %v4569 = vld [vmem:[#allocation2 + $0x48] sm:$0xff]
  %v4570 = vld [vmem:[#allocation2 + $0x50] sm:$0xff]
  %v4571 = vld [vmem:[#allocation2 + $0x58] sm:$0xff]
  %v4572 = vld [vmem:[#allocation2 + $0x60] sm:$0xff]
  %v4573 = vld [vmem:[#allocation2 + $0x68] sm:$0xff]
  %v4574 = vld [vmem:[#allocation2 + $0x70] sm:$0xff]
  %v4575 = vld [vmem:[#allocation2 + $0x78] sm:$0xff]
  %v4576 = vld [vmem:[#allocation2 + $0x80] sm:$0xff]
  %v4577 = vld [vmem:[#allocation2 + $0x88] sm:$0xff]
  %v4596 = vunpack.c.l.b16 %v4560
  %v4597 = vunpack.c.h.b16 %v4560
  %v4598 = vunpack.c.l.b16 %v4561
  %v4599 = vunpack.c.h.b16 %v4561
  %v4600 = vunpack.c.l.b16 %v4562
  %v4601 = vunpack.c.h.b16 %v4562
  %v4602 = vunpack.c.l.b16 %v4563
  %v4603 = vunpack.c.h.b16 %v4563
  %v4604 = vunpack.c.l.b16 %v4564
  %v4605 = vunpack.c.h.b16 %v4564
  %v4606 = vunpack.c.l.b16 %v4565
  %v4607 = vunpack.c.h.b16 %v4565
  %v4608 = vunpack.c.l.b16 %v4566
  %v4609 = vunpack.c.h.b16 %v4566
  %v4610 = vunpack.c.l.b16 %v4567
  %v4611 = vunpack.c.h.b16 %v4567
  %v4612 = vunpack.c.l.b16 %v4568
  %v4613 = vunpack.c.h.b16 %v4568
  %v4614 = vunpack.c.l.b16 %v4569
  %v4615 = vunpack.c.h.b16 %v4569
  %v4616 = vunpack.c.l.b16 %v4570
  %v4617 = vunpack.c.h.b16 %v4570
  %v4618 = vunpack.c.l.b16 %v4571
  %v4619 = vunpack.c.h.b16 %v4571
  %v4620 = vunpack.c.l.b16 %v4572
  %v4621 = vunpack.c.h.b16 %v4572
  %v4622 = vunpack.c.l.b16 %v4573
  %v4623 = vunpack.c.h.b16 %v4573
  %v4624 = vunpack.c.l.b16 %v4574
  %v4625 = vunpack.c.h.b16 %v4574
  %v4626 = vunpack.c.l.b16 %v4575
  %v4627 = vunpack.c.h.b16 %v4575
  %v4628 = vunpack.c.l.b16 %v4576
  %v4629 = vunpack.c.h.b16 %v4576
  %v4630 = vunpack.c.l.b16 %v4577
  %v4631 = vunpack.c.h.b16 %v4577
  %v4632 = vpack.c.b16 %v4600, %v4596
  %v4633 = vpack.c.b16 %v4601, %v4597
  %v4634 = vpack.c.b16 %v4602, %v4598
  %v4635 = vpack.c.b16 %v4603, %v4599
  %v4636 = vpack.c.b16 %v4608, %v4604
  %v4637 = vpack.c.b16 %v4609, %v4605
  %v4638 = vpack.c.b16 %v4610, %v4606
  %v4639 = vpack.c.b16 %v4611, %v4607
  %v4640 = vpack.c.b16 %v4616, %v4612
  %v4641 = vpack.c.b16 %v4617, %v4613
  %v4642 = vpack.c.b16 %v4618, %v4614
  %v4643 = vpack.c.b16 %v4619, %v4615
  %v4644 = vpack.c.b16 %v4624, %v4620
  %v4645 = vpack.c.b16 %v4625, %v4621
  %v4646 = vpack.c.b16 %v4626, %v4622
  %v4647 = vpack.c.b16 %v4627, %v4623
  %v4648 = vpack.c.b16 %v4628, %v4628
  %v4649 = vpack.c.b16 %v4629, %v4629
  %v4650 = vpack.c.b16 %v4630, %v4630
  %v4651 = vpack.c.b16 %v4631, %v4631
  %v4669 = vsel %vm614, %v4559, 0
  %v4672 = vsel %vm618, %v4648, 0
  %v4675 = vsel %vm618, %v4649, 0
  %v4678 = vsel %vm618, %v4650, 0
  %v4681 = vsel %vm618, %v4651, 0
  %4683 = vmatprep.subr.bf16.mxu0 %v4633
  %4684 = vmatpush1.bf16.msra.mxu0 %v4632
  %4685 = vmatprep.subr.bf16.mxu0 %v4637
  %4686 = vmatpush1.bf16.msra.mxu0 %v4636
  %4687 = vmatprep.subr.bf16.mxu0 %v4641
  %4688 = vmatpush1.bf16.msra.mxu0 %v4640
  %4689 = vmatprep.subr.bf16.mxu0 %v4645
  %4690 = vmatpush1.bf16.msra.mxu0 %v4644
  %4691 = vmatprep.subr.bf16.mxu0 %v4675
  %4692 = vmatpush1.bf16.msra.mxu0 %v4672
  %4693 = vmatprep.subr.bf16.mxu0 0
  %4694 = vmatpush1.bf16.msra.mxu0 0
  %4695 = vmatprep.subr.bf16.mxu0 0
  %4696 = vmatpush1.bf16.msra.mxu0 0
  %4697 = vmatprep.subr.bf16.mxu0 0
  %4698 = vmatpush1.bf16.msra.mxu0 0
  %4699 = vmatprep.subr.bf16.mxu0 0
  %4700 = vmatpush1.bf16.msra.mxu0 0
  %4701 = vmatprep.subr.bf16.mxu0 0
  %4702 = vmatpush1.bf16.msra.mxu0 0
  %4703 = vmatprep.subr.bf16.mxu0 0
  %4704 = vmatpush1.bf16.msra.mxu0 0
  %4705 = vmatprep.subr.bf16.mxu0 0
  %4706 = vmatpush1.bf16.msra.mxu0 0
  %4707 = vmatprep.subr.bf16.mxu0 0
  %4708 = vmatpush1.bf16.msra.mxu0 0
  %4709 = vmatprep.subr.bf16.mxu0 0
  %4710 = vmatpush1.bf16.msra.mxu0 0
  %4711 = vmatprep.subr.bf16.mxu0 0
  %4712 = vmatpush1.bf16.msra.mxu0 0
  %4713 = vmatprep.subr.bf16.mxu0 0
  %4714 = vmatpush1.bf16.msra.mxu0 0
  %4715 = vmatprep.mubr.bf16.mxu0 0
  %4716 = vmatmul.mubr.bf16.gmra.mrb[0].mxu0 %v4669
  %v4717 = vpop.f32.mrb[0].mxu0
  %v4718 = vadd.f32 %v666, %v4717
  %v4719 = vpop.f32.mrb[0].mxu0
  %v4720 = vadd.f32 %v668, %v4719
  %v4721 = vpop.f32.mrb[0].mxu0
  %v4722 = vpop.f32.mrb[0].mxu0
  %4723 = vdwg.mxu0
  %4724 = vmatprep.subr.bf16.mxu0 %v4635
  %4725 = vmatpush1.bf16.msra.mxu0 %v4634
  %4726 = vmatprep.subr.bf16.mxu0 %v4639
  %4727 = vmatpush1.bf16.msra.mxu0 %v4638
  %4728 = vmatprep.subr.bf16.mxu0 %v4643
  %4729 = vmatpush1.bf16.msra.mxu0 %v4642
  %4730 = vmatprep.subr.bf16.mxu0 %v4647
  %4731 = vmatpush1.bf16.msra.mxu0 %v4646
  %4732 = vmatprep.subr.bf16.mxu0 %v4681
  %4733 = vmatpush1.bf16.msra.mxu0 %v4678
  %4734 = vmatprep.subr.bf16.mxu0 0
  %4735 = vmatpush1.bf16.msra.mxu0 0
  %4736 = vmatprep.subr.bf16.mxu0 0
  %4737 = vmatpush1.bf16.msra.mxu0 0
  %4738 = vmatprep.subr.bf16.mxu0 0
  %4739 = vmatpush1.bf16.msra.mxu0 0
  %4740 = vmatprep.subr.bf16.mxu0 0
  %4741 = vmatpush1.bf16.msra.mxu0 0
  %4742 = vmatprep.subr.bf16.mxu0 0
  %4743 = vmatpush1.bf16.msra.mxu0 0
  %4744 = vmatprep.subr.bf16.mxu0 0
  %4745 = vmatpush1.bf16.msra.mxu0 0
  %4746 = vmatprep.subr.bf16.mxu0 0
  %4747 = vmatpush1.bf16.msra.mxu0 0
  %4748 = vmatprep.subr.bf16.mxu0 0
  %4749 = vmatpush1.bf16.msra.mxu0 0
  %4750 = vmatprep.subr.bf16.mxu0 0
  %4751 = vmatpush1.bf16.msra.mxu0 0
  %4752 = vmatprep.subr.bf16.mxu0 0
  %4753 = vmatpush1.bf16.msra.mxu0 0
  %4754 = vmatprep.subr.bf16.mxu0 0
  %4755 = vmatpush1.bf16.msra.mxu0 0
  %4756 = vmatprep.mubr.bf16.mxu0 0
  %4757 = vmatmul.mubr.bf16.gmra.mrb[0].mxu0 %v4669
  %v4758 = vpop.f32.mrb[0].mxu0
  %v4759 = vadd.f32 %v707, %v4758
  %v4760 = vpop.f32.mrb[0].mxu0
  %v4761 = vadd.f32 %v709, %v4760
  %v4762 = vpop.f32.mrb[0].mxu0
  %v4763 = vpop.f32.mrb[0].mxu0
  %4764 = vdwg.mxu0
  %v4765 = vmax.f32 %v4718, 0.0
  %v4766 = vmax.f32 %v4720, 0.0
  %v4767 = vmax.f32 %v4759, 0.0
  %v4768 = vmax.f32 %v4761, 0.0
  %4769 = vst [vmem:[%s4] sm:$0xff] %v4765
  %4770 = vst [vmem:[%s4 + $0x8] sm:$0xff] %v4766
  %4771 = vst [vmem:[%s4 + $0x10] sm:$0xff] %v4767
  %4772 = vst [vmem:[%s4 + $0x18] sm:$0xff] %v4768
  // Predicated region
  $region18: #{recurrent_block.1} parent=0 // pred_check
    _
  $region19: #{recurrent_block.1} parent=0 // pred_check_branch
    %4774 = sbr.rel (0) target = $region21
  $region20: #{recurrent_block.1} parent=0 // pred_region
    _
  $region21: #{recurrent_block.1} parent=0 // pred_fallthru
    _
  // Predicated region
  $region22: #{recurrent_block.1} parent=0 // pred_check
    _
  $region23: #{recurrent_block.1} parent=0 // pred_check_branch
    %4776 = sbr.rel (0) target = $region25
  $region24: #{recurrent_block.1} parent=0 // pred_region
    _
  $region25: #{recurrent_block.1} parent=0 // pred_fallthru
    _

</llo_original>
